<compile_context>
chip_gen: v7x
topology: tpu7x:2x2x1
jax: 0.10.0
libtpu: 0.0.40
codegen_flags: <defaults>
</compile_context>

<pallas_src>
import functools

import jax
import jax.numpy as jnp
import numpy as np
from jax.experimental import pallas as pl
from jax.experimental.pallas import tpu as pltpu

MXU_DTYPE = jnp.bfloat16   # MXU operand dtype (accumulation stays f32); set to jnp.float32 for exact match
MAX_TP = 1024              # max spatial (lane) tile; multiple of 128


def _tp_for(hw):
    """Spatial-lane tile: whole image if small, else a lane-aligned tile."""
    return hw if hw <= MAX_TP else MAX_TP


def _compiler_params(semantics, approx_block_bytes):
    kw = dict(dimension_semantics=semantics)
    if approx_block_bytes > 24 * (1 << 20):
        # Raise the scoped-VMEM limit only when the tiles need it; cap well below
        # v7x's 64 MiB/TC physical VMEM so pipelining depth is preserved.
        kw["vmem_limit_bytes"] = int(min(2 * approx_block_bytes + (8 << 20), 48 << 20))
    return pltpu.CompilerParams(**kw)


# ----------------------------- Pallas kernels ------------------------------ #
def _conv1x1_bn_kernel(x_ref, w_ref, b_ref, o_ref, *, relu):
    # x_ref: (Cin, TP)  w_ref: (Cout, Cin) [BN scale pre-folded]  b_ref: (Cout, 1)
    acc = jnp.dot(w_ref[...], x_ref[...], preferred_element_type=jnp.float32)
    y = acc + b_ref[...]
    if relu:
        y = jnp.maximum(y, 0.0)
    o_ref[...] = y.astype(o_ref.dtype)


def _conv3x3_bn_kernel(x_ref, w_ref, b_ref, o_ref, col_ref, *, H, W, C, relu):
    # x_ref: (C, H+2, W+2) one spatially-padded image; w_ref: (Cout, 9*C);
    # col_ref: (9*C, H*W) VMEM im2col scratch -- never touches HBM.
    for h in range(H):
        for dy in range(3):
            row = x_ref[:, h + dy, :]                                   # (C, W+2)
            for dx in range(3):
                k = dy * 3 + dx
                col_ref[k * C:(k + 1) * C, h * W:(h + 1) * W] = row[:, dx:dx + W]
    acc = jnp.dot(w_ref[...], col_ref[...], preferred_element_type=jnp.float32)
    y = acc + b_ref[...]
    if relu:
        y = jnp.maximum(y, 0.0)
    o_ref[...] = y.astype(o_ref.dtype)


def _final_mix_kernel(x1_ref, x2_ref, x3_ref, w1_ref, w2_ref, w3_ref,
                      b_ref, r_ref, o_ref):
    # Fused: concat(x1,x2,x3) @ W  (as 3 accumulated dots) + folded double-BN bias
    #        + residual + ReLU.  The concatenated tensor never exists in HBM.
    acc = jnp.dot(w1_ref[...], x1_ref[...], preferred_element_type=jnp.float32)
    acc += jnp.dot(w2_ref[...], x2_ref[...], preferred_element_type=jnp.float32)
    acc += jnp.dot(w3_ref[...], x3_ref[...], preferred_element_type=jnp.float32)
    y = acc + b_ref[...] + r_ref[...].astype(jnp.float32)
    o_ref[...] = jnp.maximum(y, 0.0).astype(o_ref.dtype)


# ------------------------------ conv wrappers ------------------------------ #
def conv1x1_bn(x, w, scale, bias, *, relu):
    """x: (N, Cin, HW).  w: (Cout, Cin) f32.  Returns (N, Cout, HW) in MXU_DTYPE."""
    N, Cin, HW = x.shape
    Cout = w.shape[0]
    wf = (w * scale[:, None]).astype(MXU_DTYPE)          # fold BN scale into weight rows
    b = bias.reshape(Cout, 1).astype(jnp.float32)
    tp = _tp_for(HW)
    grid = (N, pl.cdiv(HW, tp))
    blk_bytes = 2 * 2 * tp * (Cin + Cout) * x.dtype.itemsize + 2 * wf.size + 4 * b.size
    return pl.pallas_call(
        functools.partial(_conv1x1_bn_kernel, relu=relu),
        out_shape=jax.ShapeDtypeStruct((N, Cout, HW), MXU_DTYPE),
        grid=grid,
        in_specs=[
            pl.BlockSpec((None, Cin, tp), lambda n, j: (n, 0, j)),
            pl.BlockSpec((Cout, Cin), lambda n, j: (0, 0)),
            pl.BlockSpec((Cout, 1), lambda n, j: (0, 0)),
        ],
        out_specs=pl.BlockSpec((None, Cout, tp), lambda n, j: (n, 0, j)),
        compiler_params=_compiler_params(("parallel", "parallel"), blk_bytes),
    )(x, wf, b)


def conv3x3_bn(x, w, scale, bias, *, relu):
    """3x3 conv, stride 1, padding 1, fused BN(+ReLU).
    x: (N, Cin, H, W).  w: (Cout, Cin, 3, 3) f32.  Returns (N, Cout, H, W) in MXU_DTYPE."""
    N, Cin, H, W = x.shape
    Cout = w.shape[0]
    HW = H * W
    # fold BN scale, reorder to (Cout, [dy, dx, ci]) to match the in-kernel im2col layout
    wf = (w * scale[:, None, None, None]).transpose(0, 2, 3, 1).reshape(Cout, 9 * Cin)
    wf = wf.astype(MXU_DTYPE)
    b = bias.reshape(Cout, 1).astype(jnp.float32)
    # only a 1-pixel spatial halo is padded in HBM (cheap); im2col happens in VMEM.
    xp = jnp.pad(x, ((0, 0), (0, 0), (1, 1), (1, 1)))
    blk_bytes = (2 * (Cin * (H + 2) * (W + 2) + Cout * HW) + 9 * Cin * HW) * 2 + 2 * wf.size
    out = pl.pallas_call(
        functools.partial(_conv3x3_bn_kernel, H=H, W=W, C=Cin, relu=relu),
        out_shape=jax.ShapeDtypeStruct((N, Cout, HW), MXU_DTYPE),
        grid=(N,),
        in_specs=[
            pl.BlockSpec((None, Cin, H + 2, W + 2), lambda n: (n, 0, 0, 0)),
            pl.BlockSpec((Cout, 9 * Cin), lambda n: (0, 0)),
            pl.BlockSpec((Cout, 1), lambda n: (0, 0)),
        ],
        out_specs=pl.BlockSpec((None, Cout, HW), lambda n: (n, 0, 0)),
        scratch_shapes=[pltpu.VMEM((9 * Cin, HW), MXU_DTYPE)],
        compiler_params=_compiler_params(("parallel",), blk_bytes),
    )(xp, wf, b)
    return out.reshape(N, Cout, H, W)


def final_mix(x1, x2, x3, w, scale, bias, residual):
    """relu(W @ concat(x1,x2,x3) * scale + bias + residual), with the concat fused away.
    xi: (N, Ci, HW);  w: (Cout, C1+C2+C3) f32;  residual: (N, Cout, HW)."""
    N, C1, HW = x1.shape
    C2, C3 = x2.shape[1], x3.shape[1]
    Cout = w.shape[0]
    wf = (w * scale[:, None]).astype(MXU_DTYPE)
    w1, w2, w3 = wf[:, :C1], wf[:, C1:C1 + C2], wf[:, C1 + C2:]
    b = bias.reshape(Cout, 1).astype(jnp.float32)
    tp = _tp_for(HW)
    grid = (N, pl.cdiv(HW, tp))
    blk_bytes = 2 * 2 * tp * (C1 + C2 + C3 + 2 * Cout) * 2 + 2 * wf.size
    return pl.pallas_call(
        _final_mix_kernel,
        out_shape=jax.ShapeDtypeStruct((N, Cout, HW), jnp.float32),
        grid=grid,
        in_specs=[
            pl.BlockSpec((None, C1, tp), lambda n, j: (n, 0, j)),
            pl.BlockSpec((None, C2, tp), lambda n, j: (n, 0, j)),
            pl.BlockSpec((None, C3, tp), lambda n, j: (n, 0, j)),
            pl.BlockSpec((Cout, C1), lambda n, j: (0, 0)),
            pl.BlockSpec((Cout, C2), lambda n, j: (0, 0)),
            pl.BlockSpec((Cout, C3), lambda n, j: (0, 0)),
            pl.BlockSpec((Cout, 1), lambda n, j: (0, 0)),
            pl.BlockSpec((None, Cout, tp), lambda n, j: (n, 0, j)),
        ],
        out_specs=pl.BlockSpec((None, Cout, tp), lambda n, j: (n, 0, j)),
        compiler_params=_compiler_params(("parallel", "parallel"), blk_bytes),
    )(x1, x2, x3, w1, w2, w3, b, residual)


# ----------------------------- parameter setup ------------------------------ #
def bn_fold(key, c, eps=1e-5):
    k1, k2, k3, k4 = jax.random.split(key, 4)
    gamma = jax.random.uniform(k1, (c,), minval=0.5, maxval=1.5)
    beta = jax.random.normal(k2, (c,)) * 0.1
    mean = jax.random.normal(k3, (c,)) * 0.1
    var = jax.random.uniform(k4, (c,), minval=0.5, maxval=1.5)
    scale = gamma / jnp.sqrt(var + eps)
    bias = beta - mean * scale
    return scale.astype(jnp.float32), bias.astype(jnp.float32)


def init_inception_params(key, in_planes, out_planes, branches):
    b0c, b1c, b2c = branches
    ks = jax.random.split(key, 20)
    w = lambda k, shape: (jax.random.normal(k, shape) * 0.1).astype(jnp.float32)
    p = {}
    # weights in PyTorch layout: (Cout, Cin) for 1x1, (Cout, Cin, 3, 3) for 3x3
    p["b0_w"] = w(ks[0], (out_planes, in_planes)); p["b0_bn"] = bn_fold(ks[1], out_planes)
    p["b1_w"] = w(ks[2], (b0c, in_planes));        p["b1_bn"] = bn_fold(ks[3], b0c)
    p["b2a_w"] = w(ks[4], (b1c, in_planes));       p["b2a_bn"] = bn_fold(ks[5], b1c)
    p["b2b_w"] = w(ks[6], (b1c, b1c, 3, 3));       p["b2b_bn"] = bn_fold(ks[7], b1c)
    p["b3a_w"] = w(ks[8], (b2c, in_planes));       p["b3a_bn"] = bn_fold(ks[9], b2c)
    p["b3b_w"] = w(ks[10], (b2c, b2c, 3, 3));      p["b3b_bn"] = bn_fold(ks[11], b2c)
    p["b3c_w"] = w(ks[12], (b2c, b2c, 3, 3));      p["b3c_bn"] = bn_fold(ks[13], b2c)
    p["conv_w"] = w(ks[14], (out_planes, sum(branches))); p["conv_bn"] = bn_fold(ks[15], out_planes)
    p["final_bn"] = bn_fold(ks[16], out_planes)
    return p


# ------------------------------ forward pass -------------------------------- #
def inception_forward(x_nchw, p):
    """x_nchw: (N, Cin, H, W) f32 -> (N, Cout, H, W) f32.  NCHW end-to-end (no transposes)."""
    N, Cin, H, W = x_nchw.shape
    HW = H * W
    xf = x_nchw.reshape(N, Cin, HW).astype(MXU_DTYPE)   # free reshape + single cast

    # branch0: projection 1x1 (in_planes != out_planes), no ReLU
    x0 = conv1x1_bn(xf, p["b0_w"], *p["b0_bn"], relu=False)
    # branch1: 1x1 + ReLU
    x1 = conv1x1_bn(xf, p["b1_w"], *p["b1_bn"], relu=True)
    # branch2: 1x1 + ReLU -> 3x3 + ReLU
    t = conv1x1_bn(xf, p["b2a_w"], *p["b2a_bn"], relu=True)
    x2 = conv3x3_bn(t.reshape(N, -1, H, W), p["b2b_w"], *p["b2b_bn"], relu=True)
    x2 = x2.reshape(N, -1, HW)
    # branch3: 1x1 + ReLU -> 3x3 + ReLU -> 3x3 + ReLU
    t = conv1x1_bn(xf, p["b3a_w"], *p["b3a_bn"], relu=True)
    t = conv3x3_bn(t.reshape(N, -1, H, W), p["b3b_w"], *p["b3b_bn"], relu=True)
    x3 = conv3x3_bn(t, p["b3c_w"], *p["b3c_bn"], relu=True)
    x3 = x3.reshape(N, -1, HW)
    # concat + final 1x1 conv + its BN + module BN + residual + ReLU, one fused kernel.
    s1, b1 = p["conv_bn"]
    s2, b2 = p["final_bn"]
    out = final_mix(x1, x2, x3, p["conv_w"], s1 * s2, b1 * s2 + b2, x0)
    return out.reshape(N, -1, H, W)


# ---------------------------- pure-JAX reference ---------------------------- #
def _ref_conv(x, w_oihw, pad):
    return jax.lax.conv_general_dilated(
        x, w_oihw, window_strides=(1, 1), padding=[(pad, pad), (pad, pad)],
        dimension_numbers=("NCHW", "OIHW", "NCHW"),
        precision=jax.lax.Precision.HIGHEST)


def ref_inception(x, p):
    def basic(x, w, bn, relu, pad=0):
        if w.ndim == 2:
            w = w[:, :, None, None]
        y = _ref_conv(x, w, pad) * bn[0][None, :, None, None] + bn[1][None, :, None, None]
        return jnp.maximum(y, 0.0) if relu else y

    x0 = basic(x, p["b0_w"], p["b0_bn"], False)
    x1 = basic(x, p["b1_w"], p["b1_bn"], True)
    t = basic(x, p["b2a_w"], p["b2a_bn"], True)
    x2 = basic(t, p["b2b_w"], p["b2b_bn"], True, pad=1)
    t = basic(x, p["b3a_w"], p["b3a_bn"], True)
    t = basic(t, p["b3b_w"], p["b3b_bn"], True, pad=1)
    x3 = basic(t, p["b3c_w"], p["b3c_bn"], True, pad=1)
    cat = jnp.concatenate([x1, x2, x3], axis=1)
    y = basic(cat, p["conv_w"], p["conv_bn"], False)
    y = y * p["final_bn"][0][None, :, None, None] + p["final_bn"][1][None, :, None, None]
    return jnp.maximum(y + x0, 0.0)


# ---------------------------------- main ------------------------------------ #
if __name__ == "__main__":
    in_planes, out_planes = 4, 8
    branches = [4, 4, 4]
    N, H, W = 2, 16, 16

    key = jax.random.PRNGKey(0)
    kx, kp = jax.random.split(key)
    x = jax.random.normal(kx, (N, in_planes, H, W), dtype=jnp.float32)
    params = init_inception_params(kp, in_planes, out_planes, branches)

    fwd = jax.jit(inception_forward)
    out = jax.block_until_ready(fwd(x, params))
    assert out.shape == (N, out_planes, H, W), out.shape

    # sanity check vs. a pure-JAX/XLA f32 HIGHEST-precision reference
    ref = jax.block_until_ready(ref_inception(x, params))
    # bf16 MXU operands vs f32 HIGHEST reference -> slightly looser tolerance
    tol = 2e-2 if MXU_DTYPE == jnp.bfloat16 else 1e-3
    if not np.allclose(np.asarray(out), np.asarray(ref), atol=tol, rtol=tol):
        raise AssertionError(
            "mismatch vs reference, max abs diff = %g"
            % float(np.max(np.abs(np.asarray(out) - np.asarray(ref)))))

    print("KERNEL_OK")
</pallas_src>

<mosaic_0001>
module attributes {stable_mosaic.version = 11 : i64} {
  func.func @_conv1x1_bn_kernel(%arg0: i32, %arg1: i32, %arg2: memref<1x4x256xbf16, #tpu.memory_space<vmem>>, %arg3: memref<4x4xbf16, #tpu.memory_space<vmem>>, %arg4: memref<4x1xf32, #tpu.memory_space<vmem>>, %arg5: memref<1x4x256xbf16, #tpu.memory_space<vmem>>) attributes {dimension_semantics = [#tpu.dimension_semantics<parallel>, #tpu.dimension_semantics<parallel>], iteration_bounds = array<i64: 2, 1>, scalar_prefetch = 0 : i64, scratch_operands = 0 : i64, tpu.core_type = #tpu.core_type<tc>, window_params = [{transform_indices = @transform_0, window_bounds = array<i64: 1, 4, 256>}, {pipeline_mode = #tpu.pipeline_mode<synchronous>, transform_indices = @transform_1, window_bounds = array<i64: 4, 4>}, {pipeline_mode = #tpu.pipeline_mode<synchronous>, transform_indices = @transform_2, window_bounds = array<i64: 4, 1>}, {transform_indices = @transform_3, window_bounds = array<i64: 1, 4, 256>}]} {
    %c0 = arith.constant 0 : index
    %c0_0 = arith.constant 0 : index
    %0 = vector.load %arg3[%c0, %c0_0] : memref<4x4xbf16, #tpu.memory_space<vmem>>, vector<4x4xbf16>
    %c0_1 = arith.constant 0 : index
    %c0_2 = arith.constant 0 : index
    %c0_3 = arith.constant 0 : index
    %1 = vector.load %arg2[%c0_1, %c0_2, %c0_3] : memref<1x4x256xbf16, #tpu.memory_space<vmem>>, vector<1x4x256xbf16>
    %2 = vector.shape_cast %1 : vector<1x4x256xbf16> to vector<4x256xbf16>
    %cst = arith.constant dense<0.000000e+00> : vector<4x256xf32>
    %3 = tpu.matmul %0, %2, %cst {dimension_numbers = #tpu.dot_dimension_numbers<[1], [0], [0], [1], [0, 0, 1, 1], [], []>} : vector<4x4xbf16>, vector<4x256xbf16>, vector<4x256xf32> -> vector<4x256xf32>
    %c0_4 = arith.constant 0 : index
    %c0_5 = arith.constant 0 : index
    %4 = vector.load %arg4[%c0_4, %c0_5] : memref<4x1xf32, #tpu.memory_space<vmem>>, vector<4x1xf32>
    %5 = vector.broadcast %4 : vector<4x1xf32> to vector<4x256xf32>
    %6 = arith.addf %3, %5 : vector<4x256xf32>
    %cst_6 = arith.constant 0.000000e+00 : f32
    %7 = vector.broadcast %cst_6 : f32 to vector<4x256xf32>
    %8 = arith.maximumf %6, %7 : vector<4x256xf32>
    %9 = arith.truncf %8 : vector<4x256xf32> to vector<4x256xbf16>
    %c0_7 = arith.constant 0 : index
    %c0_8 = arith.constant 0 : index
    %c0_9 = arith.constant 0 : index
    %10 = vector.load %arg5[%c0_7, %c0_8, %c0_9] : memref<1x4x256xbf16, #tpu.memory_space<vmem>>, vector<1x4x256xbf16>
    %11 = vector.shape_cast %10 : vector<1x4x256xbf16> to vector<4x256xbf16>
    %12 = vector.shape_cast %9 : vector<4x256xbf16> to vector<1x4x256xbf16>
    tpu.vector_store %arg5[%c0_7, %c0_8, %c0_9], %12 {strides = array<i32>} : memref<1x4x256xbf16, #tpu.memory_space<vmem>>, vector<1x4x256xbf16>,
    return
  }
  func.func @transform_0(%arg0: i32, %arg1: i32) -> (i32, i32, i32) {
    %c0_i32 = arith.constant 0 : i32
    %c0_i32_0 = arith.constant 0 : i32
    return %arg0, %c0_i32, %arg1 : i32, i32, i32
  }
  func.func @transform_1(%arg0: i32, %arg1: i32) -> (i32, i32) {
    %c0_i32 = arith.constant 0 : i32
    %c0_i32_0 = arith.constant 0 : i32
    %c0_i32_1 = arith.constant 0 : i32
    return %c0_i32, %c0_i32_0 : i32, i32
  }
  func.func @transform_2(%arg0: i32, %arg1: i32) -> (i32, i32) {
    %c0_i32 = arith.constant 0 : i32
    %c0_i32_0 = arith.constant 0 : i32
    %c0_i32_1 = arith.constant 0 : i32
    return %c0_i32, %c0_i32_0 : i32, i32
  }
  func.func @transform_3(%arg0: i32, %arg1: i32) -> (i32, i32, i32) {
    %c0_i32 = arith.constant 0 : i32
    %c0_i32_0 = arith.constant 0 : i32
    return %arg0, %c0_i32, %arg1 : i32, i32, i32
  }
}

module attributes {stable_mosaic.version = 11 : i64} {
  func.func @_conv1x1_bn_kernel(%arg0: i32, %arg1: i32, %arg2: memref<1x4x256xbf16, #tpu.memory_space<vmem>>, %arg3: memref<8x4xbf16, #tpu.memory_space<vmem>>, %arg4: memref<8x1xf32, #tpu.memory_space<vmem>>, %arg5: memref<1x8x256xbf16, #tpu.memory_space<vmem>>) attributes {dimension_semantics = [#tpu.dimension_semantics<parallel>, #tpu.dimension_semantics<parallel>], iteration_bounds = array<i64: 2, 1>, scalar_prefetch = 0 : i64, scratch_operands = 0 : i64, tpu.core_type = #tpu.core_type<tc>, window_params = [{transform_indices = @transform_0, window_bounds = array<i64: 1, 4, 256>}, {pipeline_mode = #tpu.pipeline_mode<synchronous>, transform_indices = @transform_1, window_bounds = array<i64: 8, 4>}, {pipeline_mode = #tpu.pipeline_mode<synchronous>, transform_indices = @transform_2, window_bounds = array<i64: 8, 1>}, {transform_indices = @transform_3, window_bounds = array<i64: 1, 8, 256>}]} {
    %c0 = arith.constant 0 : index
    %c0_0 = arith.constant 0 : index
    %0 = vector.load %arg3[%c0, %c0_0] : memref<8x4xbf16, #tpu.memory_space<vmem>>, vector<8x4xbf16>
    %c0_1 = arith.constant 0 : index
    %c0_2 = arith.constant 0 : index
    %c0_3 = arith.constant 0 : index
    %1 = vector.load %arg2[%c0_1, %c0_2, %c0_3] : memref<1x4x256xbf16, #tpu.memory_space<vmem>>, vector<1x4x256xbf16>
    %2 = vector.shape_cast %1 : vector<1x4x256xbf16> to vector<4x256xbf16>
    %cst = arith.constant dense<0.000000e+00> : vector<8x256xf32>
    %3 = tpu.matmul %0, %2, %cst {dimension_numbers = #tpu.dot_dimension_numbers<[1], [0], [0], [1], [0, 0, 1, 1], [], []>} : vector<8x4xbf16>, vector<4x256xbf16>, vector<8x256xf32> -> vector<8x256xf32>
    %c0_4 = arith.constant 0 : index
    %c0_5 = arith.constant 0 : index
    %4 = vector.load %arg4[%c0_4, %c0_5] : memref<8x1xf32, #tpu.memory_space<vmem>>, vector<8x1xf32>
    %5 = vector.broadcast %4 : vector<8x1xf32> to vector<8x256xf32>
    %6 = arith.addf %3, %5 : vector<8x256xf32>
    %7 = arith.truncf %6 : vector<8x256xf32> to vector<8x256xbf16>
    %c0_6 = arith.constant 0 : index
    %c0_7 = arith.constant 0 : index
    %c0_8 = arith.constant 0 : index
    %8 = vector.load %arg5[%c0_6, %c0_7, %c0_8] : memref<1x8x256xbf16, #tpu.memory_space<vmem>>, vector<1x8x256xbf16>
    %9 = vector.shape_cast %8 : vector<1x8x256xbf16> to vector<8x256xbf16>
    %10 = vector.shape_cast %7 : vector<8x256xbf16> to vector<1x8x256xbf16>
    tpu.vector_store %arg5[%c0_6, %c0_7, %c0_8], %10 {strides = array<i32>} : memref<1x8x256xbf16, #tpu.memory_space<vmem>>, vector<1x8x256xbf16>,
    return
  }
  func.func @transform_0(%arg0: i32, %arg1: i32) -> (i32, i32, i32) {
    %c0_i32 = arith.constant 0 : i32
    %c0_i32_0 = arith.constant 0 : i32
    return %arg0, %c0_i32, %arg1 : i32, i32, i32
  }
  func.func @transform_1(%arg0: i32, %arg1: i32) -> (i32, i32) {
    %c0_i32 = arith.constant 0 : i32
    %c0_i32_0 = arith.constant 0 : i32
    %c0_i32_1 = arith.constant 0 : i32
    return %c0_i32, %c0_i32_0 : i32, i32
  }
  func.func @transform_2(%arg0: i32, %arg1: i32) -> (i32, i32) {
    %c0_i32 = arith.constant 0 : i32
    %c0_i32_0 = arith.constant 0 : i32
    %c0_i32_1 = arith.constant 0 : i32
    return %c0_i32, %c0_i32_0 : i32, i32
  }
  func.func @transform_3(%arg0: i32, %arg1: i32) -> (i32, i32, i32) {
    %c0_i32 = arith.constant 0 : i32
    %c0_i32_0 = arith.constant 0 : i32
    return %arg0, %c0_i32, %arg1 : i32, i32, i32
  }
}

module attributes {stable_mosaic.version = 11 : i64} {
  func.func @_final_mix_kernel(%arg0: i32, %arg1: i32, %arg2: memref<1x4x256xbf16, #tpu.memory_space<vmem>>, %arg3: memref<1x4x256xbf16, #tpu.memory_space<vmem>>, %arg4: memref<1x4x256xbf16, #tpu.memory_space<vmem>>, %arg5: memref<8x4xbf16, #tpu.memory_space<vmem>>, %arg6: memref<8x4xbf16, #tpu.memory_space<vmem>>, %arg7: memref<8x4xbf16, #tpu.memory_space<vmem>>, %arg8: memref<8x1xf32, #tpu.memory_space<vmem>>, %arg9: memref<1x8x256xbf16, #tpu.memory_space<vmem>>, %arg10: memref<1x8x256xf32, #tpu.memory_space<vmem>>) attributes {dimension_semantics = [#tpu.dimension_semantics<parallel>, #tpu.dimension_semantics<parallel>], iteration_bounds = array<i64: 2, 1>, scalar_prefetch = 0 : i64, scratch_operands = 0 : i64, tpu.core_type = #tpu.core_type<tc>, window_params = [{transform_indices = @transform_0, window_bounds = array<i64: 1, 4, 256>}, {transform_indices = @transform_1, window_bounds = array<i64: 1, 4, 256>}, {transform_indices = @transform_2, window_bounds = array<i64: 1, 4, 256>}, {pipeline_mode = #tpu.pipeline_mode<synchronous>, transform_indices = @transform_3, window_bounds = array<i64: 8, 4>}, {pipeline_mode = #tpu.pipeline_mode<synchronous>, transform_indices = @transform_4, window_bounds = array<i64: 8, 4>}, {pipeline_mode = #tpu.pipeline_mode<synchronous>, transform_indices = @transform_5, window_bounds = array<i64: 8, 4>}, {pipeline_mode = #tpu.pipeline_mode<synchronous>, transform_indices = @transform_6, window_bounds = array<i64: 8, 1>}, {transform_indices = @transform_7, window_bounds = array<i64: 1, 8, 256>}, {transform_indices = @transform_8, window_bounds = array<i64: 1, 8, 256>}]} {
    %c0 = arith.constant 0 : index
    %c0_0 = arith.constant 0 : index
    %0 = vector.load %arg5[%c0, %c0_0] : memref<8x4xbf16, #tpu.memory_space<vmem>>, vector<8x4xbf16>
    %c0_1 = arith.constant 0 : index
    %c0_2 = arith.constant 0 : index
    %c0_3 = arith.constant 0 : index
    %1 = vector.load %arg2[%c0_1, %c0_2, %c0_3] : memref<1x4x256xbf16, #tpu.memory_space<vmem>>, vector<1x4x256xbf16>
    %2 = vector.shape_cast %1 : vector<1x4x256xbf16> to vector<4x256xbf16>
    %cst = arith.constant dense<0.000000e+00> : vector<8x256xf32>
    %3 = tpu.matmul %0, %2, %cst {dimension_numbers = #tpu.dot_dimension_numbers<[1], [0], [0], [1], [0, 0, 1, 1], [], []>} : vector<8x4xbf16>, vector<4x256xbf16>, vector<8x256xf32> -> vector<8x256xf32>
    %c0_4 = arith.constant 0 : index
    %c0_5 = arith.constant 0 : index
    %4 = vector.load %arg6[%c0_4, %c0_5] : memref<8x4xbf16, #tpu.memory_space<vmem>>, vector<8x4xbf16>
    %c0_6 = arith.constant 0 : index
    %c0_7 = arith.constant 0 : index
    %c0_8 = arith.constant 0 : index
    %5 = vector.load %arg3[%c0_6, %c0_7, %c0_8] : memref<1x4x256xbf16, #tpu.memory_space<vmem>>, vector<1x4x256xbf16>
    %6 = vector.shape_cast %5 : vector<1x4x256xbf16> to vector<4x256xbf16>
    %cst_9 = arith.constant dense<0.000000e+00> : vector<8x256xf32>
    %7 = tpu.matmul %4, %6, %cst_9 {dimension_numbers = #tpu.dot_dimension_numbers<[1], [0], [0], [1], [0, 0, 1, 1], [], []>} : vector<8x4xbf16>, vector<4x256xbf16>, vector<8x256xf32> -> vector<8x256xf32>
    %8 = arith.addf %3, %7 : vector<8x256xf32>
    %c0_10 = arith.constant 0 : index
    %c0_11 = arith.constant 0 : index
    %9 = vector.load %arg7[%c0_10, %c0_11] : memref<8x4xbf16, #tpu.memory_space<vmem>>, vector<8x4xbf16>
    %c0_12 = arith.constant 0 : index
    %c0_13 = arith.constant 0 : index
    %c0_14 = arith.constant 0 : index
    %10 = vector.load %arg4[%c0_12, %c0_13, %c0_14] : memref<1x4x256xbf16, #tpu.memory_space<vmem>>, vector<1x4x256xbf16>
    %11 = vector.shape_cast %10 : vector<1x4x256xbf16> to vector<4x256xbf16>
    %cst_15 = arith.constant dense<0.000000e+00> : vector<8x256xf32>
    %12 = tpu.matmul %9, %11, %cst_15 {dimension_numbers = #tpu.dot_dimension_numbers<[1], [0], [0], [1], [0, 0, 1, 1], [], []>} : vector<8x4xbf16>, vector<4x256xbf16>, vector<8x256xf32> -> vector<8x256xf32>
    %13 = arith.addf %8, %12 : vector<8x256xf32>
    %c0_16 = arith.constant 0 : index
    %c0_17 = arith.constant 0 : index
    %14 = vector.load %arg8[%c0_16, %c0_17] : memref<8x1xf32, #tpu.memory_space<vmem>>, vector<8x1xf32>
    %15 = vector.broadcast %14 : vector<8x1xf32> to vector<8x256xf32>
    %16 = arith.addf %13, %15 : vector<8x256xf32>
    %c0_18 = arith.constant 0 : index
    %c0_19 = arith.constant 0 : index
    %c0_20 = arith.constant 0 : index
    %17 = vector.load %arg9[%c0_18, %c0_19, %c0_20] : memref<1x8x256xbf16, #tpu.memory_space<vmem>>, vector<1x8x256xbf16>
    %18 = vector.shape_cast %17 : vector<1x8x256xbf16> to vector<8x256xbf16>
    %19 = arith.extf %18 : vector<8x256xbf16> to vector<8x256xf32>
    %20 = arith.addf %16, %19 : vector<8x256xf32>
    %cst_21 = arith.constant 0.000000e+00 : f32
    %21 = vector.broadcast %cst_21 : f32 to vector<8x256xf32>
    %22 = arith.maximumf %20, %21 : vector<8x256xf32>
    %c0_22 = arith.constant 0 : index
    %c0_23 = arith.constant 0 : index
    %c0_24 = arith.constant 0 : index
    %23 = vector.load %arg10[%c0_22, %c0_23, %c0_24] : memref<1x8x256xf32, #tpu.memory_space<vmem>>, vector<1x8x256xf32>
    %24 = vector.shape_cast %23 : vector<1x8x256xf32> to vector<8x256xf32>
    %25 = vector.shape_cast %22 : vector<8x256xf32> to vector<1x8x256xf32>
    tpu.vector_store %arg10[%c0_22, %c0_23, %c0_24], %25 {strides = array<i32>} : memref<1x8x256xf32, #tpu.memory_space<vmem>>, vector<1x8x256xf32>,
    return
  }
  func.func @transform_0(%arg0: i32, %arg1: i32) -> (i32, i32, i32) {
    %c0_i32 = arith.constant 0 : i32
    %c0_i32_0 = arith.constant 0 : i32
    return %arg0, %c0_i32, %arg1 : i32, i32, i32
  }
  func.func @transform_1(%arg0: i32, %arg1: i32) -> (i32, i32, i32) {
    %c0_i32 = arith.constant 0 : i32
    %c0_i32_0 = arith.constant 0 : i32
    return %arg0, %c0_i32, %arg1 : i32, i32, i32
  }
  func.func @transform_2(%arg0: i32, %arg1: i32) -> (i32, i32, i32) {
    %c0_i32 = arith.constant 0 : i32
    %c0_i32_0 = arith.constant 0 : i32
    return %arg0, %c0_i32, %arg1 : i32, i32, i32
  }
  func.func @transform_3(%arg0: i32, %arg1: i32) -> (i32, i32) {
    %c0_i32 = arith.constant 0 : i32
    %c0_i32_0 = arith.constant 0 : i32
    %c0_i32_1 = arith.constant 0 : i32
    return %c0_i32, %c0_i32_0 : i32, i32
  }
  func.func @transform_4(%arg0: i32, %arg1: i32) -> (i32, i32) {
    %c0_i32 = arith.constant 0 : i32
    %c0_i32_0 = arith.constant 0 : i32
    %c0_i32_1 = arith.constant 0 : i32
    return %c0_i32, %c0_i32_0 : i32, i32
  }
  func.func @transform_5(%arg0: i32, %arg1: i32) -> (i32, i32) {
    %c0_i32 = arith.constant 0 : i32
    %c0_i32_0 = arith.constant 0 : i32
    %c0_i32_1 = arith.constant 0 : i32
    return %c0_i32, %c0_i32_0 : i32, i32
  }
  func.func @transform_6(%arg0: i32, %arg1: i32) -> (i32, i32) {
    %c0_i32 = arith.constant 0 : i32
    %c0_i32_0 = arith.constant 0 : i32
    %c0_i32_1 = arith.constant 0 : i32
    return %c0_i32, %c0_i32_0 : i32, i32
  }
  func.func @transform_7(%arg0: i32, %arg1: i32) -> (i32, i32, i32) {
    %c0_i32 = arith.constant 0 : i32
    %c0_i32_0 = arith.constant 0 : i32
    return %arg0, %c0_i32, %arg1 : i32, i32, i32
  }
  func.func @transform_8(%arg0: i32, %arg1: i32) -> (i32, i32, i32) {
    %c0_i32 = arith.constant 0 : i32
    %c0_i32_0 = arith.constant 0 : i32
    return %arg0, %c0_i32, %arg1 : i32, i32, i32
  }
}

module attributes {stable_mosaic.version = 11 : i64} {
  func.func @_conv3x3_bn_kernel(%arg0: i32, %arg1: memref<1x4x18x18xbf16, #tpu.memory_space<vmem>>, %arg2: memref<4x36xbf16, #tpu.memory_space<vmem>>, %arg3: memref<4x1xf32, #tpu.memory_space<vmem>>, %arg4: memref<1x4x256xbf16, #tpu.memory_space<vmem>>, %arg5: memref<36x256xbf16, #tpu.memory_space<vmem>>) attributes {dimension_semantics = [#tpu.dimension_semantics<parallel>], iteration_bounds = array<i64: 2>, scalar_prefetch = 0 : i64, scratch_operands = 1 : i64, tpu.core_type = #tpu.core_type<tc>, window_params = [{transform_indices = @transform_0, window_bounds = array<i64: 1, 4, 18, 18>}, {pipeline_mode = #tpu.pipeline_mode<synchronous>, transform_indices = @transform_1, window_bounds = array<i64: 4, 36>}, {pipeline_mode = #tpu.pipeline_mode<synchronous>, transform_indices = @transform_2, window_bounds = array<i64: 4, 1>}, {transform_indices = @transform_3, window_bounds = array<i64: 1, 4, 256>}]} {
    %c0 = arith.constant 0 : index
    %c0_0 = arith.constant 0 : index
    %c0_1 = arith.constant 0 : index
    %c0_2 = arith.constant 0 : index
    %0 = vector.load %arg1[%c0, %c0_0, %c0_1, %c0_2] : memref<1x4x18x18xbf16, #tpu.memory_space<vmem>>, vector<1x4x1x18xbf16>
    %1 = vector.shape_cast %0 : vector<1x4x1x18xbf16> to vector<4x18xbf16>
    %2 = vector.extract_strided_slice %1 {offsets = [0, 0], sizes = [4, 16], strides = [1, 1]} : vector<4x18xbf16> to vector<4x16xbf16>
    %c0_3 = arith.constant 0 : index
    %c0_4 = arith.constant 0 : index
    %3 = vector.load %arg5[%c0_3, %c0_4] : memref<36x256xbf16, #tpu.memory_space<vmem>>, vector<4x16xbf16>
    tpu.vector_store %arg5[%c0_3, %c0_4], %2 {strides = array<i32>} : memref<36x256xbf16, #tpu.memory_space<vmem>>, vector<4x16xbf16>,
    %4 = vector.extract_strided_slice %1 {offsets = [0, 1], sizes = [4, 16], strides = [1, 1]} : vector<4x18xbf16> to vector<4x16xbf16>
    %c4 = arith.constant 4 : index
    %c0_5 = arith.constant 0 : index
    %5 = vector.load %arg5[%c4, %c0_5] : memref<36x256xbf16, #tpu.memory_space<vmem>>, vector<4x16xbf16>
    tpu.vector_store %arg5[%c4, %c0_5], %4 {strides = array<i32>} : memref<36x256xbf16, #tpu.memory_space<vmem>>, vector<4x16xbf16>,
    %6 = vector.extract_strided_slice %1 {offsets = [0, 2], sizes = [4, 16], strides = [1, 1]} : vector<4x18xbf16> to vector<4x16xbf16>
    %c8 = arith.constant 8 : index
    %c0_6 = arith.constant 0 : index
    %7 = vector.load %arg5[%c8, %c0_6] : memref<36x256xbf16, #tpu.memory_space<vmem>>, vector<4x16xbf16>
    tpu.vector_store %arg5[%c8, %c0_6], %6 {strides = array<i32>} : memref<36x256xbf16, #tpu.memory_space<vmem>>, vector<4x16xbf16>,
    %c0_7 = arith.constant 0 : index
    %c0_8 = arith.constant 0 : index
    %c1 = arith.constant 1 : index
    %c0_9 = arith.constant 0 : index
    %8 = vector.load %arg1[%c0_7, %c0_8, %c1, %c0_9] : memref<1x4x18x18xbf16, #tpu.memory_space<vmem>>, vector<1x4x1x18xbf16>
    %9 = vector.shape_cast %8 : vector<1x4x1x18xbf16> to vector<4x18xbf16>
    %10 = vector.extract_strided_slice %9 {offsets = [0, 0], sizes = [4, 16], strides = [1, 1]} : vector<4x18xbf16> to vector<4x16xbf16>
    %c12 = arith.constant 12 : index
    %c0_10 = arith.constant 0 : index
    %11 = vector.load %arg5[%c12, %c0_10] : memref<36x256xbf16, #tpu.memory_space<vmem>>, vector<4x16xbf16>
    tpu.vector_store %arg5[%c12, %c0_10], %10 {strides = array<i32>} : memref<36x256xbf16, #tpu.memory_space<vmem>>, vector<4x16xbf16>,
    %12 = vector.extract_strided_slice %9 {offsets = [0, 1], sizes = [4, 16], strides = [1, 1]} : vector<4x18xbf16> to vector<4x16xbf16>
    %c16 = arith.constant 16 : index
    %c0_11 = arith.constant 0 : index
    %13 = vector.load %arg5[%c16, %c0_11] : memref<36x256xbf16, #tpu.memory_space<vmem>>, vector<4x16xbf16>
    tpu.vector_store %arg5[%c16, %c0_11], %12 {strides = array<i32>} : memref<36x256xbf16, #tpu.memory_space<vmem>>, vector<4x16xbf16>,
    %14 = vector.extract_strided_slice %9 {offsets = [0, 2], sizes = [4, 16], strides = [1, 1]} : vector<4x18xbf16> to vector<4x16xbf16>
    %c20 = arith.constant 20 : index
    %c0_12 = arith.constant 0 : index
    %15 = vector.load %arg5[%c20, %c0_12] : memref<36x256xbf16, #tpu.memory_space<vmem>>, vector<4x16xbf16>
    tpu.vector_store %arg5[%c20, %c0_12], %14 {strides = array<i32>} : memref<36x256xbf16, #tpu.memory_space<vmem>>, vector<4x16xbf16>,
    %c0_13 = arith.constant 0 : index
    %c0_14 = arith.constant 0 : index
    %c2 = arith.constant 2 : index
    %c0_15 = arith.constant 0 : index
    %16 = vector.load %arg1[%c0_13, %c0_14, %c2, %c0_15] : memref<1x4x18x18xbf16, #tpu.memory_space<vmem>>, vector<1x4x1x18xbf16>
    %17 = vector.shape_cast %16 : vector<1x4x1x18xbf16> to vector<4x18xbf16>
    %18 = vector.extract_strided_slice %17 {offsets = [0, 0], sizes = [4, 16], strides = [1, 1]} : vector<4x18xbf16> to vector<4x16xbf16>
    %c24 = arith.constant 24 : index
    %c0_16 = arith.constant 0 : index
    %19 = vector.load %arg5[%c24, %c0_16] : memref<36x256xbf16, #tpu.memory_space<vmem>>, vector<4x16xbf16>
    tpu.vector_store %arg5[%c24, %c0_16], %18 {strides = array<i32>} : memref<36x256xbf16, #tpu.memory_space<vmem>>, vector<4x16xbf16>,
    %20 = vector.extract_strided_slice %17 {offsets = [0, 1], sizes = [4, 16], strides = [1, 1]} : vector<4x18xbf16> to vector<4x16xbf16>
    %c28 = arith.constant 28 : index
    %c0_17 = arith.constant 0 : index
    %21 = vector.load %arg5[%c28, %c0_17] : memref<36x256xbf16, #tpu.memory_space<vmem>>, vector<4x16xbf16>
    tpu.vector_store %arg5[%c28, %c0_17], %20 {strides = array<i32>} : memref<36x256xbf16, #tpu.memory_space<vmem>>, vector<4x16xbf16>,
    %22 = vector.extract_strided_slice %17 {offsets = [0, 2], sizes = [4, 16], strides = [1, 1]} : vector<4x18xbf16> to vector<4x16xbf16>
    %c32 = arith.constant 32 : index
    %c0_18 = arith.constant 0 : index
    %23 = vector.load %arg5[%c32, %c0_18] : memref<36x256xbf16, #tpu.memory_space<vmem>>, vector<4x16xbf16>
    tpu.vector_store %arg5[%c32, %c0_18], %22 {strides = array<i32>} : memref<36x256xbf16, #tpu.memory_space<vmem>>, vector<4x16xbf16>,
    %c0_19 = arith.constant 0 : index
    %c0_20 = arith.constant 0 : index
    %c1_21 = arith.constant 1 : index
    %c0_22 = arith.constant 0 : index
    %24 = vector.load %arg1[%c0_19, %c0_20, %c1_21, %c0_22] : memref<1x4x18x18xbf16, #tpu.memory_space<vmem>>, vector<1x4x1x18xbf16>
    %25 = vector.shape_cast %24 : vector<1x4x1x18xbf16> to vector<4x18xbf16>
    %26 = vector.extract_strided_slice %25 {offsets = [0, 0], sizes = [4, 16], strides = [1, 1]} : vector<4x18xbf16> to vector<4x16xbf16>
    %c0_23 = arith.constant 0 : index
    %c16_24 = arith.constant 16 : index
    %27 = vector.load %arg5[%c0_23, %c16_24] : memref<36x256xbf16, #tpu.memory_space<vmem>>, vector<4x16xbf16>
    tpu.vector_store %arg5[%c0_23, %c16_24], %26 {strides = array<i32>} : memref<36x256xbf16, #tpu.memory_space<vmem>>, vector<4x16xbf16>,
    %28 = vector.extract_strided_slice %25 {offsets = [0, 1], sizes = [4, 16], strides = [1, 1]} : vector<4x18xbf16> to vector<4x16xbf16>
    %c4_25 = arith.constant 4 : index
    %c16_26 = arith.constant 16 : index
    %29 = vector.load %arg5[%c4_25, %c16_26] : memref<36x256xbf16, #tpu.memory_space<vmem>>, vector<4x16xbf16>
    tpu.vector_store %arg5[%c4_25, %c16_26], %28 {strides = array<i32>} : memref<36x256xbf16, #tpu.memory_space<vmem>>, vector<4x16xbf16>,
    %30 = vector.extract_strided_slice %25 {offsets = [0, 2], sizes = [4, 16], strides = [1, 1]} : vector<4x18xbf16> to vector<4x16xbf16>
    %c8_27 = arith.constant 8 : index
    %c16_28 = arith.constant 16 : index
    %31 = vector.load %arg5[%c8_27, %c16_28] : memref<36x256xbf16, #tpu.memory_space<vmem>>, vector<4x16xbf16>
    tpu.vector_store %arg5[%c8_27, %c16_28], %30 {strides = array<i32>} : memref<36x256xbf16, #tpu.memory_space<vmem>>, vector<4x16xbf16>,
    %c0_29 = arith.constant 0 : index
    %c0_30 = arith.constant 0 : index
    %c2_31 = arith.constant 2 : index
    %c0_32 = arith.constant 0 : index
    %32 = vector.load %arg1[%c0_29, %c0_30, %c2_31, %c0_32] : memref<1x4x18x18xbf16, #tpu.memory_space<vmem>>, vector<1x4x1x18xbf16>
    %33 = vector.shape_cast %32 : vector<1x4x1x18xbf16> to vector<4x18xbf16>
    %34 = vector.extract_strided_slice %33 {offsets = [0, 0], sizes = [4, 16], strides = [1, 1]} : vector<4x18xbf16> to vector<4x16xbf16>
    %c12_33 = arith.constant 12 : index
    %c16_34 = arith.constant 16 : index
    %35 = vector.load %arg5[%c12_33, %c16_34] : memref<36x256xbf16, #tpu.memory_space<vmem>>, vector<4x16xbf16>
    tpu.vector_store %arg5[%c12_33, %c16_34], %34 {strides = array<i32>} : memref<36x256xbf16, #tpu.memory_space<vmem>>, vector<4x16xbf16>,
    %36 = vector.extract_strided_slice %33 {offsets = [0, 1], sizes = [4, 16], strides = [1, 1]} : vector<4x18xbf16> to vector<4x16xbf16>
    %c16_35 = arith.constant 16 : index
    %c16_36 = arith.constant 16 : index
    %37 = vector.load %arg5[%c16_35, %c16_36] : memref<36x256xbf16, #tpu.memory_space<vmem>>, vector<4x16xbf16>
    tpu.vector_store %arg5[%c16_35, %c16_36], %36 {strides = array<i32>} : memref<36x256xbf16, #tpu.memory_space<vmem>>, vector<4x16xbf16>,
    %38 = vector.extract_strided_slice %33 {offsets = [0, 2], sizes = [4, 16], strides = [1, 1]} : vector<4x18xbf16> to vector<4x16xbf16>
    %c20_37 = arith.constant 20 : index
    %c16_38 = arith.constant 16 : index
    %39 = vector.load %arg5[%c20_37, %c16_38] : memref<36x256xbf16, #tpu.memory_space<vmem>>, vector<4x16xbf16>
    tpu.vector_store %arg5[%c20_37, %c16_38], %38 {strides = array<i32>} : memref<36x256xbf16, #tpu.memory_space<vmem>>, vector<4x16xbf16>,
    %c0_39 = arith.constant 0 : index
    %c0_40 = arith.constant 0 : index
    %c3 = arith.constant 3 : index
    %c0_41 = arith.constant 0 : index
    %40 = vector.load %arg1[%c0_39, %c0_40, %c3, %c0_41] : memref<1x4x18x18xbf16, #tpu.memory_space<vmem>>, vector<1x4x1x18xbf16>
    %41 = vector.shape_cast %40 : vector<1x4x1x18xbf16> to vector<4x18xbf16>
    %42 = vector.extract_strided_slice %41 {offsets = [0, 0], sizes = [4, 16], strides = [1, 1]} : vector<4x18xbf16> to vector<4x16xbf16>
    %c24_42 = arith.constant 24 : index
    %c16_43 = arith.constant 16 : index
    %43 = vector.load %arg5[%c24_42, %c16_43] : memref<36x256xbf16, #tpu.memory_space<vmem>>, vector<4x16xbf16>
    tpu.vector_store %arg5[%c24_42, %c16_43], %42 {strides = array<i32>} : memref<36x256xbf16, #tpu.memory_space<vmem>>, vector<4x16xbf16>,
    %44 = vector.extract_strided_slice %41 {offsets = [0, 1], sizes = [4, 16], strides = [1, 1]} : vector<4x18xbf16> to vector<4x16xbf16>
    %c28_44 = arith.constant 28 : index
    %c16_45 = arith.constant 16 : index
    %45 = vector.load %arg5[%c28_44, %c16_45] : memref<36x256xbf16, #tpu.memory_space<vmem>>, vector<4x16xbf16>
    tpu.vector_store %arg5[%c28_44, %c16_45], %44 {strides = array<i32>} : memref<36x256xbf16, #tpu.memory_space<vmem>>, vector<4x16xbf16>,
    %46 = vector.extract_strided_slice %41 {offsets = [0, 2], sizes = [4, 16], strides = [1, 1]} : vector<4x18xbf16> to vector<4x16xbf16>
    %c32_46 = arith.constant 32 : index
    %c16_47 = arith.constant 16 : index
    %47 = vector.load %arg5[%c32_46, %c16_47] : memref<36x256xbf16, #tpu.memory_space<vmem>>, vector<4x16xbf16>
    tpu.vector_store %arg5[%c32_46, %c16_47], %46 {strides = array<i32>} : memref<36x256xbf16, #tpu.memory_space<vmem>>, vector<4x16xbf16>,
    %c0_48 = arith.constant 0 : index
    %c0_49 = arith.constant 0 : index
    %c2_50 = arith.constant 2 : index
    %c0_51 = arith.constant 0 : index
    %48 = vector.load %arg1[%c0_48, %c0_49, %c2_50, %c0_51] : memref<1x4x18x18xbf16, #tpu.memory_space<vmem>>, vector<1x4x1x18xbf16>
    %49 = vector.shape_cast %48 : vector<1x4x1x18xbf16> to vector<4x18xbf16>
    %50 = vector.extract_strided_slice %49 {offsets = [0, 0], sizes = [4, 16], strides = [1, 1]} : vector<4x18xbf16> to vector<4x16xbf16>
    %c0_52 = arith.constant 0 : index
    %c32_53 = arith.constant 32 : index
    %51 = vector.load %arg5[%c0_52, %c32_53] : memref<36x256xbf16, #tpu.memory_space<vmem>>, vector<4x16xbf16>
    tpu.vector_store %arg5[%c0_52, %c32_53], %50 {strides = array<i32>} : memref<36x256xbf16, #tpu.memory_space<vmem>>, vector<4x16xbf16>,
    %52 = vector.extract_strided_slice %49 {offsets = [0, 1], sizes = [4, 16], strides = [1, 1]} : vector<4x18xbf16> to vector<4x16xbf16>
    %c4_54 = arith.constant 4 : index
    %c32_55 = arith.constant 32 : index
    %53 = vector.load %arg5[%c4_54, %c32_55] : memref<36x256xbf16, #tpu.memory_space<vmem>>, vector<4x16xbf16>
    tpu.vector_store %arg5[%c4_54, %c32_55], %52 {strides = array<i32>} : memref<36x256xbf16, #tpu.memory_space<vmem>>, vector<4x16xbf16>,
    %54 = vector.extract_strided_slice %49 {offsets = [0, 2], sizes = [4, 16], strides = [1, 1]} : vector<4x18xbf16> to vector<4x16xbf16>
    %c8_56 = arith.constant 8 : index
    %c32_57 = arith.constant 32 : index
    %55 = vector.load %arg5[%c8_56, %c32_57] : memref<36x256xbf16, #tpu.memory_space<vmem>>, vector<4x16xbf16>
    tpu.vector_store %arg5[%c8_56, %c32_57], %54 {strides = array<i32>} : memref<36x256xbf16, #tpu.memory_space<vmem>>, vector<4x16xbf16>,
    %c0_58 = arith.constant 0 : index
    %c0_59 = arith.constant 0 : index
    %c3_60 = arith.constant 3 : index
    %c0_61 = arith.constant 0 : index
    %56 = vector.load %arg1[%c0_58, %c0_59, %c3_60, %c0_61] : memref<1x4x18x18xbf16, #tpu.memory_space<vmem>>, vector<1x4x1x18xbf16>
    %57 = vector.shape_cast %56 : vector<1x4x1x18xbf16> to vector<4x18xbf16>
    %58 = vector.extract_strided_slice %57 {offsets = [0, 0], sizes = [4, 16], strides = [1, 1]} : vector<4x18xbf16> to vector<4x16xbf16>
    %c12_62 = arith.constant 12 : index
    %c32_63 = arith.constant 32 : index
    %59 = vector.load %arg5[%c12_62, %c32_63] : memref<36x256xbf16, #tpu.memory_space<vmem>>, vector<4x16xbf16>
    tpu.vector_store %arg5[%c12_62, %c32_63], %58 {strides = array<i32>} : memref<36x256xbf16, #tpu.memory_space<vmem>>, vector<4x16xbf16>,
    %60 = vector.extract_strided_slice %57 {offsets = [0, 1], sizes = [4, 16], strides = [1, 1]} : vector<4x18xbf16> to vector<4x16xbf16>
    %c16_64 = arith.constant 16 : index
    %c32_65 = arith.constant 32 : index
    %61 = vector.load %arg5[%c16_64, %c32_65] : memref<36x256xbf16, #tpu.memory_space<vmem>>, vector<4x16xbf16>
    tpu.vector_store %arg5[%c16_64, %c32_65], %60 {strides = array<i32>} : memref<36x256xbf16, #tpu.memory_space<vmem>>, vector<4x16xbf16>,
    %62 = vector.extract_strided_slice %57 {offsets = [0, 2], sizes = [4, 16], strides = [1, 1]} : vector<4x18xbf16> to vector<4x16xbf16>
    %c20_66 = arith.constant 20 : index
    %c32_67 = arith.constant 32 : index
    %63 = vector.load %arg5[%c20_66, %c32_67] : memref<36x256xbf16, #tpu.memory_space<vmem>>, vector<4x16xbf16>
    tpu.vector_store %arg5[%c20_66, %c32_67], %62 {strides = array<i32>} : memref<36x256xbf16, #tpu.memory_space<vmem>>, vector<4x16xbf16>,
    %c0_68 = arith.constant 0 : index
    %c0_69 = arith.constant 0 : index
    %c4_70 = arith.constant 4 : index
    %c0_71 = arith.constant 0 : index
    %64 = vector.load %arg1[%c0_68, %c0_69, %c4_70, %c0_71] : memref<1x4x18x18xbf16, #tpu.memory_space<vmem>>, vector<1x4x1x18xbf16>
    %65 = vector.shape_cast %64 : vector<1x4x1x18xbf16> to vector<4x18xbf16>
    %66 = vector.extract_strided_slice %65 {offsets = [0, 0], sizes = [4, 16], strides = [1, 1]} : vector<4x18xbf16> to vector<4x16xbf16>
    %c24_72 = arith.constant 24 : index
    %c32_73 = arith.constant 32 : index
    %67 = vector.load %arg5[%c24_72, %c32_73] : memref<36x256xbf16, #tpu.memory_space<vmem>>, vector<4x16xbf16>
    tpu.vector_store %arg5[%c24_72, %c32_73], %66 {strides = array<i32>} : memref<36x256xbf16, #tpu.memory_space<vmem>>, vector<4x16xbf16>,
    %68 = vector.extract_strided_slice %65 {offsets = [0, 1], sizes = [4, 16], strides = [1, 1]} : vector<4x18xbf16> to vector<4x16xbf16>
    %c28_74 = arith.constant 28 : index
    %c32_75 = arith.constant 32 : index
    %69 = vector.load %arg5[%c28_74, %c32_75] : memref<36x256xbf16, #tpu.memory_space<vmem>>, vector<4x16xbf16>
    tpu.vector_store %arg5[%c28_74, %c32_75], %68 {strides = array<i32>} : memref<36x256xbf16, #tpu.memory_space<vmem>>, vector<4x16xbf16>,
    %70 = vector.extract_strided_slice %65 {offsets = [0, 2], sizes = [4, 16], strides = [1, 1]} : vector<4x18xbf16> to vector<4x16xbf16>
    %c32_76 = arith.constant 32 : index
    %c32_77 = arith.constant 32 : index
    %71 = vector.load %arg5[%c32_76, %c32_77] : memref<36x256xbf16, #tpu.memory_space<vmem>>, vector<4x16xbf16>
    tpu.vector_store %arg5[%c32_76, %c32_77], %70 {strides = array<i32>} : memref<36x256xbf16, #tpu.memory_space<vmem>>, vector<4x16xbf16>,
    %c0_78 = arith.constant 0 : index
    %c0_79 = arith.constant 0 : index
    %c3_80 = arith.constant 3 : index
    %c0_81 = arith.constant 0 : index
    %72 = vector.load %arg1[%c0_78, %c0_79, %c3_80, %c0_81] : memref<1x4x18x18xbf16, #tpu.memory_space<vmem>>, vector<1x4x1x18xbf16>
    %73 = vector.shape_cast %72 : vector<1x4x1x18xbf16> to vector<4x18xbf16>
    %74 = vector.extract_strided_slice %73 {offsets = [0, 0], sizes = [4, 16], strides = [1, 1]} : vector<4x18xbf16> to vector<4x16xbf16>
    %c0_82 = arith.constant 0 : index
    %c48 = arith.constant 48 : index
    %75 = vector.load %arg5[%c0_82, %c48] : memref<36x256xbf16, #tpu.memory_space<vmem>>, vector<4x16xbf16>
    tpu.vector_store %arg5[%c0_82, %c48], %74 {strides = array<i32>} : memref<36x256xbf16, #tpu.memory_space<vmem>>, vector<4x16xbf16>,
    %76 = vector.extract_strided_slice %73 {offsets = [0, 1], sizes = [4, 16], strides = [1, 1]} : vector<4x18xbf16> to vector<4x16xbf16>
    %c4_83 = arith.constant 4 : index
    %c48_84 = arith.constant 48 : index
    %77 = vector.load %arg5[%c4_83, %c48_84] : memref<36x256xbf16, #tpu.memory_space<vmem>>, vector<4x16xbf16>
    tpu.vector_store %arg5[%c4_83, %c48_84], %76 {strides = array<i32>} : memref<36x256xbf16, #tpu.memory_space<vmem>>, vector<4x16xbf16>,
    %78 = vector.extract_strided_slice %73 {offsets = [0, 2], sizes = [4, 16], strides = [1, 1]} : vector<4x18xbf16> to vector<4x16xbf16>
    %c8_85 = arith.constant 8 : index
    %c48_86 = arith.constant 48 : index
    %79 = vector.load %arg5[%c8_85, %c48_86] : memref<36x256xbf16, #tpu.memory_space<vmem>>, vector<4x16xbf16>
    tpu.vector_store %arg5[%c8_85, %c48_86], %78 {strides = array<i32>} : memref<36x256xbf16, #tpu.memory_space<vmem>>, vector<4x16xbf16>,
    %c0_87 = arith.constant 0 : index
    %c0_88 = arith.constant 0 : index
    %c4_89 = arith.constant 4 : index
    %c0_90 = arith.constant 0 : index
    %80 = vector.load %arg1[%c0_87, %c0_88, %c4_89, %c0_90] : memref<1x4x18x18xbf16, #tpu.memory_space<vmem>>, vector<1x4x1x18xbf16>
    %81 = vector.shape_cast %80 : vector<1x4x1x18xbf16> to vector<4x18xbf16>
    %82 = vector.extract_strided_slice %81 {offsets = [0, 0], sizes = [4, 16], strides = [1, 1]} : vector<4x18xbf16> to vector<4x16xbf16>
    %c12_91 = arith.constant 12 : index
    %c48_92 = arith.constant 48 : index
    %83 = vector.load %arg5[%c12_91, %c48_92] : memref<36x256xbf16, #tpu.memory_space<vmem>>, vector<4x16xbf16>
    tpu.vector_store %arg5[%c12_91, %c48_92], %82 {strides = array<i32>} : memref<36x256xbf16, #tpu.memory_space<vmem>>, vector<4x16xbf16>,
    %84 = vector.extract_strided_slice %81 {offsets = [0, 1], sizes = [4, 16], strides = [1, 1]} : vector<4x18xbf16> to vector<4x16xbf16>
    %c16_93 = arith.constant 16 : index
    %c48_94 = arith.constant 48 : index
    %85 = vector.load %arg5[%c16_93, %c48_94] : memref<36x256xbf16, #tpu.memory_space<vmem>>, vector<4x16xbf16>
    tpu.vector_store %arg5[%c16_93, %c48_94], %84 {strides = array<i32>} : memref<36x256xbf16, #tpu.memory_space<vmem>>, vector<4x16xbf16>,
    %86 = vector.extract_strided_slice %81 {offsets = [0, 2], sizes = [4, 16], strides = [1, 1]} : vector<4x18xbf16> to vector<4x16xbf16>
    %c20_95 = arith.constant 20 : index
    %c48_96 = arith.constant 48 : index
    %87 = vector.load %arg5[%c20_95, %c48_96] : memref<36x256xbf16, #tpu.memory_space<vmem>>, vector<4x16xbf16>
    tpu.vector_store %arg5[%c20_95, %c48_96], %86 {strides = array<i32>} : memref<36x256xbf16, #tpu.memory_space<vmem>>, vector<4x16xbf16>,
    %c0_97 = arith.constant 0 : index
    %c0_98 = arith.constant 0 : index
    %c5 = arith.constant 5 : index
    %c0_99 = arith.constant 0 : index
    %88 = vector.load %arg1[%c0_97, %c0_98, %c5, %c0_99] : memref<1x4x18x18xbf16, #tpu.memory_space<vmem>>, vector<1x4x1x18xbf16>
    %89 = vector.shape_cast %88 : vector<1x4x1x18xbf16> to vector<4x18xbf16>
    %90 = vector.extract_strided_slice %89 {offsets = [0, 0], sizes = [4, 16], strides = [1, 1]} : vector<4x18xbf16> to vector<4x16xbf16>
    %c24_100 = arith.constant 24 : index
    %c48_101 = arith.constant 48 : index
    %91 = vector.load %arg5[%c24_100, %c48_101] : memref<36x256xbf16, #tpu.memory_space<vmem>>, vector<4x16xbf16>
    tpu.vector_store %arg5[%c24_100, %c48_101], %90 {strides = array<i32>} : memref<36x256xbf16, #tpu.memory_space<vmem>>, vector<4x16xbf16>,
    %92 = vector.extract_strided_slice %89 {offsets = [0, 1], sizes = [4, 16], strides = [1, 1]} : vector<4x18xbf16> to vector<4x16xbf16>
    %c28_102 = arith.constant 28 : index
    %c48_103 = arith.constant 48 : index
    %93 = vector.load %arg5[%c28_102, %c48_103] : memref<36x256xbf16, #tpu.memory_space<vmem>>, vector<4x16xbf16>
    tpu.vector_store %arg5[%c28_102, %c48_103], %92 {strides = array<i32>} : memref<36x256xbf16, #tpu.memory_space<vmem>>, vector<4x16xbf16>,
    %94 = vector.extract_strided_slice %89 {offsets = [0, 2], sizes = [4, 16], strides = [1, 1]} : vector<4x18xbf16> to vector<4x16xbf16>
    %c32_104 = arith.constant 32 : index
    %c48_105 = arith.constant 48 : index
    %95 = vector.load %arg5[%c32_104, %c48_105] : memref<36x256xbf16, #tpu.memory_space<vmem>>, vector<4x16xbf16>
    tpu.vector_store %arg5[%c32_104, %c48_105], %94 {strides = array<i32>} : memref<36x256xbf16, #tpu.memory_space<vmem>>, vector<4x16xbf16>,
    %c0_106 = arith.constant 0 : index
    %c0_107 = arith.constant 0 : index
    %c4_108 = arith.constant 4 : index
    %c0_109 = arith.constant 0 : index
    %96 = vector.load %arg1[%c0_106, %c0_107, %c4_108, %c0_109] : memref<1x4x18x18xbf16, #tpu.memory_space<vmem>>, vector<1x4x1x18xbf16>
    %97 = vector.shape_cast %96 : vector<1x4x1x18xbf16> to vector<4x18xbf16>
    %98 = vector.extract_strided_slice %97 {offsets = [0, 0], sizes = [4, 16], strides = [1, 1]} : vector<4x18xbf16> to vector<4x16xbf16>
    %c0_110 = arith.constant 0 : index
    %c64 = arith.constant 64 : index
    %99 = vector.load %arg5[%c0_110, %c64] : memref<36x256xbf16, #tpu.memory_space<vmem>>, vector<4x16xbf16>
    tpu.vector_store %arg5[%c0_110, %c64], %98 {strides = array<i32>} : memref<36x256xbf16, #tpu.memory_space<vmem>>, vector<4x16xbf16>,
    %100 = vector.extract_strided_slice %97 {offsets = [0, 1], sizes = [4, 16], strides = [1, 1]} : vector<4x18xbf16> to vector<4x16xbf16>
    %c4_111 = arith.constant 4 : index
    %c64_112 = arith.constant 64 : index
    %101 = vector.load %arg5[%c4_111, %c64_112] : memref<36x256xbf16, #tpu.memory_space<vmem>>, vector<4x16xbf16>
    tpu.vector_store %arg5[%c4_111, %c64_112], %100 {strides = array<i32>} : memref<36x256xbf16, #tpu.memory_space<vmem>>, vector<4x16xbf16>,
    %102 = vector.extract_strided_slice %97 {offsets = [0, 2], sizes = [4, 16], strides = [1, 1]} : vector<4x18xbf16> to vector<4x16xbf16>
    %c8_113 = arith.constant 8 : index
    %c64_114 = arith.constant 64 : index
    %103 = vector.load %arg5[%c8_113, %c64_114] : memref<36x256xbf16, #tpu.memory_space<vmem>>, vector<4x16xbf16>
    tpu.vector_store %arg5[%c8_113, %c64_114], %102 {strides = array<i32>} : memref<36x256xbf16, #tpu.memory_space<vmem>>, vector<4x16xbf16>,
    %c0_115 = arith.constant 0 : index
    %c0_116 = arith.constant 0 : index
    %c5_117 = arith.constant 5 : index
    %c0_118 = arith.constant 0 : index
    %104 = vector.load %arg1[%c0_115, %c0_116, %c5_117, %c0_118] : memref<1x4x18x18xbf16, #tpu.memory_space<vmem>>, vector<1x4x1x18xbf16>
    %105 = vector.shape_cast %104 : vector<1x4x1x18xbf16> to vector<4x18xbf16>
    %106 = vector.extract_strided_slice %105 {offsets = [0, 0], sizes = [4, 16], strides = [1, 1]} : vector<4x18xbf16> to vector<4x16xbf16>
    %c12_119 = arith.constant 12 : index
    %c64_120 = arith.constant 64 : index
    %107 = vector.load %arg5[%c12_119, %c64_120] : memref<36x256xbf16, #tpu.memory_space<vmem>>, vector<4x16xbf16>
    tpu.vector_store %arg5[%c12_119, %c64_120], %106 {strides = array<i32>} : memref<36x256xbf16, #tpu.memory_space<vmem>>, vector<4x16xbf16>,
    %108 = vector.extract_strided_slice %105 {offsets = [0, 1], sizes = [4, 16], strides = [1, 1]} : vector<4x18xbf16> to vector<4x16xbf16>
    %c16_121 = arith.constant 16 : index
    %c64_122 = arith.constant 64 : index
    %109 = vector.load %arg5[%c16_121, %c64_122] : memref<36x256xbf16, #tpu.memory_space<vmem>>, vector<4x16xbf16>
    tpu.vector_store %arg5[%c16_121, %c64_122], %108 {strides = array<i32>} : memref<36x256xbf16, #tpu.memory_space<vmem>>, vector<4x16xbf16>,
    %110 = vector.extract_strided_slice %105 {offsets = [0, 2], sizes = [4, 16], strides = [1, 1]} : vector<4x18xbf16> to vector<4x16xbf16>
    %c20_123 = arith.constant 20 : index
    %c64_124 = arith.constant 64 : index
    %111 = vector.load %arg5[%c20_123, %c64_124] : memref<36x256xbf16, #tpu.memory_space<vmem>>, vector<4x16xbf16>
    tpu.vector_store %arg5[%c20_123, %c64_124], %110 {strides = array<i32>} : memref<36x256xbf16, #tpu.memory_space<vmem>>, vector<4x16xbf16>,
    %c0_125 = arith.constant 0 : index
    %c0_126 = arith.constant 0 : index
    %c6 = arith.constant 6 : index
    %c0_127 = arith.constant 0 : index
    %112 = vector.load %arg1[%c0_125, %c0_126, %c6, %c0_127] : memref<1x4x18x18xbf16, #tpu.memory_space<vmem>>, vector<1x4x1x18xbf16>
    %113 = vector.shape_cast %112 : vector<1x4x1x18xbf16> to vector<4x18xbf16>
    %114 = vector.extract_strided_slice %113 {offsets = [0, 0], sizes = [4, 16], strides = [1, 1]} : vector<4x18xbf16> to vector<4x16xbf16>
    %c24_128 = arith.constant 24 : index
    %c64_129 = arith.constant 64 : index
    %115 = vector.load %arg5[%c24_128, %c64_129] : memref<36x256xbf16, #tpu.memory_space<vmem>>, vector<4x16xbf16>
    tpu.vector_store %arg5[%c24_128, %c64_129], %114 {strides = array<i32>} : memref<36x256xbf16, #tpu.memory_space<vmem>>, vector<4x16xbf16>,
    %116 = vector.extract_strided_slice %113 {offsets = [0, 1], sizes = [4, 16], strides = [1, 1]} : vector<4x18xbf16> to vector<4x16xbf16>
    %c28_130 = arith.constant 28 : index
    %c64_131 = arith.constant 64 : index
    %117 = vector.load %arg5[%c28_130, %c64_131] : memref<36x256xbf16, #tpu.memory_space<vmem>>, vector<4x16xbf16>
    tpu.vector_store %arg5[%c28_130, %c64_131], %116 {strides = array<i32>} : memref<36x256xbf16, #tpu.memory_space<vmem>>, vector<4x16xbf16>,
    %118 = vector.extract_strided_slice %113 {offsets = [0, 2], sizes = [4, 16], strides = [1, 1]} : vector<4x18xbf16> to vector<4x16xbf16>
    %c32_132 = arith.constant 32 : index
    %c64_133 = arith.constant 64 : index
    %119 = vector.load %arg5[%c32_132, %c64_133] : memref<36x256xbf16, #tpu.memory_space<vmem>>, vector<4x16xbf16>
    tpu.vector_store %arg5[%c32_132, %c64_133], %118 {strides = array<i32>} : memref<36x256xbf16, #tpu.memory_space<vmem>>, vector<4x16xbf16>,
    %c0_134 = arith.constant 0 : index
    %c0_135 = arith.constant 0 : index
    %c5_136 = arith.constant 5 : index
    %c0_137 = arith.constant 0 : index
    %120 = vector.load %arg1[%c0_134, %c0_135, %c5_136, %c0_137] : memref<1x4x18x18xbf16, #tpu.memory_space<vmem>>, vector<1x4x1x18xbf16>
    %121 = vector.shape_cast %120 : vector<1x4x1x18xbf16> to vector<4x18xbf16>
    %122 = vector.extract_strided_slice %121 {offsets = [0, 0], sizes = [4, 16], strides = [1, 1]} : vector<4x18xbf16> to vector<4x16xbf16>
    %c0_138 = arith.constant 0 : index
    %c80 = arith.constant 80 : index
    %123 = vector.load %arg5[%c0_138, %c80] : memref<36x256xbf16, #tpu.memory_space<vmem>>, vector<4x16xbf16>
    tpu.vector_store %arg5[%c0_138, %c80], %122 {strides = array<i32>} : memref<36x256xbf16, #tpu.memory_space<vmem>>, vector<4x16xbf16>,
    %124 = vector.extract_strided_slice %121 {offsets = [0, 1], sizes = [4, 16], strides = [1, 1]} : vector<4x18xbf16> to vector<4x16xbf16>
    %c4_139 = arith.constant 4 : index
    %c80_140 = arith.constant 80 : index
    %125 = vector.load %arg5[%c4_139, %c80_140] : memref<36x256xbf16, #tpu.memory_space<vmem>>, vector<4x16xbf16>
    tpu.vector_store %arg5[%c4_139, %c80_140], %124 {strides = array<i32>} : memref<36x256xbf16, #tpu.memory_space<vmem>>, vector<4x16xbf16>,
    %126 = vector.extract_strided_slice %121 {offsets = [0, 2], sizes = [4, 16], strides = [1, 1]} : vector<4x18xbf16> to vector<4x16xbf16>
    %c8_141 = arith.constant 8 : index
    %c80_142 = arith.constant 80 : index
    %127 = vector.load %arg5[%c8_141, %c80_142] : memref<36x256xbf16, #tpu.memory_space<vmem>>, vector<4x16xbf16>
    tpu.vector_store %arg5[%c8_141, %c80_142], %126 {strides = array<i32>} : memref<36x256xbf16, #tpu.memory_space<vmem>>, vector<4x16xbf16>,
    %c0_143 = arith.constant 0 : index
    %c0_144 = arith.constant 0 : index
    %c6_145 = arith.constant 6 : index
    %c0_146 = arith.constant 0 : index
    %128 = vector.load %arg1[%c0_143, %c0_144, %c6_145, %c0_146] : memref<1x4x18x18xbf16, #tpu.memory_space<vmem>>, vector<1x4x1x18xbf16>
    %129 = vector.shape_cast %128 : vector<1x4x1x18xbf16> to vector<4x18xbf16>
    %130 = vector.extract_strided_slice %129 {offsets = [0, 0], sizes = [4, 16], strides = [1, 1]} : vector<4x18xbf16> to vector<4x16xbf16>
    %c12_147 = arith.constant 12 : index
    %c80_148 = arith.constant 80 : index
    %131 = vector.load %arg5[%c12_147, %c80_148] : memref<36x256xbf16, #tpu.memory_space<vmem>>, vector<4x16xbf16>
    tpu.vector_store %arg5[%c12_147, %c80_148], %130 {strides = array<i32>} : memref<36x256xbf16, #tpu.memory_space<vmem>>, vector<4x16xbf16>,
    %132 = vector.extract_strided_slice %129 {offsets = [0, 1], sizes = [4, 16], strides = [1, 1]} : vector<4x18xbf16> to vector<4x16xbf16>
    %c16_149 = arith.constant 16 : index
    %c80_150 = arith.constant 80 : index
    %133 = vector.load %arg5[%c16_149, %c80_150] : memref<36x256xbf16, #tpu.memory_space<vmem>>, vector<4x16xbf16>
    tpu.vector_store %arg5[%c16_149, %c80_150], %132 {strides = array<i32>} : memref<36x256xbf16, #tpu.memory_space<vmem>>, vector<4x16xbf16>,
    %134 = vector.extract_strided_slice %129 {offsets = [0, 2], sizes = [4, 16], strides = [1, 1]} : vector<4x18xbf16> to vector<4x16xbf16>
    %c20_151 = arith.constant 20 : index
    %c80_152 = arith.constant 80 : index
    %135 = vector.load %arg5[%c20_151, %c80_152] : memref<36x256xbf16, #tpu.memory_space<vmem>>, vector<4x16xbf16>
    tpu.vector_store %arg5[%c20_151, %c80_152], %134 {strides = array<i32>} : memref<36x256xbf16, #tpu.memory_space<vmem>>, vector<4x16xbf16>,
    %c0_153 = arith.constant 0 : index
    %c0_154 = arith.constant 0 : index
    %c7 = arith.constant 7 : index
    %c0_155 = arith.constant 0 : index
    %136 = vector.load %arg1[%c0_153, %c0_154, %c7, %c0_155] : memref<1x4x18x18xbf16, #tpu.memory_space<vmem>>, vector<1x4x1x18xbf16>
    %137 = vector.shape_cast %136 : vector<1x4x1x18xbf16> to vector<4x18xbf16>
    %138 = vector.extract_strided_slice %137 {offsets = [0, 0], sizes = [4, 16], strides = [1, 1]} : vector<4x18xbf16> to vector<4x16xbf16>
    %c24_156 = arith.constant 24 : index
    %c80_157 = arith.constant 80 : index
    %139 = vector.load %arg5[%c24_156, %c80_157] : memref<36x256xbf16, #tpu.memory_space<vmem>>, vector<4x16xbf16>
    tpu.vector_store %arg5[%c24_156, %c80_157], %138 {strides = array<i32>} : memref<36x256xbf16, #tpu.memory_space<vmem>>, vector<4x16xbf16>,
    %140 = vector.extract_strided_slice %137 {offsets = [0, 1], sizes = [4, 16], strides = [1, 1]} : vector<4x18xbf16> to vector<4x16xbf16>
    %c28_158 = arith.constant 28 : index
    %c80_159 = arith.constant 80 : index
    %141 = vector.load %arg5[%c28_158, %c80_159] : memref<36x256xbf16, #tpu.memory_space<vmem>>, vector<4x16xbf16>
    tpu.vector_store %arg5[%c28_158, %c80_159], %140 {strides = array<i32>} : memref<36x256xbf16, #tpu.memory_space<vmem>>, vector<4x16xbf16>,
    %142 = vector.extract_strided_slice %137 {offsets = [0, 2], sizes = [4, 16], strides = [1, 1]} : vector<4x18xbf16> to vector<4x16xbf16>
    %c32_160 = arith.constant 32 : index
    %c80_161 = arith.constant 80 : index
    %143 = vector.load %arg5[%c32_160, %c80_161] : memref<36x256xbf16, #tpu.memory_space<vmem>>, vector<4x16xbf16>
    tpu.vector_store %arg5[%c32_160, %c80_161], %142 {strides = array<i32>} : memref<36x256xbf16, #tpu.memory_space<vmem>>, vector<4x16xbf16>,
    %c0_162 = arith.constant 0 : index
    %c0_163 = arith.constant 0 : index
    %c6_164 = arith.constant 6 : index
    %c0_165 = arith.constant 0 : index
    %144 = vector.load %arg1[%c0_162, %c0_163, %c6_164, %c0_165] : memref<1x4x18x18xbf16, #tpu.memory_space<vmem>>, vector<1x4x1x18xbf16>
    %145 = vector.shape_cast %144 : vector<1x4x1x18xbf16> to vector<4x18xbf16>
    %146 = vector.extract_strided_slice %145 {offsets = [0, 0], sizes = [4, 16], strides = [1, 1]} : vector<4x18xbf16> to vector<4x16xbf16>
    %c0_166 = arith.constant 0 : index
    %c96 = arith.constant 96 : index
    %147 = vector.load %arg5[%c0_166, %c96] : memref<36x256xbf16, #tpu.memory_space<vmem>>, vector<4x16xbf16>
    tpu.vector_store %arg5[%c0_166, %c96], %146 {strides = array<i32>} : memref<36x256xbf16, #tpu.memory_space<vmem>>, vector<4x16xbf16>,
    %148 = vector.extract_strided_slice %145 {offsets = [0, 1], sizes = [4, 16], strides = [1, 1]} : vector<4x18xbf16> to vector<4x16xbf16>
    %c4_167 = arith.constant 4 : index
    %c96_168 = arith.constant 96 : index
    %149 = vector.load %arg5[%c4_167, %c96_168] : memref<36x256xbf16, #tpu.memory_space<vmem>>, vector<4x16xbf16>
    tpu.vector_store %arg5[%c4_167, %c96_168], %148 {strides = array<i32>} : memref<36x256xbf16, #tpu.memory_space<vmem>>, vector<4x16xbf16>,
    %150 = vector.extract_strided_slice %145 {offsets = [0, 2], sizes = [4, 16], strides = [1, 1]} : vector<4x18xbf16> to vector<4x16xbf16>
    %c8_169 = arith.constant 8 : index
    %c96_170 = arith.constant 96 : index
    %151 = vector.load %arg5[%c8_169, %c96_170] : memref<36x256xbf16, #tpu.memory_space<vmem>>, vector<4x16xbf16>
    tpu.vector_store %arg5[%c8_169, %c96_170], %150 {strides = array<i32>} : memref<36x256xbf16, #tpu.memory_space<vmem>>, vector<4x16xbf16>,
    %c0_171 = arith.constant 0 : index
    %c0_172 = arith.constant 0 : index
    %c7_173 = arith.constant 7 : index
    %c0_174 = arith.constant 0 : index
    %152 = vector.load %arg1[%c0_171, %c0_172, %c7_173, %c0_174] : memref<1x4x18x18xbf16, #tpu.memory_space<vmem>>, vector<1x4x1x18xbf16>
    %153 = vector.shape_cast %152 : vector<1x4x1x18xbf16> to vector<4x18xbf16>
    %154 = vector.extract_strided_slice %153 {offsets = [0, 0], sizes = [4, 16], strides = [1, 1]} : vector<4x18xbf16> to vector<4x16xbf16>
    %c12_175 = arith.constant 12 : index
    %c96_176 = arith.constant 96 : index
    %155 = vector.load %arg5[%c12_175, %c96_176] : memref<36x256xbf16, #tpu.memory_space<vmem>>, vector<4x16xbf16>
    tpu.vector_store %arg5[%c12_175, %c96_176], %154 {strides = array<i32>} : memref<36x256xbf16, #tpu.memory_space<vmem>>, vector<4x16xbf16>,
    %156 = vector.extract_strided_slice %153 {offsets = [0, 1], sizes = [4, 16], strides = [1, 1]} : vector<4x18xbf16> to vector<4x16xbf16>
    %c16_177 = arith.constant 16 : index
    %c96_178 = arith.constant 96 : index
    %157 = vector.load %arg5[%c16_177, %c96_178] : memref<36x256xbf16, #tpu.memory_space<vmem>>, vector<4x16xbf16>
    tpu.vector_store %arg5[%c16_177, %c96_178], %156 {strides = array<i32>} : memref<36x256xbf16, #tpu.memory_space<vmem>>, vector<4x16xbf16>,
    %158 = vector.extract_strided_slice %153 {offsets = [0, 2], sizes = [4, 16], strides = [1, 1]} : vector<4x18xbf16> to vector<4x16xbf16>
    %c20_179 = arith.constant 20 : index
    %c96_180 = arith.constant 96 : index
    %159 = vector.load %arg5[%c20_179, %c96_180] : memref<36x256xbf16, #tpu.memory_space<vmem>>, vector<4x16xbf16>
    tpu.vector_store %arg5[%c20_179, %c96_180], %158 {strides = array<i32>} : memref<36x256xbf16, #tpu.memory_space<vmem>>, vector<4x16xbf16>,
    %c0_181 = arith.constant 0 : index
    %c0_182 = arith.constant 0 : index
    %c8_183 = arith.constant 8 : index
    %c0_184 = arith.constant 0 : index
    %160 = vector.load %arg1[%c0_181, %c0_182, %c8_183, %c0_184] : memref<1x4x18x18xbf16, #tpu.memory_space<vmem>>, vector<1x4x1x18xbf16>
    %161 = vector.shape_cast %160 : vector<1x4x1x18xbf16> to vector<4x18xbf16>
    %162 = vector.extract_strided_slice %161 {offsets = [0, 0], sizes = [4, 16], strides = [1, 1]} : vector<4x18xbf16> to vector<4x16xbf16>
    %c24_185 = arith.constant 24 : index
    %c96_186 = arith.constant 96 : index
    %163 = vector.load %arg5[%c24_185, %c96_186] : memref<36x256xbf16, #tpu.memory_space<vmem>>, vector<4x16xbf16>
    tpu.vector_store %arg5[%c24_185, %c96_186], %162 {strides = array<i32>} : memref<36x256xbf16, #tpu.memory_space<vmem>>, vector<4x16xbf16>,
    %164 = vector.extract_strided_slice %161 {offsets = [0, 1], sizes = [4, 16], strides = [1, 1]} : vector<4x18xbf16> to vector<4x16xbf16>
    %c28_187 = arith.constant 28 : index
    %c96_188 = arith.constant 96 : index
    %165 = vector.load %arg5[%c28_187, %c96_188] : memref<36x256xbf16, #tpu.memory_space<vmem>>, vector<4x16xbf16>
    tpu.vector_store %arg5[%c28_187, %c96_188], %164 {strides = array<i32>} : memref<36x256xbf16, #tpu.memory_space<vmem>>, vector<4x16xbf16>,
    %166 = vector.extract_strided_slice %161 {offsets = [0, 2], sizes = [4, 16], strides = [1, 1]} : vector<4x18xbf16> to vector<4x16xbf16>
    %c32_189 = arith.constant 32 : index
    %c96_190 = arith.constant 96 : index
    %167 = vector.load %arg5[%c32_189, %c96_190] : memref<36x256xbf16, #tpu.memory_space<vmem>>, vector<4x16xbf16>
    tpu.vector_store %arg5[%c32_189, %c96_190], %166 {strides = array<i32>} : memref<36x256xbf16, #tpu.memory_space<vmem>>, vector<4x16xbf16>,
    %c0_191 = arith.constant 0 : index
    %c0_192 = arith.constant 0 : index
    %c7_193 = arith.constant 7 : index
    %c0_194 = arith.constant 0 : index
    %168 = vector.load %arg1[%c0_191, %c0_192, %c7_193, %c0_194] : memref<1x4x18x18xbf16, #tpu.memory_space<vmem>>, vector<1x4x1x18xbf16>
    %169 = vector.shape_cast %168 : vector<1x4x1x18xbf16> to vector<4x18xbf16>
    %170 = vector.extract_strided_slice %169 {offsets = [0, 0], sizes = [4, 16], strides = [1, 1]} : vector<4x18xbf16> to vector<4x16xbf16>
    %c0_195 = arith.constant 0 : index
    %c112 = arith.constant 112 : index
    %171 = vector.load %arg5[%c0_195, %c112] : memref<36x256xbf16, #tpu.memory_space<vmem>>, vector<4x16xbf16>
    tpu.vector_store %arg5[%c0_195, %c112], %170 {strides = array<i32>} : memref<36x256xbf16, #tpu.memory_space<vmem>>, vector<4x16xbf16>,
    %172 = vector.extract_strided_slice %169 {offsets = [0, 1], sizes = [4, 16], strides = [1, 1]} : vector<4x18xbf16> to vector<4x16xbf16>
    %c4_196 = arith.constant 4 : index
    %c112_197 = arith.constant 112 : index
    %173 = vector.load %arg5[%c4_196, %c112_197] : memref<36x256xbf16, #tpu.memory_space<vmem>>, vector<4x16xbf16>
    tpu.vector_store %arg5[%c4_196, %c112_197], %172 {strides = array<i32>} : memref<36x256xbf16, #tpu.memory_space<vmem>>, vector<4x16xbf16>,
    %174 = vector.extract_strided_slice %169 {offsets = [0, 2], sizes = [4, 16], strides = [1, 1]} : vector<4x18xbf16> to vector<4x16xbf16>
    %c8_198 = arith.constant 8 : index
    %c112_199 = arith.constant 112 : index
    %175 = vector.load %arg5[%c8_198, %c112_199] : memref<36x256xbf16, #tpu.memory_space<vmem>>, vector<4x16xbf16>
    tpu.vector_store %arg5[%c8_198, %c112_199], %174 {strides = array<i32>} : memref<36x256xbf16, #tpu.memory_space<vmem>>, vector<4x16xbf16>,
    %c0_200 = arith.constant 0 : index
    %c0_201 = arith.constant 0 : index
    %c8_202 = arith.constant 8 : index
    %c0_203 = arith.constant 0 : index
    %176 = vector.load %arg1[%c0_200, %c0_201, %c8_202, %c0_203] : memref<1x4x18x18xbf16, #tpu.memory_space<vmem>>, vector<1x4x1x18xbf16>
    %177 = vector.shape_cast %176 : vector<1x4x1x18xbf16> to vector<4x18xbf16>
    %178 = vector.extract_strided_slice %177 {offsets = [0, 0], sizes = [4, 16], strides = [1, 1]} : vector<4x18xbf16> to vector<4x16xbf16>
    %c12_204 = arith.constant 12 : index
    %c112_205 = arith.constant 112 : index
    %179 = vector.load %arg5[%c12_204, %c112_205] : memref<36x256xbf16, #tpu.memory_space<vmem>>, vector<4x16xbf16>
    tpu.vector_store %arg5[%c12_204, %c112_205], %178 {strides = array<i32>} : memref<36x256xbf16, #tpu.memory_space<vmem>>, vector<4x16xbf16>,
    %180 = vector.extract_strided_slice %177 {offsets = [0, 1], sizes = [4, 16], strides = [1, 1]} : vector<4x18xbf16> to vector<4x16xbf16>
    %c16_206 = arith.constant 16 : index
    %c112_207 = arith.constant 112 : index
    %181 = vector.load %arg5[%c16_206, %c112_207] : memref<36x256xbf16, #tpu.memory_space<vmem>>, vector<4x16xbf16>
    tpu.vector_store %arg5[%c16_206, %c112_207], %180 {strides = array<i32>} : memref<36x256xbf16, #tpu.memory_space<vmem>>, vector<4x16xbf16>,
    %182 = vector.extract_strided_slice %177 {offsets = [0, 2], sizes = [4, 16], strides = [1, 1]} : vector<4x18xbf16> to vector<4x16xbf16>
    %c20_208 = arith.constant 20 : index
    %c112_209 = arith.constant 112 : index
    %183 = vector.load %arg5[%c20_208, %c112_209] : memref<36x256xbf16, #tpu.memory_space<vmem>>, vector<4x16xbf16>
    tpu.vector_store %arg5[%c20_208, %c112_209], %182 {strides = array<i32>} : memref<36x256xbf16, #tpu.memory_space<vmem>>, vector<4x16xbf16>,
    %c0_210 = arith.constant 0 : index
    %c0_211 = arith.constant 0 : index
    %c9 = arith.constant 9 : index
    %c0_212 = arith.constant 0 : index
    %184 = vector.load %arg1[%c0_210, %c0_211, %c9, %c0_212] : memref<1x4x18x18xbf16, #tpu.memory_space<vmem>>, vector<1x4x1x18xbf16>
    %185 = vector.shape_cast %184 : vector<1x4x1x18xbf16> to vector<4x18xbf16>
    %186 = vector.extract_strided_slice %185 {offsets = [0, 0], sizes = [4, 16], strides = [1, 1]} : vector<4x18xbf16> to vector<4x16xbf16>
    %c24_213 = arith.constant 24 : index
    %c112_214 = arith.constant 112 : index
    %187 = vector.load %arg5[%c24_213, %c112_214] : memref<36x256xbf16, #tpu.memory_space<vmem>>, vector<4x16xbf16>
    tpu.vector_store %arg5[%c24_213, %c112_214], %186 {strides = array<i32>} : memref<36x256xbf16, #tpu.memory_space<vmem>>, vector<4x16xbf16>,
    %188 = vector.extract_strided_slice %185 {offsets = [0, 1], sizes = [4, 16], strides = [1, 1]} : vector<4x18xbf16> to vector<4x16xbf16>
    %c28_215 = arith.constant 28 : index
    %c112_216 = arith.constant 112 : index
    %189 = vector.load %arg5[%c28_215, %c112_216] : memref<36x256xbf16, #tpu.memory_space<vmem>>, vector<4x16xbf16>
    tpu.vector_store %arg5[%c28_215, %c112_216], %188 {strides = array<i32>} : memref<36x256xbf16, #tpu.memory_space<vmem>>, vector<4x16xbf16>,
    %190 = vector.extract_strided_slice %185 {offsets = [0, 2], sizes = [4, 16], strides = [1, 1]} : vector<4x18xbf16> to vector<4x16xbf16>
    %c32_217 = arith.constant 32 : index
    %c112_218 = arith.constant 112 : index
    %191 = vector.load %arg5[%c32_217, %c112_218] : memref<36x256xbf16, #tpu.memory_space<vmem>>, vector<4x16xbf16>
    tpu.vector_store %arg5[%c32_217, %c112_218], %190 {strides = array<i32>} : memref<36x256xbf16, #tpu.memory_space<vmem>>, vector<4x16xbf16>,
    %c0_219 = arith.constant 0 : index
    %c0_220 = arith.constant 0 : index
    %c8_221 = arith.constant 8 : index
    %c0_222 = arith.constant 0 : index
    %192 = vector.load %arg1[%c0_219, %c0_220, %c8_221, %c0_222] : memref<1x4x18x18xbf16, #tpu.memory_space<vmem>>, vector<1x4x1x18xbf16>
    %193 = vector.shape_cast %192 : vector<1x4x1x18xbf16> to vector<4x18xbf16>
    %194 = vector.extract_strided_slice %193 {offsets = [0, 0], sizes = [4, 16], strides = [1, 1]} : vector<4x18xbf16> to vector<4x16xbf16>
    %c0_223 = arith.constant 0 : index
    %c128 = arith.constant 128 : index
    %195 = vector.load %arg5[%c0_223, %c128] : memref<36x256xbf16, #tpu.memory_space<vmem>>, vector<4x16xbf16>
    tpu.vector_store %arg5[%c0_223, %c128], %194 {strides = array<i32>} : memref<36x256xbf16, #tpu.memory_space<vmem>>, vector<4x16xbf16>,
    %196 = vector.extract_strided_slice %193 {offsets = [0, 1], sizes = [4, 16], strides = [1, 1]} : vector<4x18xbf16> to vector<4x16xbf16>
    %c4_224 = arith.constant 4 : index
    %c128_225 = arith.constant 128 : index
    %197 = vector.load %arg5[%c4_224, %c128_225] : memref<36x256xbf16, #tpu.memory_space<vmem>>, vector<4x16xbf16>
    tpu.vector_store %arg5[%c4_224, %c128_225], %196 {strides = array<i32>} : memref<36x256xbf16, #tpu.memory_space<vmem>>, vector<4x16xbf16>,
    %198 = vector.extract_strided_slice %193 {offsets = [0, 2], sizes = [4, 16], strides = [1, 1]} : vector<4x18xbf16> to vector<4x16xbf16>
    %c8_226 = arith.constant 8 : index
    %c128_227 = arith.constant 128 : index
    %199 = vector.load %arg5[%c8_226, %c128_227] : memref<36x256xbf16, #tpu.memory_space<vmem>>, vector<4x16xbf16>
    tpu.vector_store %arg5[%c8_226, %c128_227], %198 {strides = array<i32>} : memref<36x256xbf16, #tpu.memory_space<vmem>>, vector<4x16xbf16>,
    %c0_228 = arith.constant 0 : index
    %c0_229 = arith.constant 0 : index
    %c9_230 = arith.constant 9 : index
    %c0_231 = arith.constant 0 : index
    %200 = vector.load %arg1[%c0_228, %c0_229, %c9_230, %c0_231] : memref<1x4x18x18xbf16, #tpu.memory_space<vmem>>, vector<1x4x1x18xbf16>
    %201 = vector.shape_cast %200 : vector<1x4x1x18xbf16> to vector<4x18xbf16>
    %202 = vector.extract_strided_slice %201 {offsets = [0, 0], sizes = [4, 16], strides = [1, 1]} : vector<4x18xbf16> to vector<4x16xbf16>
    %c12_232 = arith.constant 12 : index
    %c128_233 = arith.constant 128 : index
    %203 = vector.load %arg5[%c12_232, %c128_233] : memref<36x256xbf16, #tpu.memory_space<vmem>>, vector<4x16xbf16>
    tpu.vector_store %arg5[%c12_232, %c128_233], %202 {strides = array<i32>} : memref<36x256xbf16, #tpu.memory_space<vmem>>, vector<4x16xbf16>,
    %204 = vector.extract_strided_slice %201 {offsets = [0, 1], sizes = [4, 16], strides = [1, 1]} : vector<4x18xbf16> to vector<4x16xbf16>
    %c16_234 = arith.constant 16 : index
    %c128_235 = arith.constant 128 : index
    %205 = vector.load %arg5[%c16_234, %c128_235] : memref<36x256xbf16, #tpu.memory_space<vmem>>, vector<4x16xbf16>
    tpu.vector_store %arg5[%c16_234, %c128_235], %204 {strides = array<i32>} : memref<36x256xbf16, #tpu.memory_space<vmem>>, vector<4x16xbf16>,
    %206 = vector.extract_strided_slice %201 {offsets = [0, 2], sizes = [4, 16], strides = [1, 1]} : vector<4x18xbf16> to vector<4x16xbf16>
    %c20_236 = arith.constant 20 : index
    %c128_237 = arith.constant 128 : index
    %207 = vector.load %arg5[%c20_236, %c128_237] : memref<36x256xbf16, #tpu.memory_space<vmem>>, vector<4x16xbf16>
    tpu.vector_store %arg5[%c20_236, %c128_237], %206 {strides = array<i32>} : memref<36x256xbf16, #tpu.memory_space<vmem>>, vector<4x16xbf16>,
    %c0_238 = arith.constant 0 : index
    %c0_239 = arith.constant 0 : index
    %c10 = arith.constant 10 : index
    %c0_240 = arith.constant 0 : index
    %208 = vector.load %arg1[%c0_238, %c0_239, %c10, %c0_240] : memref<1x4x18x18xbf16, #tpu.memory_space<vmem>>, vector<1x4x1x18xbf16>
    %209 = vector.shape_cast %208 : vector<1x4x1x18xbf16> to vector<4x18xbf16>
    %210 = vector.extract_strided_slice %209 {offsets = [0, 0], sizes = [4, 16], strides = [1, 1]} : vector<4x18xbf16> to vector<4x16xbf16>
    %c24_241 = arith.constant 24 : index
    %c128_242 = arith.constant 128 : index
    %211 = vector.load %arg5[%c24_241, %c128_242] : memref<36x256xbf16, #tpu.memory_space<vmem>>, vector<4x16xbf16>
    tpu.vector_store %arg5[%c24_241, %c128_242], %210 {strides = array<i32>} : memref<36x256xbf16, #tpu.memory_space<vmem>>, vector<4x16xbf16>,
    %212 = vector.extract_strided_slice %209 {offsets = [0, 1], sizes = [4, 16], strides = [1, 1]} : vector<4x18xbf16> to vector<4x16xbf16>
    %c28_243 = arith.constant 28 : index
    %c128_244 = arith.constant 128 : index
    %213 = vector.load %arg5[%c28_243, %c128_244] : memref<36x256xbf16, #tpu.memory_space<vmem>>, vector<4x16xbf16>
    tpu.vector_store %arg5[%c28_243, %c128_244], %212 {strides = array<i32>} : memref<36x256xbf16, #tpu.memory_space<vmem>>, vector<4x16xbf16>,
    %214 = vector.extract_strided_slice %209 {offsets = [0, 2], sizes = [4, 16], strides = [1, 1]} : vector<4x18xbf16> to vector<4x16xbf16>
    %c32_245 = arith.constant 32 : index
    %c128_246 = arith.constant 128 : index
    %215 = vector.load %arg5[%c32_245, %c128_246] : memref<36x256xbf16, #tpu.memory_space<vmem>>, vector<4x16xbf16>
    tpu.vector_store %arg5[%c32_245, %c128_246], %214 {strides = array<i32>} : memref<36x256xbf16, #tpu.memory_space<vmem>>, vector<4x16xbf16>,
    %c0_247 = arith.constant 0 : index
    %c0_248 = arith.constant 0 : index
    %c9_249 = arith.constant 9 : index
    %c0_250 = arith.constant 0 : index
    %216 = vector.load %arg1[%c0_247, %c0_248, %c9_249, %c0_250] : memref<1x4x18x18xbf16, #tpu.memory_space<vmem>>, vector<1x4x1x18xbf16>
    %217 = vector.shape_cast %216 : vector<1x4x1x18xbf16> to vector<4x18xbf16>
    %218 = vector.extract_strided_slice %217 {offsets = [0, 0], sizes = [4, 16], strides = [1, 1]} : vector<4x18xbf16> to vector<4x16xbf16>
    %c0_251 = arith.constant 0 : index
    %c144 = arith.constant 144 : index
    %219 = vector.load %arg5[%c0_251, %c144] : memref<36x256xbf16, #tpu.memory_space<vmem>>, vector<4x16xbf16>
    tpu.vector_store %arg5[%c0_251, %c144], %218 {strides = array<i32>} : memref<36x256xbf16, #tpu.memory_space<vmem>>, vector<4x16xbf16>,
    %220 = vector.extract_strided_slice %217 {offsets = [0, 1], sizes = [4, 16], strides = [1, 1]} : vector<4x18xbf16> to vector<4x16xbf16>
    %c4_252 = arith.constant 4 : index
    %c144_253 = arith.constant 144 : index
    %221 = vector.load %arg5[%c4_252, %c144_253] : memref<36x256xbf16, #tpu.memory_space<vmem>>, vector<4x16xbf16>
    tpu.vector_store %arg5[%c4_252, %c144_253], %220 {strides = array<i32>} : memref<36x256xbf16, #tpu.memory_space<vmem>>, vector<4x16xbf16>,
    %222 = vector.extract_strided_slice %217 {offsets = [0, 2], sizes = [4, 16], strides = [1, 1]} : vector<4x18xbf16> to vector<4x16xbf16>
    %c8_254 = arith.constant 8 : index
    %c144_255 = arith.constant 144 : index
    %223 = vector.load %arg5[%c8_254, %c144_255] : memref<36x256xbf16, #tpu.memory_space<vmem>>, vector<4x16xbf16>
    tpu.vector_store %arg5[%c8_254, %c144_255], %222 {strides = array<i32>} : memref<36x256xbf16, #tpu.memory_space<vmem>>, vector<4x16xbf16>,
    %c0_256 = arith.constant 0 : index
    %c0_257 = arith.constant 0 : index
    %c10_258 = arith.constant 10 : index
    %c0_259 = arith.constant 0 : index
    %224 = vector.load %arg1[%c0_256, %c0_257, %c10_258, %c0_259] : memref<1x4x18x18xbf16, #tpu.memory_space<vmem>>, vector<1x4x1x18xbf16>
    %225 = vector.shape_cast %224 : vector<1x4x1x18xbf16> to vector<4x18xbf16>
    %226 = vector.extract_strided_slice %225 {offsets = [0, 0], sizes = [4, 16], strides = [1, 1]} : vector<4x18xbf16> to vector<4x16xbf16>
    %c12_260 = arith.constant 12 : index
    %c144_261 = arith.constant 144 : index
    %227 = vector.load %arg5[%c12_260, %c144_261] : memref<36x256xbf16, #tpu.memory_space<vmem>>, vector<4x16xbf16>
    tpu.vector_store %arg5[%c12_260, %c144_261], %226 {strides = array<i32>} : memref<36x256xbf16, #tpu.memory_space<vmem>>, vector<4x16xbf16>,
    %228 = vector.extract_strided_slice %225 {offsets = [0, 1], sizes = [4, 16], strides = [1, 1]} : vector<4x18xbf16> to vector<4x16xbf16>
    %c16_262 = arith.constant 16 : index
    %c144_263 = arith.constant 144 : index
    %229 = vector.load %arg5[%c16_262, %c144_263] : memref<36x256xbf16, #tpu.memory_space<vmem>>, vector<4x16xbf16>
    tpu.vector_store %arg5[%c16_262, %c144_263], %228 {strides = array<i32>} : memref<36x256xbf16, #tpu.memory_space<vmem>>, vector<4x16xbf16>,
    %230 = vector.extract_strided_slice %225 {offsets = [0, 2], sizes = [4, 16], strides = [1, 1]} : vector<4x18xbf16> to vector<4x16xbf16>
    %c20_264 = arith.constant 20 : index
    %c144_265 = arith.constant 144 : index
    %231 = vector.load %arg5[%c20_264, %c144_265] : memref<36x256xbf16, #tpu.memory_space<vmem>>, vector<4x16xbf16>
    tpu.vector_store %arg5[%c20_264, %c144_265], %230 {strides = array<i32>} : memref<36x256xbf16, #tpu.memory_space<vmem>>, vector<4x16xbf16>,
    %c0_266 = arith.constant 0 : index
    %c0_267 = arith.constant 0 : index
    %c11 = arith.constant 11 : index
    %c0_268 = arith.constant 0 : index
    %232 = vector.load %arg1[%c0_266, %c0_267, %c11, %c0_268] : memref<1x4x18x18xbf16, #tpu.memory_space<vmem>>, vector<1x4x1x18xbf16>
    %233 = vector.shape_cast %232 : vector<1x4x1x18xbf16> to vector<4x18xbf16>
    %234 = vector.extract_strided_slice %233 {offsets = [0, 0], sizes = [4, 16], strides = [1, 1]} : vector<4x18xbf16> to vector<4x16xbf16>
    %c24_269 = arith.constant 24 : index
    %c144_270 = arith.constant 144 : index
    %235 = vector.load %arg5[%c24_269, %c144_270] : memref<36x256xbf16, #tpu.memory_space<vmem>>, vector<4x16xbf16>
    tpu.vector_store %arg5[%c24_269, %c144_270], %234 {strides = array<i32>} : memref<36x256xbf16, #tpu.memory_space<vmem>>, vector<4x16xbf16>,
    %236 = vector.extract_strided_slice %233 {offsets = [0, 1], sizes = [4, 16], strides = [1, 1]} : vector<4x18xbf16> to vector<4x16xbf16>
    %c28_271 = arith.constant 28 : index
    %c144_272 = arith.constant 144 : index
    %237 = vector.load %arg5[%c28_271, %c144_272] : memref<36x256xbf16, #tpu.memory_space<vmem>>, vector<4x16xbf16>
    tpu.vector_store %arg5[%c28_271, %c144_272], %236 {strides = array<i32>} : memref<36x256xbf16, #tpu.memory_space<vmem>>, vector<4x16xbf16>,
    %238 = vector.extract_strided_slice %233 {offsets = [0, 2], sizes = [4, 16], strides = [1, 1]} : vector<4x18xbf16> to vector<4x16xbf16>
    %c32_273 = arith.constant 32 : index
    %c144_274 = arith.constant 144 : index
    %239 = vector.load %arg5[%c32_273, %c144_274] : memref<36x256xbf16, #tpu.memory_space<vmem>>, vector<4x16xbf16>
    tpu.vector_store %arg5[%c32_273, %c144_274], %238 {strides = array<i32>} : memref<36x256xbf16, #tpu.memory_space<vmem>>, vector<4x16xbf16>,
    %c0_275 = arith.constant 0 : index
    %c0_276 = arith.constant 0 : index
    %c10_277 = arith.constant 10 : index
    %c0_278 = arith.constant 0 : index
    %240 = vector.load %arg1[%c0_275, %c0_276, %c10_277, %c0_278] : memref<1x4x18x18xbf16, #tpu.memory_space<vmem>>, vector<1x4x1x18xbf16>
    %241 = vector.shape_cast %240 : vector<1x4x1x18xbf16> to vector<4x18xbf16>
    %242 = vector.extract_strided_slice %241 {offsets = [0, 0], sizes = [4, 16], strides = [1, 1]} : vector<4x18xbf16> to vector<4x16xbf16>
    %c0_279 = arith.constant 0 : index
    %c160 = arith.constant 160 : index
    %243 = vector.load %arg5[%c0_279, %c160] : memref<36x256xbf16, #tpu.memory_space<vmem>>, vector<4x16xbf16>
    tpu.vector_store %arg5[%c0_279, %c160], %242 {strides = array<i32>} : memref<36x256xbf16, #tpu.memory_space<vmem>>, vector<4x16xbf16>,
    %244 = vector.extract_strided_slice %241 {offsets = [0, 1], sizes = [4, 16], strides = [1, 1]} : vector<4x18xbf16> to vector<4x16xbf16>
    %c4_280 = arith.constant 4 : index
    %c160_281 = arith.constant 160 : index
    %245 = vector.load %arg5[%c4_280, %c160_281] : memref<36x256xbf16, #tpu.memory_space<vmem>>, vector<4x16xbf16>
    tpu.vector_store %arg5[%c4_280, %c160_281], %244 {strides = array<i32>} : memref<36x256xbf16, #tpu.memory_space<vmem>>, vector<4x16xbf16>,
    %246 = vector.extract_strided_slice %241 {offsets = [0, 2], sizes = [4, 16], strides = [1, 1]} : vector<4x18xbf16> to vector<4x16xbf16>
    %c8_282 = arith.constant 8 : index
    %c160_283 = arith.constant 160 : index
    %247 = vector.load %arg5[%c8_282, %c160_283] : memref<36x256xbf16, #tpu.memory_space<vmem>>, vector<4x16xbf16>
    tpu.vector_store %arg5[%c8_282, %c160_283], %246 {strides = array<i32>} : memref<36x256xbf16, #tpu.memory_space<vmem>>, vector<4x16xbf16>,
    %c0_284 = arith.constant 0 : index
    %c0_285 = arith.constant 0 : index
    %c11_286 = arith.constant 11 : index
    %c0_287 = arith.constant 0 : index
    %248 = vector.load %arg1[%c0_284, %c0_285, %c11_286, %c0_287] : memref<1x4x18x18xbf16, #tpu.memory_space<vmem>>, vector<1x4x1x18xbf16>
    %249 = vector.shape_cast %248 : vector<1x4x1x18xbf16> to vector<4x18xbf16>
    %250 = vector.extract_strided_slice %249 {offsets = [0, 0], sizes = [4, 16], strides = [1, 1]} : vector<4x18xbf16> to vector<4x16xbf16>
    %c12_288 = arith.constant 12 : index
    %c160_289 = arith.constant 160 : index
    %251 = vector.load %arg5[%c12_288, %c160_289] : memref<36x256xbf16, #tpu.memory_space<vmem>>, vector<4x16xbf16>
    tpu.vector_store %arg5[%c12_288, %c160_289], %250 {strides = array<i32>} : memref<36x256xbf16, #tpu.memory_space<vmem>>, vector<4x16xbf16>,
    %252 = vector.extract_strided_slice %249 {offsets = [0, 1], sizes = [4, 16], strides = [1, 1]} : vector<4x18xbf16> to vector<4x16xbf16>
    %c16_290 = arith.constant 16 : index
    %c160_291 = arith.constant 160 : index
    %253 = vector.load %arg5[%c16_290, %c160_291] : memref<36x256xbf16, #tpu.memory_space<vmem>>, vector<4x16xbf16>
    tpu.vector_store %arg5[%c16_290, %c160_291], %252 {strides = array<i32>} : memref<36x256xbf16, #tpu.memory_space<vmem>>, vector<4x16xbf16>,
    %254 = vector.extract_strided_slice %249 {offsets = [0, 2], sizes = [4, 16], strides = [1, 1]} : vector<4x18xbf16> to vector<4x16xbf16>
    %c20_292 = arith.constant 20 : index
    %c160_293 = arith.constant 160 : index
    %255 = vector.load %arg5[%c20_292, %c160_293] : memref<36x256xbf16, #tpu.memory_space<vmem>>, vector<4x16xbf16>
    tpu.vector_store %arg5[%c20_292, %c160_293], %254 {strides = array<i32>} : memref<36x256xbf16, #tpu.memory_space<vmem>>, vector<4x16xbf16>,
    %c0_294 = arith.constant 0 : index
    %c0_295 = arith.constant 0 : index
    %c12_296 = arith.constant 12 : index
    %c0_297 = arith.constant 0 : index
    %256 = vector.load %arg1[%c0_294, %c0_295, %c12_296, %c0_297] : memref<1x4x18x18xbf16, #tpu.memory_space<vmem>>, vector<1x4x1x18xbf16>
    %257 = vector.shape_cast %256 : vector<1x4x1x18xbf16> to vector<4x18xbf16>
    %258 = vector.extract_strided_slice %257 {offsets = [0, 0], sizes = [4, 16], strides = [1, 1]} : vector<4x18xbf16> to vector<4x16xbf16>
    %c24_298 = arith.constant 24 : index
    %c160_299 = arith.constant 160 : index
    %259 = vector.load %arg5[%c24_298, %c160_299] : memref<36x256xbf16, #tpu.memory_space<vmem>>, vector<4x16xbf16>
    tpu.vector_store %arg5[%c24_298, %c160_299], %258 {strides = array<i32>} : memref<36x256xbf16, #tpu.memory_space<vmem>>, vector<4x16xbf16>,
    %260 = vector.extract_strided_slice %257 {offsets = [0, 1], sizes = [4, 16], strides = [1, 1]} : vector<4x18xbf16> to vector<4x16xbf16>
    %c28_300 = arith.constant 28 : index
    %c160_301 = arith.constant 160 : index
    %261 = vector.load %arg5[%c28_300, %c160_301] : memref<36x256xbf16, #tpu.memory_space<vmem>>, vector<4x16xbf16>
    tpu.vector_store %arg5[%c28_300, %c160_301], %260 {strides = array<i32>} : memref<36x256xbf16, #tpu.memory_space<vmem>>, vector<4x16xbf16>,
    %262 = vector.extract_strided_slice %257 {offsets = [0, 2], sizes = [4, 16], strides = [1, 1]} : vector<4x18xbf16> to vector<4x16xbf16>
    %c32_302 = arith.constant 32 : index
    %c160_303 = arith.constant 160 : index
    %263 = vector.load %arg5[%c32_302, %c160_303] : memref<36x256xbf16, #tpu.memory_space<vmem>>, vector<4x16xbf16>
    tpu.vector_store %arg5[%c32_302, %c160_303], %262 {strides = array<i32>} : memref<36x256xbf16, #tpu.memory_space<vmem>>, vector<4x16xbf16>,
    %c0_304 = arith.constant 0 : index
    %c0_305 = arith.constant 0 : index
    %c11_306 = arith.constant 11 : index
    %c0_307 = arith.constant 0 : index
    %264 = vector.load %arg1[%c0_304, %c0_305, %c11_306, %c0_307] : memref<1x4x18x18xbf16, #tpu.memory_space<vmem>>, vector<1x4x1x18xbf16>
    %265 = vector.shape_cast %264 : vector<1x4x1x18xbf16> to vector<4x18xbf16>
    %266 = vector.extract_strided_slice %265 {offsets = [0, 0], sizes = [4, 16], strides = [1, 1]} : vector<4x18xbf16> to vector<4x16xbf16>
    %c0_308 = arith.constant 0 : index
    %c176 = arith.constant 176 : index
    %267 = vector.load %arg5[%c0_308, %c176] : memref<36x256xbf16, #tpu.memory_space<vmem>>, vector<4x16xbf16>
    tpu.vector_store %arg5[%c0_308, %c176], %266 {strides = array<i32>} : memref<36x256xbf16, #tpu.memory_space<vmem>>, vector<4x16xbf16>,
    %268 = vector.extract_strided_slice %265 {offsets = [0, 1], sizes = [4, 16], strides = [1, 1]} : vector<4x18xbf16> to vector<4x16xbf16>
    %c4_309 = arith.constant 4 : index
    %c176_310 = arith.constant 176 : index
    %269 = vector.load %arg5[%c4_309, %c176_310] : memref<36x256xbf16, #tpu.memory_space<vmem>>, vector<4x16xbf16>
    tpu.vector_store %arg5[%c4_309, %c176_310], %268 {strides = array<i32>} : memref<36x256xbf16, #tpu.memory_space<vmem>>, vector<4x16xbf16>,
    %270 = vector.extract_strided_slice %265 {offsets = [0, 2], sizes = [4, 16], strides = [1, 1]} : vector<4x18xbf16> to vector<4x16xbf16>
    %c8_311 = arith.constant 8 : index
    %c176_312 = arith.constant 176 : index
    %271 = vector.load %arg5[%c8_311, %c176_312] : memref<36x256xbf16, #tpu.memory_space<vmem>>, vector<4x16xbf16>
    tpu.vector_store %arg5[%c8_311, %c176_312], %270 {strides = array<i32>} : memref<36x256xbf16, #tpu.memory_space<vmem>>, vector<4x16xbf16>,
    %c0_313 = arith.constant 0 : index
    %c0_314 = arith.constant 0 : index
    %c12_315 = arith.constant 12 : index
    %c0_316 = arith.constant 0 : index
    %272 = vector.load %arg1[%c0_313, %c0_314, %c12_315, %c0_316] : memref<1x4x18x18xbf16, #tpu.memory_space<vmem>>, vector<1x4x1x18xbf16>
    %273 = vector.shape_cast %272 : vector<1x4x1x18xbf16> to vector<4x18xbf16>
    %274 = vector.extract_strided_slice %273 {offsets = [0, 0], sizes = [4, 16], strides = [1, 1]} : vector<4x18xbf16> to vector<4x16xbf16>
    %c12_317 = arith.constant 12 : index
    %c176_318 = arith.constant 176 : index
    %275 = vector.load %arg5[%c12_317, %c176_318] : memref<36x256xbf16, #tpu.memory_space<vmem>>, vector<4x16xbf16>
    tpu.vector_store %arg5[%c12_317, %c176_318], %274 {strides = array<i32>} : memref<36x256xbf16, #tpu.memory_space<vmem>>, vector<4x16xbf16>,
    %276 = vector.extract_strided_slice %273 {offsets = [0, 1], sizes = [4, 16], strides = [1, 1]} : vector<4x18xbf16> to vector<4x16xbf16>
    %c16_319 = arith.constant 16 : index
    %c176_320 = arith.constant 176 : index
    %277 = vector.load %arg5[%c16_319, %c176_320] : memref<36x256xbf16, #tpu.memory_space<vmem>>, vector<4x16xbf16>
    tpu.vector_store %arg5[%c16_319, %c176_320], %276 {strides = array<i32>} : memref<36x256xbf16, #tpu.memory_space<vmem>>, vector<4x16xbf16>,
    %278 = vector.extract_strided_slice %273 {offsets = [0, 2], sizes = [4, 16], strides = [1, 1]} : vector<4x18xbf16> to vector<4x16xbf16>
    %c20_321 = arith.constant 20 : index
    %c176_322 = arith.constant 176 : index
    %279 = vector.load %arg5[%c20_321, %c176_322] : memref<36x256xbf16, #tpu.memory_space<vmem>>, vector<4x16xbf16>
    tpu.vector_store %arg5[%c20_321, %c176_322], %278 {strides = array<i32>} : memref<36x256xbf16, #tpu.memory_space<vmem>>, vector<4x16xbf16>,
    %c0_323 = arith.constant 0 : index
    %c0_324 = arith.constant 0 : index
    %c13 = arith.constant 13 : index
    %c0_325 = arith.constant 0 : index
    %280 = vector.load %arg1[%c0_323, %c0_324, %c13, %c0_325] : memref<1x4x18x18xbf16, #tpu.memory_space<vmem>>, vector<1x4x1x18xbf16>
    %281 = vector.shape_cast %280 : vector<1x4x1x18xbf16> to vector<4x18xbf16>
    %282 = vector.extract_strided_slice %281 {offsets = [0, 0], sizes = [4, 16], strides = [1, 1]} : vector<4x18xbf16> to vector<4x16xbf16>
    %c24_326 = arith.constant 24 : index
    %c176_327 = arith.constant 176 : index
    %283 = vector.load %arg5[%c24_326, %c176_327] : memref<36x256xbf16, #tpu.memory_space<vmem>>, vector<4x16xbf16>
    tpu.vector_store %arg5[%c24_326, %c176_327], %282 {strides = array<i32>} : memref<36x256xbf16, #tpu.memory_space<vmem>>, vector<4x16xbf16>,
    %284 = vector.extract_strided_slice %281 {offsets = [0, 1], sizes = [4, 16], strides = [1, 1]} : vector<4x18xbf16> to vector<4x16xbf16>
    %c28_328 = arith.constant 28 : index
    %c176_329 = arith.constant 176 : index
    %285 = vector.load %arg5[%c28_328, %c176_329] : memref<36x256xbf16, #tpu.memory_space<vmem>>, vector<4x16xbf16>
    tpu.vector_store %arg5[%c28_328, %c176_329], %284 {strides = array<i32>} : memref<36x256xbf16, #tpu.memory_space<vmem>>, vector<4x16xbf16>,
    %286 = vector.extract_strided_slice %281 {offsets = [0, 2], sizes = [4, 16], strides = [1, 1]} : vector<4x18xbf16> to vector<4x16xbf16>
    %c32_330 = arith.constant 32 : index
    %c176_331 = arith.constant 176 : index
    %287 = vector.load %arg5[%c32_330, %c176_331] : memref<36x256xbf16, #tpu.memory_space<vmem>>, vector<4x16xbf16>
    tpu.vector_store %arg5[%c32_330, %c176_331], %286 {strides = array<i32>} : memref<36x256xbf16, #tpu.memory_space<vmem>>, vector<4x16xbf16>,
    %c0_332 = arith.constant 0 : index
    %c0_333 = arith.constant 0 : index
    %c12_334 = arith.constant 12 : index
    %c0_335 = arith.constant 0 : index
    %288 = vector.load %arg1[%c0_332, %c0_333, %c12_334, %c0_335] : memref<1x4x18x18xbf16, #tpu.memory_space<vmem>>, vector<1x4x1x18xbf16>
    %289 = vector.shape_cast %288 : vector<1x4x1x18xbf16> to vector<4x18xbf16>
    %290 = vector.extract_strided_slice %289 {offsets = [0, 0], sizes = [4, 16], strides = [1, 1]} : vector<4x18xbf16> to vector<4x16xbf16>
    %c0_336 = arith.constant 0 : index
    %c192 = arith.constant 192 : index
    %291 = vector.load %arg5[%c0_336, %c192] : memref<36x256xbf16, #tpu.memory_space<vmem>>, vector<4x16xbf16>
    tpu.vector_store %arg5[%c0_336, %c192], %290 {strides = array<i32>} : memref<36x256xbf16, #tpu.memory_space<vmem>>, vector<4x16xbf16>,
    %292 = vector.extract_strided_slice %289 {offsets = [0, 1], sizes = [4, 16], strides = [1, 1]} : vector<4x18xbf16> to vector<4x16xbf16>
    %c4_337 = arith.constant 4 : index
    %c192_338 = arith.constant 192 : index
    %293 = vector.load %arg5[%c4_337, %c192_338] : memref<36x256xbf16, #tpu.memory_space<vmem>>, vector<4x16xbf16>
    tpu.vector_store %arg5[%c4_337, %c192_338], %292 {strides = array<i32>} : memref<36x256xbf16, #tpu.memory_space<vmem>>, vector<4x16xbf16>,
    %294 = vector.extract_strided_slice %289 {offsets = [0, 2], sizes = [4, 16], strides = [1, 1]} : vector<4x18xbf16> to vector<4x16xbf16>
    %c8_339 = arith.constant 8 : index
    %c192_340 = arith.constant 192 : index
    %295 = vector.load %arg5[%c8_339, %c192_340] : memref<36x256xbf16, #tpu.memory_space<vmem>>, vector<4x16xbf16>
    tpu.vector_store %arg5[%c8_339, %c192_340], %294 {strides = array<i32>} : memref<36x256xbf16, #tpu.memory_space<vmem>>, vector<4x16xbf16>,
    %c0_341 = arith.constant 0 : index
    %c0_342 = arith.constant 0 : index
    %c13_343 = arith.constant 13 : index
    %c0_344 = arith.constant 0 : index
    %296 = vector.load %arg1[%c0_341, %c0_342, %c13_343, %c0_344] : memref<1x4x18x18xbf16, #tpu.memory_space<vmem>>, vector<1x4x1x18xbf16>
    %297 = vector.shape_cast %296 : vector<1x4x1x18xbf16> to vector<4x18xbf16>
    %298 = vector.extract_strided_slice %297 {offsets = [0, 0], sizes = [4, 16], strides = [1, 1]} : vector<4x18xbf16> to vector<4x16xbf16>
    %c12_345 = arith.constant 12 : index
    %c192_346 = arith.constant 192 : index
    %299 = vector.load %arg5[%c12_345, %c192_346] : memref<36x256xbf16, #tpu.memory_space<vmem>>, vector<4x16xbf16>
    tpu.vector_store %arg5[%c12_345, %c192_346], %298 {strides = array<i32>} : memref<36x256xbf16, #tpu.memory_space<vmem>>, vector<4x16xbf16>,
    %300 = vector.extract_strided_slice %297 {offsets = [0, 1], sizes = [4, 16], strides = [1, 1]} : vector<4x18xbf16> to vector<4x16xbf16>
    %c16_347 = arith.constant 16 : index
    %c192_348 = arith.constant 192 : index
    %301 = vector.load %arg5[%c16_347, %c192_348] : memref<36x256xbf16, #tpu.memory_space<vmem>>, vector<4x16xbf16>
    tpu.vector_store %arg5[%c16_347, %c192_348], %300 {strides = array<i32>} : memref<36x256xbf16, #tpu.memory_space<vmem>>, vector<4x16xbf16>,
    %302 = vector.extract_strided_slice %297 {offsets = [0, 2], sizes = [4, 16], strides = [1, 1]} : vector<4x18xbf16> to vector<4x16xbf16>
    %c20_349 = arith.constant 20 : index
    %c192_350 = arith.constant 192 : index
    %303 = vector.load %arg5[%c20_349, %c192_350] : memref<36x256xbf16, #tpu.memory_space<vmem>>, vector<4x16xbf16>
    tpu.vector_store %arg5[%c20_349, %c192_350], %302 {strides = array<i32>} : memref<36x256xbf16, #tpu.memory_space<vmem>>, vector<4x16xbf16>,
    %c0_351 = arith.constant 0 : index
    %c0_352 = arith.constant 0 : index
    %c14 = arith.constant 14 : index
    %c0_353 = arith.constant 0 : index
    %304 = vector.load %arg1[%c0_351, %c0_352, %c14, %c0_353] : memref<1x4x18x18xbf16, #tpu.memory_space<vmem>>, vector<1x4x1x18xbf16>
    %305 = vector.shape_cast %304 : vector<1x4x1x18xbf16> to vector<4x18xbf16>
    %306 = vector.extract_strided_slice %305 {offsets = [0, 0], sizes = [4, 16], strides = [1, 1]} : vector<4x18xbf16> to vector<4x16xbf16>
    %c24_354 = arith.constant 24 : index
    %c192_355 = arith.constant 192 : index
    %307 = vector.load %arg5[%c24_354, %c192_355] : memref<36x256xbf16, #tpu.memory_space<vmem>>, vector<4x16xbf16>
    tpu.vector_store %arg5[%c24_354, %c192_355], %306 {strides = array<i32>} : memref<36x256xbf16, #tpu.memory_space<vmem>>, vector<4x16xbf16>,
    %308 = vector.extract_strided_slice %305 {offsets = [0, 1], sizes = [4, 16], strides = [1, 1]} : vector<4x18xbf16> to vector<4x16xbf16>
    %c28_356 = arith.constant 28 : index
    %c192_357 = arith.constant 192 : index
    %309 = vector.load %arg5[%c28_356, %c192_357] : memref<36x256xbf16, #tpu.memory_space<vmem>>, vector<4x16xbf16>
    tpu.vector_store %arg5[%c28_356, %c192_357], %308 {strides = array<i32>} : memref<36x256xbf16, #tpu.memory_space<vmem>>, vector<4x16xbf16>,
    %310 = vector.extract_strided_slice %305 {offsets = [0, 2], sizes = [4, 16], strides = [1, 1]} : vector<4x18xbf16> to vector<4x16xbf16>
    %c32_358 = arith.constant 32 : index
    %c192_359 = arith.constant 192 : index
    %311 = vector.load %arg5[%c32_358, %c192_359] : memref<36x256xbf16, #tpu.memory_space<vmem>>, vector<4x16xbf16>
    tpu.vector_store %arg5[%c32_358, %c192_359], %310 {strides = array<i32>} : memref<36x256xbf16, #tpu.memory_space<vmem>>, vector<4x16xbf16>,
    %c0_360 = arith.constant 0 : index
    %c0_361 = arith.constant 0 : index
    %c13_362 = arith.constant 13 : index
    %c0_363 = arith.constant 0 : index
    %312 = vector.load %arg1[%c0_360, %c0_361, %c13_362, %c0_363] : memref<1x4x18x18xbf16, #tpu.memory_space<vmem>>, vector<1x4x1x18xbf16>
    %313 = vector.shape_cast %312 : vector<1x4x1x18xbf16> to vector<4x18xbf16>
    %314 = vector.extract_strided_slice %313 {offsets = [0, 0], sizes = [4, 16], strides = [1, 1]} : vector<4x18xbf16> to vector<4x16xbf16>
    %c0_364 = arith.constant 0 : index
    %c208 = arith.constant 208 : index
    %315 = vector.load %arg5[%c0_364, %c208] : memref<36x256xbf16, #tpu.memory_space<vmem>>, vector<4x16xbf16>
    tpu.vector_store %arg5[%c0_364, %c208], %314 {strides = array<i32>} : memref<36x256xbf16, #tpu.memory_space<vmem>>, vector<4x16xbf16>,
    %316 = vector.extract_strided_slice %313 {offsets = [0, 1], sizes = [4, 16], strides = [1, 1]} : vector<4x18xbf16> to vector<4x16xbf16>
    %c4_365 = arith.constant 4 : index
    %c208_366 = arith.constant 208 : index
    %317 = vector.load %arg5[%c4_365, %c208_366] : memref<36x256xbf16, #tpu.memory_space<vmem>>, vector<4x16xbf16>
    tpu.vector_store %arg5[%c4_365, %c208_366], %316 {strides = array<i32>} : memref<36x256xbf16, #tpu.memory_space<vmem>>, vector<4x16xbf16>,
    %318 = vector.extract_strided_slice %313 {offsets = [0, 2], sizes = [4, 16], strides = [1, 1]} : vector<4x18xbf16> to vector<4x16xbf16>
    %c8_367 = arith.constant 8 : index
    %c208_368 = arith.constant 208 : index
    %319 = vector.load %arg5[%c8_367, %c208_368] : memref<36x256xbf16, #tpu.memory_space<vmem>>, vector<4x16xbf16>
    tpu.vector_store %arg5[%c8_367, %c208_368], %318 {strides = array<i32>} : memref<36x256xbf16, #tpu.memory_space<vmem>>, vector<4x16xbf16>,
    %c0_369 = arith.constant 0 : index
    %c0_370 = arith.constant 0 : index
    %c14_371 = arith.constant 14 : index
    %c0_372 = arith.constant 0 : index
    %320 = vector.load %arg1[%c0_369, %c0_370, %c14_371, %c0_372] : memref<1x4x18x18xbf16, #tpu.memory_space<vmem>>, vector<1x4x1x18xbf16>
    %321 = vector.shape_cast %320 : vector<1x4x1x18xbf16> to vector<4x18xbf16>
    %322 = vector.extract_strided_slice %321 {offsets = [0, 0], sizes = [4, 16], strides = [1, 1]} : vector<4x18xbf16> to vector<4x16xbf16>
    %c12_373 = arith.constant 12 : index
    %c208_374 = arith.constant 208 : index
    %323 = vector.load %arg5[%c12_373, %c208_374] : memref<36x256xbf16, #tpu.memory_space<vmem>>, vector<4x16xbf16>
    tpu.vector_store %arg5[%c12_373, %c208_374], %322 {strides = array<i32>} : memref<36x256xbf16, #tpu.memory_space<vmem>>, vector<4x16xbf16>,
    %324 = vector.extract_strided_slice %321 {offsets = [0, 1], sizes = [4, 16], strides = [1, 1]} : vector<4x18xbf16> to vector<4x16xbf16>
    %c16_375 = arith.constant 16 : index
    %c208_376 = arith.constant 208 : index
    %325 = vector.load %arg5[%c16_375, %c208_376] : memref<36x256xbf16, #tpu.memory_space<vmem>>, vector<4x16xbf16>
    tpu.vector_store %arg5[%c16_375, %c208_376], %324 {strides = array<i32>} : memref<36x256xbf16, #tpu.memory_space<vmem>>, vector<4x16xbf16>,
    %326 = vector.extract_strided_slice %321 {offsets = [0, 2], sizes = [4, 16], strides = [1, 1]} : vector<4x18xbf16> to vector<4x16xbf16>
    %c20_377 = arith.constant 20 : index
    %c208_378 = arith.constant 208 : index
    %327 = vector.load %arg5[%c20_377, %c208_378] : memref<36x256xbf16, #tpu.memory_space<vmem>>, vector<4x16xbf16>
    tpu.vector_store %arg5[%c20_377, %c208_378], %326 {strides = array<i32>} : memref<36x256xbf16, #tpu.memory_space<vmem>>, vector<4x16xbf16>,
    %c0_379 = arith.constant 0 : index
    %c0_380 = arith.constant 0 : index
    %c15 = arith.constant 15 : index
    %c0_381 = arith.constant 0 : index
    %328 = vector.load %arg1[%c0_379, %c0_380, %c15, %c0_381] : memref<1x4x18x18xbf16, #tpu.memory_space<vmem>>, vector<1x4x1x18xbf16>
    %329 = vector.shape_cast %328 : vector<1x4x1x18xbf16> to vector<4x18xbf16>
    %330 = vector.extract_strided_slice %329 {offsets = [0, 0], sizes = [4, 16], strides = [1, 1]} : vector<4x18xbf16> to vector<4x16xbf16>
    %c24_382 = arith.constant 24 : index
    %c208_383 = arith.constant 208 : index
    %331 = vector.load %arg5[%c24_382, %c208_383] : memref<36x256xbf16, #tpu.memory_space<vmem>>, vector<4x16xbf16>
    tpu.vector_store %arg5[%c24_382, %c208_383], %330 {strides = array<i32>} : memref<36x256xbf16, #tpu.memory_space<vmem>>, vector<4x16xbf16>,
    %332 = vector.extract_strided_slice %329 {offsets = [0, 1], sizes = [4, 16], strides = [1, 1]} : vector<4x18xbf16> to vector<4x16xbf16>
    %c28_384 = arith.constant 28 : index
    %c208_385 = arith.constant 208 : index
    %333 = vector.load %arg5[%c28_384, %c208_385] : memref<36x256xbf16, #tpu.memory_space<vmem>>, vector<4x16xbf16>
    tpu.vector_store %arg5[%c28_384, %c208_385], %332 {strides = array<i32>} : memref<36x256xbf16, #tpu.memory_space<vmem>>, vector<4x16xbf16>,
    %334 = vector.extract_strided_slice %329 {offsets = [0, 2], sizes = [4, 16], strides = [1, 1]} : vector<4x18xbf16> to vector<4x16xbf16>
    %c32_386 = arith.constant 32 : index
    %c208_387 = arith.constant 208 : index
    %335 = vector.load %arg5[%c32_386, %c208_387] : memref<36x256xbf16, #tpu.memory_space<vmem>>, vector<4x16xbf16>
    tpu.vector_store %arg5[%c32_386, %c208_387], %334 {strides = array<i32>} : memref<36x256xbf16, #tpu.memory_space<vmem>>, vector<4x16xbf16>,
    %c0_388 = arith.constant 0 : index
    %c0_389 = arith.constant 0 : index
    %c14_390 = arith.constant 14 : index
    %c0_391 = arith.constant 0 : index
    %336 = vector.load %arg1[%c0_388, %c0_389, %c14_390, %c0_391] : memref<1x4x18x18xbf16, #tpu.memory_space<vmem>>, vector<1x4x1x18xbf16>
    %337 = vector.shape_cast %336 : vector<1x4x1x18xbf16> to vector<4x18xbf16>
    %338 = vector.extract_strided_slice %337 {offsets = [0, 0], sizes = [4, 16], strides = [1, 1]} : vector<4x18xbf16> to vector<4x16xbf16>
    %c0_392 = arith.constant 0 : index
    %c224 = arith.constant 224 : index
    %339 = vector.load %arg5[%c0_392, %c224] : memref<36x256xbf16, #tpu.memory_space<vmem>>, vector<4x16xbf16>
    tpu.vector_store %arg5[%c0_392, %c224], %338 {strides = array<i32>} : memref<36x256xbf16, #tpu.memory_space<vmem>>, vector<4x16xbf16>,
    %340 = vector.extract_strided_slice %337 {offsets = [0, 1], sizes = [4, 16], strides = [1, 1]} : vector<4x18xbf16> to vector<4x16xbf16>
    %c4_393 = arith.constant 4 : index
    %c224_394 = arith.constant 224 : index
    %341 = vector.load %arg5[%c4_393, %c224_394] : memref<36x256xbf16, #tpu.memory_space<vmem>>, vector<4x16xbf16>
    tpu.vector_store %arg5[%c4_393, %c224_394], %340 {strides = array<i32>} : memref<36x256xbf16, #tpu.memory_space<vmem>>, vector<4x16xbf16>,
    %342 = vector.extract_strided_slice %337 {offsets = [0, 2], sizes = [4, 16], strides = [1, 1]} : vector<4x18xbf16> to vector<4x16xbf16>
    %c8_395 = arith.constant 8 : index
    %c224_396 = arith.constant 224 : index
    %343 = vector.load %arg5[%c8_395, %c224_396] : memref<36x256xbf16, #tpu.memory_space<vmem>>, vector<4x16xbf16>
    tpu.vector_store %arg5[%c8_395, %c224_396], %342 {strides = array<i32>} : memref<36x256xbf16, #tpu.memory_space<vmem>>, vector<4x16xbf16>,
    %c0_397 = arith.constant 0 : index
    %c0_398 = arith.constant 0 : index
    %c15_399 = arith.constant 15 : index
    %c0_400 = arith.constant 0 : index
    %344 = vector.load %arg1[%c0_397, %c0_398, %c15_399, %c0_400] : memref<1x4x18x18xbf16, #tpu.memory_space<vmem>>, vector<1x4x1x18xbf16>
    %345 = vector.shape_cast %344 : vector<1x4x1x18xbf16> to vector<4x18xbf16>
    %346 = vector.extract_strided_slice %345 {offsets = [0, 0], sizes = [4, 16], strides = [1, 1]} : vector<4x18xbf16> to vector<4x16xbf16>
    %c12_401 = arith.constant 12 : index
    %c224_402 = arith.constant 224 : index
    %347 = vector.load %arg5[%c12_401, %c224_402] : memref<36x256xbf16, #tpu.memory_space<vmem>>, vector<4x16xbf16>
    tpu.vector_store %arg5[%c12_401, %c224_402], %346 {strides = array<i32>} : memref<36x256xbf16, #tpu.memory_space<vmem>>, vector<4x16xbf16>,
    %348 = vector.extract_strided_slice %345 {offsets = [0, 1], sizes = [4, 16], strides = [1, 1]} : vector<4x18xbf16> to vector<4x16xbf16>
    %c16_403 = arith.constant 16 : index
    %c224_404 = arith.constant 224 : index
    %349 = vector.load %arg5[%c16_403, %c224_404] : memref<36x256xbf16, #tpu.memory_space<vmem>>, vector<4x16xbf16>
    tpu.vector_store %arg5[%c16_403, %c224_404], %348 {strides = array<i32>} : memref<36x256xbf16, #tpu.memory_space<vmem>>, vector<4x16xbf16>,
    %350 = vector.extract_strided_slice %345 {offsets = [0, 2], sizes = [4, 16], strides = [1, 1]} : vector<4x18xbf16> to vector<4x16xbf16>
    %c20_405 = arith.constant 20 : index
    %c224_406 = arith.constant 224 : index
    %351 = vector.load %arg5[%c20_405, %c224_406] : memref<36x256xbf16, #tpu.memory_space<vmem>>, vector<4x16xbf16>
    tpu.vector_store %arg5[%c20_405, %c224_406], %350 {strides = array<i32>} : memref<36x256xbf16, #tpu.memory_space<vmem>>, vector<4x16xbf16>,
    %c0_407 = arith.constant 0 : index
    %c0_408 = arith.constant 0 : index
    %c16_409 = arith.constant 16 : index
    %c0_410 = arith.constant 0 : index
    %352 = vector.load %arg1[%c0_407, %c0_408, %c16_409, %c0_410] : memref<1x4x18x18xbf16, #tpu.memory_space<vmem>>, vector<1x4x1x18xbf16>
    %353 = vector.shape_cast %352 : vector<1x4x1x18xbf16> to vector<4x18xbf16>
    %354 = vector.extract_strided_slice %353 {offsets = [0, 0], sizes = [4, 16], strides = [1, 1]} : vector<4x18xbf16> to vector<4x16xbf16>
    %c24_411 = arith.constant 24 : index
    %c224_412 = arith.constant 224 : index
    %355 = vector.load %arg5[%c24_411, %c224_412] : memref<36x256xbf16, #tpu.memory_space<vmem>>, vector<4x16xbf16>
    tpu.vector_store %arg5[%c24_411, %c224_412], %354 {strides = array<i32>} : memref<36x256xbf16, #tpu.memory_space<vmem>>, vector<4x16xbf16>,
    %356 = vector.extract_strided_slice %353 {offsets = [0, 1], sizes = [4, 16], strides = [1, 1]} : vector<4x18xbf16> to vector<4x16xbf16>
    %c28_413 = arith.constant 28 : index
    %c224_414 = arith.constant 224 : index
    %357 = vector.load %arg5[%c28_413, %c224_414] : memref<36x256xbf16, #tpu.memory_space<vmem>>, vector<4x16xbf16>
    tpu.vector_store %arg5[%c28_413, %c224_414], %356 {strides = array<i32>} : memref<36x256xbf16, #tpu.memory_space<vmem>>, vector<4x16xbf16>,
    %358 = vector.extract_strided_slice %353 {offsets = [0, 2], sizes = [4, 16], strides = [1, 1]} : vector<4x18xbf16> to vector<4x16xbf16>
    %c32_415 = arith.constant 32 : index
    %c224_416 = arith.constant 224 : index
    %359 = vector.load %arg5[%c32_415, %c224_416] : memref<36x256xbf16, #tpu.memory_space<vmem>>, vector<4x16xbf16>
    tpu.vector_store %arg5[%c32_415, %c224_416], %358 {strides = array<i32>} : memref<36x256xbf16, #tpu.memory_space<vmem>>, vector<4x16xbf16>,
    %c0_417 = arith.constant 0 : index
    %c0_418 = arith.constant 0 : index
    %c15_419 = arith.constant 15 : index
    %c0_420 = arith.constant 0 : index
    %360 = vector.load %arg1[%c0_417, %c0_418, %c15_419, %c0_420] : memref<1x4x18x18xbf16, #tpu.memory_space<vmem>>, vector<1x4x1x18xbf16>
    %361 = vector.shape_cast %360 : vector<1x4x1x18xbf16> to vector<4x18xbf16>
    %362 = vector.extract_strided_slice %361 {offsets = [0, 0], sizes = [4, 16], strides = [1, 1]} : vector<4x18xbf16> to vector<4x16xbf16>
    %c0_421 = arith.constant 0 : index
    %c240 = arith.constant 240 : index
    %363 = vector.load %arg5[%c0_421, %c240] : memref<36x256xbf16, #tpu.memory_space<vmem>>, vector<4x16xbf16>
    tpu.vector_store %arg5[%c0_421, %c240], %362 {strides = array<i32>} : memref<36x256xbf16, #tpu.memory_space<vmem>>, vector<4x16xbf16>,
    %364 = vector.extract_strided_slice %361 {offsets = [0, 1], sizes = [4, 16], strides = [1, 1]} : vector<4x18xbf16> to vector<4x16xbf16>
    %c4_422 = arith.constant 4 : index
    %c240_423 = arith.constant 240 : index
    %365 = vector.load %arg5[%c4_422, %c240_423] : memref<36x256xbf16, #tpu.memory_space<vmem>>, vector<4x16xbf16>
    tpu.vector_store %arg5[%c4_422, %c240_423], %364 {strides = array<i32>} : memref<36x256xbf16, #tpu.memory_space<vmem>>, vector<4x16xbf16>,
    %366 = vector.extract_strided_slice %361 {offsets = [0, 2], sizes = [4, 16], strides = [1, 1]} : vector<4x18xbf16> to vector<4x16xbf16>
    %c8_424 = arith.constant 8 : index
    %c240_425 = arith.constant 240 : index
    %367 = vector.load %arg5[%c8_424, %c240_425] : memref<36x256xbf16, #tpu.memory_space<vmem>>, vector<4x16xbf16>
    tpu.vector_store %arg5[%c8_424, %c240_425], %366 {strides = array<i32>} : memref<36x256xbf16, #tpu.memory_space<vmem>>, vector<4x16xbf16>,
    %c0_426 = arith.constant 0 : index
    %c0_427 = arith.constant 0 : index
    %c16_428 = arith.constant 16 : index
    %c0_429 = arith.constant 0 : index
    %368 = vector.load %arg1[%c0_426, %c0_427, %c16_428, %c0_429] : memref<1x4x18x18xbf16, #tpu.memory_space<vmem>>, vector<1x4x1x18xbf16>
    %369 = vector.shape_cast %368 : vector<1x4x1x18xbf16> to vector<4x18xbf16>
    %370 = vector.extract_strided_slice %369 {offsets = [0, 0], sizes = [4, 16], strides = [1, 1]} : vector<4x18xbf16> to vector<4x16xbf16>
    %c12_430 = arith.constant 12 : index
    %c240_431 = arith.constant 240 : index
    %371 = vector.load %arg5[%c12_430, %c240_431] : memref<36x256xbf16, #tpu.memory_space<vmem>>, vector<4x16xbf16>
    tpu.vector_store %arg5[%c12_430, %c240_431], %370 {strides = array<i32>} : memref<36x256xbf16, #tpu.memory_space<vmem>>, vector<4x16xbf16>,
    %372 = vector.extract_strided_slice %369 {offsets = [0, 1], sizes = [4, 16], strides = [1, 1]} : vector<4x18xbf16> to vector<4x16xbf16>
    %c16_432 = arith.constant 16 : index
    %c240_433 = arith.constant 240 : index
    %373 = vector.load %arg5[%c16_432, %c240_433] : memref<36x256xbf16, #tpu.memory_space<vmem>>, vector<4x16xbf16>
    tpu.vector_store %arg5[%c16_432, %c240_433], %372 {strides = array<i32>} : memref<36x256xbf16, #tpu.memory_space<vmem>>, vector<4x16xbf16>,
    %374 = vector.extract_strided_slice %369 {offsets = [0, 2], sizes = [4, 16], strides = [1, 1]} : vector<4x18xbf16> to vector<4x16xbf16>
    %c20_434 = arith.constant 20 : index
    %c240_435 = arith.constant 240 : index
    %375 = vector.load %arg5[%c20_434, %c240_435] : memref<36x256xbf16, #tpu.memory_space<vmem>>, vector<4x16xbf16>
    tpu.vector_store %arg5[%c20_434, %c240_435], %374 {strides = array<i32>} : memref<36x256xbf16, #tpu.memory_space<vmem>>, vector<4x16xbf16>,
    %c0_436 = arith.constant 0 : index
    %c0_437 = arith.constant 0 : index
    %c17 = arith.constant 17 : index
    %c0_438 = arith.constant 0 : index
    %376 = vector.load %arg1[%c0_436, %c0_437, %c17, %c0_438] : memref<1x4x18x18xbf16, #tpu.memory_space<vmem>>, vector<1x4x1x18xbf16>
    %377 = vector.shape_cast %376 : vector<1x4x1x18xbf16> to vector<4x18xbf16>
    %378 = vector.extract_strided_slice %377 {offsets = [0, 0], sizes = [4, 16], strides = [1, 1]} : vector<4x18xbf16> to vector<4x16xbf16>
    %c24_439 = arith.constant 24 : index
    %c240_440 = arith.constant 240 : index
    %379 = vector.load %arg5[%c24_439, %c240_440] : memref<36x256xbf16, #tpu.memory_space<vmem>>, vector<4x16xbf16>
    tpu.vector_store %arg5[%c24_439, %c240_440], %378 {strides = array<i32>} : memref<36x256xbf16, #tpu.memory_space<vmem>>, vector<4x16xbf16>,
    %380 = vector.extract_strided_slice %377 {offsets = [0, 1], sizes = [4, 16], strides = [1, 1]} : vector<4x18xbf16> to vector<4x16xbf16>
    %c28_441 = arith.constant 28 : index
    %c240_442 = arith.constant 240 : index
    %381 = vector.load %arg5[%c28_441, %c240_442] : memref<36x256xbf16, #tpu.memory_space<vmem>>, vector<4x16xbf16>
    tpu.vector_store %arg5[%c28_441, %c240_442], %380 {strides = array<i32>} : memref<36x256xbf16, #tpu.memory_space<vmem>>, vector<4x16xbf16>,
    %382 = vector.extract_strided_slice %377 {offsets = [0, 2], sizes = [4, 16], strides = [1, 1]} : vector<4x18xbf16> to vector<4x16xbf16>
    %c32_443 = arith.constant 32 : index
    %c240_444 = arith.constant 240 : index
    %383 = vector.load %arg5[%c32_443, %c240_444] : memref<36x256xbf16, #tpu.memory_space<vmem>>, vector<4x16xbf16>
    tpu.vector_store %arg5[%c32_443, %c240_444], %382 {strides = array<i32>} : memref<36x256xbf16, #tpu.memory_space<vmem>>, vector<4x16xbf16>,
    %c0_445 = arith.constant 0 : index
    %c0_446 = arith.constant 0 : index
    %384 = vector.load %arg2[%c0_445, %c0_446] : memref<4x36xbf16, #tpu.memory_space<vmem>>, vector<4x36xbf16>
    %c0_447 = arith.constant 0 : index
    %c0_448 = arith.constant 0 : index
    %385 = vector.load %arg5[%c0_447, %c0_448] : memref<36x256xbf16, #tpu.memory_space<vmem>>, vector<36x256xbf16>
    %cst = arith.constant dense<0.000000e+00> : vector<4x256xf32>
    %386 = tpu.matmul %384, %385, %cst {dimension_numbers = #tpu.dot_dimension_numbers<[1], [0], [0], [1], [0, 0, 1, 1], [], []>} : vector<4x36xbf16>, vector<36x256xbf16>, vector<4x256xf32> -> vector<4x256xf32>
    %c0_449 = arith.constant 0 : index
    %c0_450 = arith.constant 0 : index
    %387 = vector.load %arg3[%c0_449, %c0_450] : memref<4x1xf32, #tpu.memory_space<vmem>>, vector<4x1xf32>
    %388 = vector.broadcast %387 : vector<4x1xf32> to vector<4x256xf32>
    %389 = arith.addf %386, %388 : vector<4x256xf32>
    %cst_451 = arith.constant 0.000000e+00 : f32
    %390 = vector.broadcast %cst_451 : f32 to vector<4x256xf32>
    %391 = arith.maximumf %389, %390 : vector<4x256xf32>
    %392 = arith.truncf %391 : vector<4x256xf32> to vector<4x256xbf16>
    %c0_452 = arith.constant 0 : index
    %c0_453 = arith.constant 0 : index
    %c0_454 = arith.constant 0 : index
    %393 = vector.load %arg4[%c0_452, %c0_453, %c0_454] : memref<1x4x256xbf16, #tpu.memory_space<vmem>>, vector<1x4x256xbf16>
    %394 = vector.shape_cast %393 : vector<1x4x256xbf16> to vector<4x256xbf16>
    %395 = vector.shape_cast %392 : vector<4x256xbf16> to vector<1x4x256xbf16>
    tpu.vector_store %arg4[%c0_452, %c0_453, %c0_454], %395 {strides = array<i32>} : memref<1x4x256xbf16, #tpu.memory_space<vmem>>, vector<1x4x256xbf16>,
    return
  }
  func.func @transform_0(%arg0: i32) -> (i32, i32, i32, i32) {
    %c0_i32 = arith.constant 0 : i32
    %c0_i32_0 = arith.constant 0 : i32
    %c0_i32_1 = arith.constant 0 : i32
    %c0_i32_2 = arith.constant 0 : i32
    return %arg0, %c0_i32, %c0_i32_0, %c0_i32_1 : i32, i32, i32, i32
  }
  func.func @transform_1(%arg0: i32) -> (i32, i32) {
    %c0_i32 = arith.constant 0 : i32
    %c0_i32_0 = arith.constant 0 : i32
    %c0_i32_1 = arith.constant 0 : i32
    return %c0_i32, %c0_i32_0 : i32, i32
  }
  func.func @transform_2(%arg0: i32) -> (i32, i32) {
    %c0_i32 = arith.constant 0 : i32
    %c0_i32_0 = arith.constant 0 : i32
    %c0_i32_1 = arith.constant 0 : i32
    return %c0_i32, %c0_i32_0 : i32, i32
  }
  func.func @transform_3(%arg0: i32) -> (i32, i32, i32) {
    %c0_i32 = arith.constant 0 : i32
    %c0_i32_0 = arith.constant 0 : i32
    %c0_i32_1 = arith.constant 0 : i32
    return %arg0, %c0_i32, %c0_i32_0 : i32, i32, i32
  }
}

</mosaic_0001>

<llo_original>
// kernel: inception_forward.12
$region0: #{inception_forward.12}
  #allocation0 [shape = 'u32[]', space=smem, size = 0x4, offset = 0x4, fixed_abs, tag = 'smem constant byte address 0x4 - core index']
  #allocation1 [shape = 'u32[144,128]{1,0:T(1,128)}', space=vmem, size = 0x12000, scoped, tag = 'internal scratch']
  %s0 = inlined_call_operand.vmem [shape: bf16[2,4,256], index: 0, kind: input, shape index: {}]
  %s1 = inlined_call_operand.vmem [shape: bf16[4,4], index: 1, kind: input, shape index: {}]
  %s2 = inlined_call_operand.vmem [shape: f32[4,1], index: 2, kind: input, shape index: {}]
  %s3 = inlined_call_operand.vmem [shape: bf16[2,4,256], index: 3, kind: output, shape index: {}]
  %s4 = sld [smem:[#allocation0]]
  $region45: #{inception_forward.12} parent=0
    _
  %s6 = ssub.s32 1, %s4
  %s7 = scalar_select 0, %s6, %s4
  loop: start=0, step=1, limit=4
  $region2: #{inception_forward.12} parent=0 // loop_pre_header
    _
  $region3: #{inception_forward.12} parent=0 // loop_header
    %s9 = sphi 0, %s13
    %p10 = scmp.ge.s32.totalorder %s9, 4
    %s16 = sphi 0, %s28
    %s17 = sphi 0, %s24
    %s18 = sphi 0, %s16
    %s19 = sphi 0, %s17
    %s20 = sphi 0, %s18
    %s21 = sphi 0, %s19
    %s33 = sphi 0, %s35
    %s36 = sphi 0, %s33
    %s37 = sphi 0, %s36
    %s53 = sphi 0, %s37
    %s57 = sphi 0, %s57
    %s59 = sphi 0, %s57
    %s60 = sphi 0, %s59
    %s74 = sphi 0, %s60
    %s78 = sphi 0, %s78
    %s80 = sphi 0, %s78
    %s81 = sphi 0, %s80
    %s95 = sphi 0, %s81
    %s103 = sphi 0, %s105
    %s106 = sphi 0, %s103
    %s107 = sphi 0, %s106
    %s123 = sphi 0, %s107
  $region4: #{inception_forward.12} parent=0 // loop_header_branch
    %12 = sbr.rel (%p10) target = $region8
  $region5: #{inception_forward.12} parent=0 // loop_body
    %s14 = ssub.s32 %s9, 1
    %s15 = ssub.s32 %s9, 2
    %s22 = sadd.s32 1, %s17
    %p23 = scmp.ge.s32.totalorder %s22, 1
    %s24 = scalar_select %p23, 0, %s22
    %s25 = sadd.s32 1, %s16
    %s26 = scalar_select %p23, %s25, %s16
    %p27 = scmp.ge.s32.totalorder %s26, 2
    %s28 = scalar_select %p27, 0, %s26
    %s29 = ssub.s32 %s16, %s28
    %s30 = ssub.s32 %s17, %s24
    %s31 = sor.u32 %s29, %s30
    %p32 = scmp.eq.s32.totalorder %s31, 0
    %s34 = sadd.s32 %s33, 1
    %s35 = scalar_select %p32, %s33, %s34
    %p38 = pneg %p32
    %p39 = scmp.eq.s32.totalorder %s9, 1
    %p40 = por %p38, %p39
    %p41 = scmp.ne.s32.totalorder %s33, %s36
    %p42 = scmp.eq.s32.totalorder %s9, 0
    %p43 = por %p41, %p42
    %p44 = scmp.ne.s32.totalorder %s33, %s36
    %p45 = scmp.eq.s32.totalorder %s14, 1
    %p46 = por %p44, %p45
    %p47 = scmp.ne.s32.totalorder %s36, %s37
    %p48 = scmp.eq.s32.totalorder %s14, 0
    %p49 = por %p47, %p48
    %p50 = scmp.ne.s32.totalorder %s36, %s37
    %p51 = scmp.eq.s32.totalorder %s15, 1
    %p52 = por %p50, %p51
    %p54 = scmp.ne.s32.totalorder %s37, %s53
    %p55 = scmp.eq.s32.totalorder %s15, 0
    %p56 = por %p54, %p55
    %s58 = sadd.s32 %s57, 1
    %p61 = scmp.eq.s32.totalorder %s9, 1
    %p62 = scmp.ne.s32.totalorder %s57, %s59
    %p63 = scmp.eq.s32.totalorder %s9, 0
    %p64 = por %p62, %p63
    %p65 = scmp.ne.s32.totalorder %s57, %s59
    %p66 = scmp.eq.s32.totalorder %s14, 1
    %p67 = por %p65, %p66
    %p68 = scmp.ne.s32.totalorder %s59, %s60
    %p69 = scmp.eq.s32.totalorder %s14, 0
    %p70 = por %p68, %p69
    %p71 = scmp.ne.s32.totalorder %s59, %s60
    %p72 = scmp.eq.s32.totalorder %s15, 1
    %p73 = por %p71, %p72
    %p75 = scmp.ne.s32.totalorder %s60, %s74
    %p76 = scmp.eq.s32.totalorder %s15, 0
    %p77 = por %p75, %p76
    %s79 = sadd.s32 %s78, 1
    %p82 = scmp.eq.s32.totalorder %s9, 1
    %p83 = scmp.ne.s32.totalorder %s78, %s80
    %p84 = scmp.eq.s32.totalorder %s9, 0
    %p85 = por %p83, %p84
    %p86 = scmp.ne.s32.totalorder %s78, %s80
    %p87 = scmp.eq.s32.totalorder %s14, 1
    %p88 = por %p86, %p87
    %p89 = scmp.ne.s32.totalorder %s80, %s81
    %p90 = scmp.eq.s32.totalorder %s14, 0
    %p91 = por %p89, %p90
    %p92 = scmp.ne.s32.totalorder %s80, %s81
    %p93 = scmp.eq.s32.totalorder %s15, 1
    %p94 = por %p92, %p93
    %p96 = scmp.ne.s32.totalorder %s81, %s95
    %p97 = scmp.eq.s32.totalorder %s15, 0
    %p98 = por %p96, %p97
    %s99 = ssub.s32 %s16, %s28
    %s100 = ssub.s32 %s17, %s24
    %s101 = sor.u32 %s99, %s100
    %p102 = scmp.eq.s32.totalorder %s101, 0
    %s104 = sadd.s32 %s103, 1
    %s105 = scalar_select %p102, %s103, %s104
    %p108 = pneg %p102
    %p109 = scmp.eq.s32.totalorder %s9, 1
    %p110 = por %p108, %p109
    %p111 = scmp.ne.s32.totalorder %s103, %s106
    %p112 = scmp.eq.s32.totalorder %s9, 0
    %p113 = por %p111, %p112
    %p114 = scmp.ne.s32.totalorder %s103, %s106
    %p115 = scmp.eq.s32.totalorder %s14, 1
    %p116 = por %p114, %p115
    %p117 = scmp.ne.s32.totalorder %s106, %s107
    %p118 = scmp.eq.s32.totalorder %s14, 0
    %p119 = por %p117, %p118
    %p120 = scmp.ne.s32.totalorder %s106, %s107
    %p121 = scmp.eq.s32.totalorder %s15, 1
    %p122 = por %p120, %p121
    %p124 = scmp.ne.s32.totalorder %s107, %s123
    %p125 = scmp.eq.s32.totalorder %s15, 0
    %p126 = por %p124, %p125
    %p127 = scmp.le.s32.totalorder 1, %s9
    %p128 = scmp.lt.s32.totalorder %s9, 3
    %p129 = pnand %p127, %p128
    %p130 = pneg %p129
    // Predicated region
    $region9: #{inception_forward.12} parent=5 // pred_check
      _
    $region10: #{inception_forward.12} parent=5 // pred_check_branch
      %132 = sbr.rel (%p129) target = $region12
    $region11: #{inception_forward.12} parent=5 // pred_region
      %s133 = ssub.s32 %s9, 1
      // Predicated region
      $region13: #{inception_forward.12} parent=11 // pred_check
        %p134 = pneg %p70
      $region14: #{inception_forward.12} parent=11 // pred_check_branch
        %136 = sbr.rel (%p134) target = $region16
      $region15: #{inception_forward.12} parent=11 // pred_region
        _
      $region16: #{inception_forward.12} parent=11 // pred_fallthru
        _
      // Predicated region
      $region17: #{inception_forward.12} parent=11 // pred_check
        %p137 = pneg %p91
      $region18: #{inception_forward.12} parent=11 // pred_check_branch
        %139 = sbr.rel (%p137) target = $region20
      $region19: #{inception_forward.12} parent=11 // pred_region
        _
      $region20: #{inception_forward.12} parent=11 // pred_fallthru
        _
    $region12: #{inception_forward.12} parent=5 // pred_fallthru
      _
    %p140 = scmp.lt.s32.totalorder %s9, 2
    // Predicated region
    $region21: #{inception_forward.12} parent=5 // pred_check
      %p141 = pneg %p140
    $region22: #{inception_forward.12} parent=5 // pred_check_branch
      %143 = sbr.rel (%p141) target = $region24
    $region23: #{inception_forward.12} parent=5 // pred_region
      // Predicated region
      $region25: #{inception_forward.12} parent=23 // pred_check
        %p144 = pneg %p43
      $region26: #{inception_forward.12} parent=23 // pred_check_branch
        %146 = sbr.rel (%p144) target = $region28
      $region27: #{inception_forward.12} parent=23 // pred_region
        %s147 = smul.u32 2, %s17
        %p148 = scmp.lt.s32.totalorder %s16, 1
        %s149 = scalar_select %p148, %s16, 1
        %p150 = scmp.lt.s32.totalorder %s147, 1
        %s151 = scalar_select %p150, %s147, 1
        %s152 = smul.addr %s149, 2
        %s153 = sadd.s32 %s151, %s152
        %s154 = smul.addr %s153, 2
        %s155 = scalar_lea.vmem %s0, %s154
        %s156 = smul.u32 2, %s17
      $region28: #{inception_forward.12} parent=23 // pred_fallthru
        _
    $region24: #{inception_forward.12} parent=5 // pred_fallthru
      _
    %p157 = scmp.le.s32.totalorder 1, %s9
    %p158 = scmp.lt.s32.totalorder %s9, 3
    %p159 = pnand %p157, %p158
    %p160 = pneg %p159
    // Predicated region
    $region29: #{inception_forward.12} parent=5 // pred_check
      _
    $region30: #{inception_forward.12} parent=5 // pred_check_branch
      %162 = sbr.rel (%p159) target = $region32
    $region31: #{inception_forward.12} parent=5 // pred_region
      %s163 = ssub.s32 %s9, 1
      %s164 = smul.u32 2, %s19
      %p165 = scmp.lt.s32.totalorder %s18, 1
      %s166 = scalar_select %p165, %s18, 1
      %p167 = scmp.lt.s32.totalorder %s164, 1
      %s168 = scalar_select %p167, %s164, 1
      %s169 = smul.addr %s166, 2
      %s170 = sadd.s32 %s168, %s169
      %s171 = smul.addr %s170, 2
      %s172 = scalar_lea.vmem %s0, %s171
      %p173 = pneg %p49
      %p174 = pneg %p46
      %p175 = pneg %p70
      %p176 = pneg %p67
      %p177 = pneg %p91
      %p178 = pneg %p88
      %p179 = pneg %p119
      %p180 = pneg %p116
      %s181 = smul.u32 2, %s19
      %p182 = scmp.lt.s32.totalorder %s18, 1
      %s183 = scalar_select %p182, %s18, 1
      %p184 = scmp.lt.s32.totalorder %s181, 1
      %s185 = scalar_select %p184, %s181, 1
      %s186 = smul.addr %s183, 2
      %s187 = sadd.s32 %s185, %s186
      %s188 = smul.addr %s187, 2
      %s189 = scalar_lea.vmem %s3, %s188
      %s190 = smul.u32 2, %s19
      %p191 = scmp.lt.s32.totalorder %s18, 1
      %s192 = scalar_select %p191, %s18, 1
      %p193 = scmp.lt.s32.totalorder %s190, 1
      %s194 = scalar_select %p193, %s190, 1
      %s195 = smul.addr %s192, 2
      %s196 = sadd.s32 %s194, %s195
      %s197 = smul.addr %s196, 2
      %s198 = scalar_lea.vmem %s0, %s197
      %s199 = smul.u32 2, %s19
      %s200 = smul.u32 2, %s19
      %p201 = scmp.lt.s32.totalorder %s18, 1
      %s202 = scalar_select %p201, %s18, 1
      %p203 = scmp.lt.s32.totalorder %s200, 1
      %s204 = scalar_select %p203, %s200, 1
      %s205 = smul.addr %s202, 2
      %s206 = sadd.s32 %s204, %s205
      %s207 = smul.addr %s206, 2
      %s208 = scalar_lea.vmem %s3, %s207
      %s209 = smul.u32 2, %s19
      %v211 = vld [vmem:[%s1] sm:$0x3]
      %v212 = vld [vmem:[%s198] sm:$0xf]
      %v213 = vld [vmem:[%s2] sm:$0xf]
      %215 = vset.pattern.permute.xlu0 0
      %216 = vperm.xlu0 %215, %v213
      %v217 = vpop.permute.xlu0 %216
      %v221 = vunpack.c.l.s4 1983009808
      %v222 = vunpack.c.0.s8 %v221
      %v223 = vlaneseq
      %v224 = vshrl.u32 %v223, 7
      %v225 = vsub.s32 %v222, %v224
      %v226 = vrot.slane %v212, %v225
      %v227 = vcombine.high %v226, %v226
      %vm228 = vcmask 31744
      %v230 = vsel %vm228, %v211, 0
      %vm232 = vcmask 1041408
      %v234 = vsel %vm232, %v226, 0
      %v237 = vsel %vm232, %v227, 0
      %239 = vmatprep.subr.bf16.mxu0 %v237
      %240 = vmatpush1.bf16.msra.mxu0 %v234
      %241 = vmatprep.subr.bf16.mxu0 0
      %242 = vmatpush1.bf16.msra.mxu0 0
      %243 = vmatprep.subr.bf16.mxu0 0
      %244 = vmatpush1.bf16.msra.mxu0 0
      %245 = vmatprep.subr.bf16.mxu0 0
      %246 = vmatpush1.bf16.msra.mxu0 0
      %247 = vmatprep.subr.bf16.mxu0 0
      %248 = vmatpush1.bf16.msra.mxu0 0
      %249 = vmatprep.subr.bf16.mxu0 0
      %250 = vmatpush1.bf16.msra.mxu0 0
      %251 = vmatprep.subr.bf16.mxu0 0
      %252 = vmatpush1.bf16.msra.mxu0 0
      %253 = vmatprep.subr.bf16.mxu0 0
      %254 = vmatpush1.bf16.msra.mxu0 0
      %255 = vmatprep.subr.bf16.mxu0 0
      %256 = vmatpush1.bf16.msra.mxu0 0
      %257 = vmatprep.subr.bf16.mxu0 0
      %258 = vmatpush1.bf16.msra.mxu0 0
      %259 = vmatprep.subr.bf16.mxu0 0
      %260 = vmatpush1.bf16.msra.mxu0 0
      %261 = vmatprep.subr.bf16.mxu0 0
      %262 = vmatpush1.bf16.msra.mxu0 0
      %263 = vmatprep.subr.bf16.mxu0 0
      %264 = vmatpush1.bf16.msra.mxu0 0
      %265 = vmatprep.subr.bf16.mxu0 0
      %266 = vmatpush1.bf16.msra.mxu0 0
      %267 = vmatprep.subr.bf16.mxu0 0
      %268 = vmatpush1.bf16.msra.mxu0 0
      %269 = vmatprep.subr.bf16.mxu0 0
      %270 = vmatpush1.bf16.msra.mxu0 0
      %271 = vmatprep.mubr.bf16.mxu0 0
      %272 = vmatmul.mubr.bf16.gmra.mrb[0].mxu0 %v230
      %v273 = vpop.f32.mrb[0].mxu0
      %v274 = vadd.f32 %v217, %v273
      %v275 = vpop.f32.mrb[0].mxu0
      %v276 = vadd.f32 %v217, %v275
      %v277 = vpop.f32.mrb[0].mxu0
      %v278 = vpop.f32.mrb[0].mxu0
      %279 = vdwg.mxu0
      %v280 = vmax.f32 %v274, 0.0
      %v281 = vmax.f32 %v276, 0.0
      %v282 = vpack.c.bf16 %v280, %v280
      %v283 = vpack.c.bf16 %v281, %v281
      %v286 = vcombine.low %v282, %v283
      %v288 = vunpack.c.l.s4 1983009808
      %v289 = vunpack.c.0.s8 %v288
      %v290 = vlaneseq
      %v291 = vshrl.u32 %v290, 7
      %v292 = vsub.s32 %v289, %v291
      %v293 = vrot.slane %v286, %v292
      %295 = vst [vmem:[%s208] sm:$0xf] %v293
      %s296 = smul.u32 2, %s19
      %p297 = scmp.lt.s32.totalorder %s18, 1
      %s298 = scalar_select %p297, %s18, 1
      %p299 = scmp.lt.s32.totalorder %s296, 1
      %s300 = scalar_select %p299, %s296, 1
      %s301 = smul.addr %s298, 2
      %s302 = sadd.s32 %s300, %s301
      %s303 = smul.addr %s302, 2
      %s304 = scalar_lea.vmem %s3, %s303
      // Predicated region
      $region33: #{inception_forward.12} parent=31 // pred_check
        %p305 = pneg %p116
      $region34: #{inception_forward.12} parent=31 // pred_check_branch
        %307 = sbr.rel (%p305) target = $region36
      $region35: #{inception_forward.12} parent=31 // pred_region
        %s308 = smul.u32 2, %s19
      $region36: #{inception_forward.12} parent=31 // pred_fallthru
        _
    $region32: #{inception_forward.12} parent=5 // pred_fallthru
      _
    %p309 = scmp.le.s32.totalorder 2, %s9
    // Predicated region
    $region37: #{inception_forward.12} parent=5 // pred_check
      %p310 = pneg %p309
    $region38: #{inception_forward.12} parent=5 // pred_check_branch
      %312 = sbr.rel (%p310) target = $region40
    $region39: #{inception_forward.12} parent=5 // pred_region
      %s313 = ssub.s32 %s9, 2
      // Predicated region
      $region41: #{inception_forward.12} parent=39 // pred_check
        %p314 = pneg %p122
      $region42: #{inception_forward.12} parent=39 // pred_check_branch
        %316 = sbr.rel (%p314) target = $region44
      $region43: #{inception_forward.12} parent=39 // pred_region
        %s317 = smul.u32 2, %s21
        %p318 = scmp.lt.s32.totalorder %s20, 1
        %s319 = scalar_select %p318, %s20, 1
        %p320 = scmp.lt.s32.totalorder %s317, 1
        %s321 = scalar_select %p320, %s317, 1
        %s322 = smul.addr %s319, 2
        %s323 = sadd.s32 %s321, %s322
        %s324 = smul.addr %s323, 2
        %s325 = scalar_lea.vmem %s3, %s324
      $region44: #{inception_forward.12} parent=39 // pred_fallthru
        _
    $region40: #{inception_forward.12} parent=5 // pred_fallthru
      _
  $region6: #{inception_forward.12} parent=0 // loop_footer
    %s13 = sadd.s32 1, %s9
  $region7: #{inception_forward.12} parent=0 // loop_footer_branch
    %8 = sbr.rel target = $region3
  $region8: #{inception_forward.12} parent=0 // loop_exit
    _

// kernel: inception_forward.8
$region0: #{inception_forward.8}
  #allocation0 [shape = 'u32[]', space=smem, size = 0x4, offset = 0x4, fixed_abs, tag = 'smem constant byte address 0x4 - core index']
  #allocation1 [shape = 'u32[144,128]{1,0:T(1,128)}', space=vmem, size = 0x12000, scoped, tag = 'internal scratch']
  %s0 = inlined_call_operand.vmem [shape: bf16[2,4,256], index: 0, kind: input, shape index: {}]
  %s1 = inlined_call_operand.vmem [shape: bf16[8,4], index: 1, kind: input, shape index: {}]
  %s2 = inlined_call_operand.vmem [shape: f32[8,1], index: 2, kind: input, shape index: {}]
  %s3 = inlined_call_operand.vmem [shape: bf16[2,8,256], index: 3, kind: output, shape index: {}]
  %s4 = sld [smem:[#allocation0]]
  $region45: #{inception_forward.8} parent=0
    _
  %s6 = ssub.s32 1, %s4
  %s7 = scalar_select 0, %s6, %s4
  loop: start=0, step=1, limit=4
  $region2: #{inception_forward.8} parent=0 // loop_pre_header
    _
  $region3: #{inception_forward.8} parent=0 // loop_header
    %s9 = sphi 0, %s13
    %p10 = scmp.ge.s32.totalorder %s9, 4
    %s16 = sphi 0, %s28
    %s17 = sphi 0, %s24
    %s18 = sphi 0, %s16
    %s19 = sphi 0, %s17
    %s20 = sphi 0, %s18
    %s21 = sphi 0, %s19
    %s33 = sphi 0, %s35
    %s36 = sphi 0, %s33
    %s37 = sphi 0, %s36
    %s53 = sphi 0, %s37
    %s57 = sphi 0, %s57
    %s59 = sphi 0, %s57
    %s60 = sphi 0, %s59
    %s74 = sphi 0, %s60
    %s78 = sphi 0, %s78
    %s80 = sphi 0, %s78
    %s81 = sphi 0, %s80
    %s95 = sphi 0, %s81
    %s103 = sphi 0, %s105
    %s106 = sphi 0, %s103
    %s107 = sphi 0, %s106
    %s123 = sphi 0, %s107
  $region4: #{inception_forward.8} parent=0 // loop_header_branch
    %12 = sbr.rel (%p10) target = $region8
  $region5: #{inception_forward.8} parent=0 // loop_body
    %s14 = ssub.s32 %s9, 1
    %s15 = ssub.s32 %s9, 2
    %s22 = sadd.s32 1, %s17
    %p23 = scmp.ge.s32.totalorder %s22, 1
    %s24 = scalar_select %p23, 0, %s22
    %s25 = sadd.s32 1, %s16
    %s26 = scalar_select %p23, %s25, %s16
    %p27 = scmp.ge.s32.totalorder %s26, 2
    %s28 = scalar_select %p27, 0, %s26
    %s29 = ssub.s32 %s16, %s28
    %s30 = ssub.s32 %s17, %s24
    %s31 = sor.u32 %s29, %s30
    %p32 = scmp.eq.s32.totalorder %s31, 0
    %s34 = sadd.s32 %s33, 1
    %s35 = scalar_select %p32, %s33, %s34
    %p38 = pneg %p32
    %p39 = scmp.eq.s32.totalorder %s9, 1
    %p40 = por %p38, %p39
    %p41 = scmp.ne.s32.totalorder %s33, %s36
    %p42 = scmp.eq.s32.totalorder %s9, 0
    %p43 = por %p41, %p42
    %p44 = scmp.ne.s32.totalorder %s33, %s36
    %p45 = scmp.eq.s32.totalorder %s14, 1
    %p46 = por %p44, %p45
    %p47 = scmp.ne.s32.totalorder %s36, %s37
    %p48 = scmp.eq.s32.totalorder %s14, 0
    %p49 = por %p47, %p48
    %p50 = scmp.ne.s32.totalorder %s36, %s37
    %p51 = scmp.eq.s32.totalorder %s15, 1
    %p52 = por %p50, %p51
    %p54 = scmp.ne.s32.totalorder %s37, %s53
    %p55 = scmp.eq.s32.totalorder %s15, 0
    %p56 = por %p54, %p55
    %s58 = sadd.s32 %s57, 1
    %p61 = scmp.eq.s32.totalorder %s9, 1
    %p62 = scmp.ne.s32.totalorder %s57, %s59
    %p63 = scmp.eq.s32.totalorder %s9, 0
    %p64 = por %p62, %p63
    %p65 = scmp.ne.s32.totalorder %s57, %s59
    %p66 = scmp.eq.s32.totalorder %s14, 1
    %p67 = por %p65, %p66
    %p68 = scmp.ne.s32.totalorder %s59, %s60
    %p69 = scmp.eq.s32.totalorder %s14, 0
    %p70 = por %p68, %p69
    %p71 = scmp.ne.s32.totalorder %s59, %s60
    %p72 = scmp.eq.s32.totalorder %s15, 1
    %p73 = por %p71, %p72
    %p75 = scmp.ne.s32.totalorder %s60, %s74
    %p76 = scmp.eq.s32.totalorder %s15, 0
    %p77 = por %p75, %p76
    %s79 = sadd.s32 %s78, 1
    %p82 = scmp.eq.s32.totalorder %s9, 1
    %p83 = scmp.ne.s32.totalorder %s78, %s80
    %p84 = scmp.eq.s32.totalorder %s9, 0
    %p85 = por %p83, %p84
    %p86 = scmp.ne.s32.totalorder %s78, %s80
    %p87 = scmp.eq.s32.totalorder %s14, 1
    %p88 = por %p86, %p87
    %p89 = scmp.ne.s32.totalorder %s80, %s81
    %p90 = scmp.eq.s32.totalorder %s14, 0
    %p91 = por %p89, %p90
    %p92 = scmp.ne.s32.totalorder %s80, %s81
    %p93 = scmp.eq.s32.totalorder %s15, 1
    %p94 = por %p92, %p93
    %p96 = scmp.ne.s32.totalorder %s81, %s95
    %p97 = scmp.eq.s32.totalorder %s15, 0
    %p98 = por %p96, %p97
    %s99 = ssub.s32 %s16, %s28
    %s100 = ssub.s32 %s17, %s24
    %s101 = sor.u32 %s99, %s100
    %p102 = scmp.eq.s32.totalorder %s101, 0
    %s104 = sadd.s32 %s103, 1
    %s105 = scalar_select %p102, %s103, %s104
    %p108 = pneg %p102
    %p109 = scmp.eq.s32.totalorder %s9, 1
    %p110 = por %p108, %p109
    %p111 = scmp.ne.s32.totalorder %s103, %s106
    %p112 = scmp.eq.s32.totalorder %s9, 0
    %p113 = por %p111, %p112
    %p114 = scmp.ne.s32.totalorder %s103, %s106
    %p115 = scmp.eq.s32.totalorder %s14, 1
    %p116 = por %p114, %p115
    %p117 = scmp.ne.s32.totalorder %s106, %s107
    %p118 = scmp.eq.s32.totalorder %s14, 0
    %p119 = por %p117, %p118
    %p120 = scmp.ne.s32.totalorder %s106, %s107
    %p121 = scmp.eq.s32.totalorder %s15, 1
    %p122 = por %p120, %p121
    %p124 = scmp.ne.s32.totalorder %s107, %s123
    %p125 = scmp.eq.s32.totalorder %s15, 0
    %p126 = por %p124, %p125
    %p127 = scmp.le.s32.totalorder 1, %s9
    %p128 = scmp.lt.s32.totalorder %s9, 3
    %p129 = pnand %p127, %p128
    %p130 = pneg %p129
    // Predicated region
    $region9: #{inception_forward.8} parent=5 // pred_check
      _
    $region10: #{inception_forward.8} parent=5 // pred_check_branch
      %132 = sbr.rel (%p129) target = $region12
    $region11: #{inception_forward.8} parent=5 // pred_region
      %s133 = ssub.s32 %s9, 1
      // Predicated region
      $region13: #{inception_forward.8} parent=11 // pred_check
        %p134 = pneg %p70
      $region14: #{inception_forward.8} parent=11 // pred_check_branch
        %136 = sbr.rel (%p134) target = $region16
      $region15: #{inception_forward.8} parent=11 // pred_region
        _
      $region16: #{inception_forward.8} parent=11 // pred_fallthru
        _
      // Predicated region
      $region17: #{inception_forward.8} parent=11 // pred_check
        %p137 = pneg %p91
      $region18: #{inception_forward.8} parent=11 // pred_check_branch
        %139 = sbr.rel (%p137) target = $region20
      $region19: #{inception_forward.8} parent=11 // pred_region
        _
      $region20: #{inception_forward.8} parent=11 // pred_fallthru
        _
    $region12: #{inception_forward.8} parent=5 // pred_fallthru
      _
    %p140 = scmp.lt.s32.totalorder %s9, 2
    // Predicated region
    $region21: #{inception_forward.8} parent=5 // pred_check
      %p141 = pneg %p140
    $region22: #{inception_forward.8} parent=5 // pred_check_branch
      %143 = sbr.rel (%p141) target = $region24
    $region23: #{inception_forward.8} parent=5 // pred_region
      // Predicated region
      $region25: #{inception_forward.8} parent=23 // pred_check
        %p144 = pneg %p43
      $region26: #{inception_forward.8} parent=23 // pred_check_branch
        %146 = sbr.rel (%p144) target = $region28
      $region27: #{inception_forward.8} parent=23 // pred_region
        %s147 = smul.u32 2, %s17
        %p148 = scmp.lt.s32.totalorder %s16, 1
        %s149 = scalar_select %p148, %s16, 1
        %p150 = scmp.lt.s32.totalorder %s147, 1
        %s151 = scalar_select %p150, %s147, 1
        %s152 = smul.addr %s149, 2
        %s153 = sadd.s32 %s151, %s152
        %s154 = smul.addr %s153, 2
        %s155 = scalar_lea.vmem %s0, %s154
        %s156 = smul.u32 2, %s17
      $region28: #{inception_forward.8} parent=23 // pred_fallthru
        _
    $region24: #{inception_forward.8} parent=5 // pred_fallthru
      _
    %p157 = scmp.le.s32.totalorder 1, %s9
    %p158 = scmp.lt.s32.totalorder %s9, 3
    %p159 = pnand %p157, %p158
    %p160 = pneg %p159
    // Predicated region
    $region29: #{inception_forward.8} parent=5 // pred_check
      _
    $region30: #{inception_forward.8} parent=5 // pred_check_branch
      %162 = sbr.rel (%p159) target = $region32
    $region31: #{inception_forward.8} parent=5 // pred_region
      %s163 = ssub.s32 %s9, 1
      %s164 = smul.u32 2, %s19
      %p165 = scmp.lt.s32.totalorder %s18, 1
      %s166 = scalar_select %p165, %s18, 1
      %p167 = scmp.lt.s32.totalorder %s164, 1
      %s168 = scalar_select %p167, %s164, 1
      %s169 = smul.addr %s166, 2
      %s170 = sadd.s32 %s168, %s169
      %s171 = smul.addr %s170, 2
      %s172 = scalar_lea.vmem %s0, %s171
      %p173 = pneg %p49
      %p174 = pneg %p46
      %p175 = pneg %p70
      %p176 = pneg %p67
      %p177 = pneg %p91
      %p178 = pneg %p88
      %p179 = pneg %p119
      %p180 = pneg %p116
      %s181 = smul.u32 2, %s19
      %p182 = scmp.lt.s32.totalorder %s18, 1
      %s183 = scalar_select %p182, %s18, 1
      %p184 = scmp.lt.s32.totalorder %s181, 1
      %s185 = scalar_select %p184, %s181, 1
      %s186 = smul.addr %s183, 2
      %s187 = sadd.s32 %s185, %s186
      %s188 = smul.addr %s187, 4
      %s189 = scalar_lea.vmem %s3, %s188
      %s190 = smul.u32 2, %s19
      %p191 = scmp.lt.s32.totalorder %s18, 1
      %s192 = scalar_select %p191, %s18, 1
      %p193 = scmp.lt.s32.totalorder %s190, 1
      %s194 = scalar_select %p193, %s190, 1
      %s195 = smul.addr %s192, 2
      %s196 = sadd.s32 %s194, %s195
      %s197 = smul.addr %s196, 2
      %s198 = scalar_lea.vmem %s0, %s197
      %s199 = smul.u32 2, %s19
      %s200 = smul.u32 2, %s19
      %p201 = scmp.lt.s32.totalorder %s18, 1
      %s202 = scalar_select %p201, %s18, 1
      %p203 = scmp.lt.s32.totalorder %s200, 1
      %s204 = scalar_select %p203, %s200, 1
      %s205 = smul.addr %s202, 2
      %s206 = sadd.s32 %s204, %s205
      %s207 = smul.addr %s206, 4
      %s208 = scalar_lea.vmem %s3, %s207
      %s209 = smul.u32 2, %s19
      %v211 = vld [vmem:[%s1] sm:$0xf]
      %v212 = vld [vmem:[%s198] sm:$0xf]
      %v213 = vld [vmem:[%s2] sm:$0xff]
      %215 = vset.pattern.permute.xlu0 0
      %216 = vperm.xlu0 %215, %v213
      %v217 = vpop.permute.xlu0 %216
      %v221 = vunpack.c.l.s4 1983009808
      %v222 = vunpack.c.0.s8 %v221
      %v223 = vlaneseq
      %v224 = vshrl.u32 %v223, 7
      %v225 = vsub.s32 %v222, %v224
      %v226 = vrot.slane %v212, %v225
      %v227 = vcombine.high %v226, %v226
      %vm228 = vcmask 31744
      %v230 = vsel %vm228, %v211, 0
      %vm232 = vcmask 1041408
      %v234 = vsel %vm232, %v226, 0
      %v237 = vsel %vm232, %v227, 0
      %239 = vmatprep.subr.bf16.mxu0 %v237
      %240 = vmatpush1.bf16.msra.mxu0 %v234
      %241 = vmatprep.subr.bf16.mxu0 0
      %242 = vmatpush1.bf16.msra.mxu0 0
      %243 = vmatprep.subr.bf16.mxu0 0
      %244 = vmatpush1.bf16.msra.mxu0 0
      %245 = vmatprep.subr.bf16.mxu0 0
      %246 = vmatpush1.bf16.msra.mxu0 0
      %247 = vmatprep.subr.bf16.mxu0 0
      %248 = vmatpush1.bf16.msra.mxu0 0
      %249 = vmatprep.subr.bf16.mxu0 0
      %250 = vmatpush1.bf16.msra.mxu0 0
      %251 = vmatprep.subr.bf16.mxu0 0
      %252 = vmatpush1.bf16.msra.mxu0 0
      %253 = vmatprep.subr.bf16.mxu0 0
      %254 = vmatpush1.bf16.msra.mxu0 0
      %255 = vmatprep.subr.bf16.mxu0 0
      %256 = vmatpush1.bf16.msra.mxu0 0
      %257 = vmatprep.subr.bf16.mxu0 0
      %258 = vmatpush1.bf16.msra.mxu0 0
      %259 = vmatprep.subr.bf16.mxu0 0
      %260 = vmatpush1.bf16.msra.mxu0 0
      %261 = vmatprep.subr.bf16.mxu0 0
      %262 = vmatpush1.bf16.msra.mxu0 0
      %263 = vmatprep.subr.bf16.mxu0 0
      %264 = vmatpush1.bf16.msra.mxu0 0
      %265 = vmatprep.subr.bf16.mxu0 0
      %266 = vmatpush1.bf16.msra.mxu0 0
      %267 = vmatprep.subr.bf16.mxu0 0
      %268 = vmatpush1.bf16.msra.mxu0 0
      %269 = vmatprep.subr.bf16.mxu0 0
      %270 = vmatpush1.bf16.msra.mxu0 0
      %271 = vmatprep.mubr.bf16.mxu0 0
      %272 = vmatmul.mubr.bf16.gmra.mrb[0].mxu0 %v230
      %v273 = vpop.f32.mrb[0].mxu0
      %v274 = vadd.f32 %v217, %v273
      %v275 = vpop.f32.mrb[0].mxu0
      %v276 = vadd.f32 %v217, %v275
      %v277 = vpop.f32.mrb[0].mxu0
      %v278 = vpop.f32.mrb[0].mxu0
      %279 = vdwg.mxu0
      %v280 = vpack.c.bf16 %v274, %v274
      %v281 = vpack.c.bf16 %v276, %v276
      %v284 = vunpack.c.l.b16 %v280
      %v285 = vunpack.c.l.b16 %v281
      %v286 = vpack.c.b16 %v285, %v284
      %288 = vst [vmem:[%s208] sm:$0xff] %v286
      %s289 = smul.u32 2, %s19
      %p290 = scmp.lt.s32.totalorder %s18, 1
      %s291 = scalar_select %p290, %s18, 1
      %p292 = scmp.lt.s32.totalorder %s289, 1
      %s293 = scalar_select %p292, %s289, 1
      %s294 = smul.addr %s291, 2
      %s295 = sadd.s32 %s293, %s294
      %s296 = smul.addr %s295, 4
      %s297 = scalar_lea.vmem %s3, %s296
      // Predicated region
      $region33: #{inception_forward.8} parent=31 // pred_check
        %p298 = pneg %p116
      $region34: #{inception_forward.8} parent=31 // pred_check_branch
        %300 = sbr.rel (%p298) target = $region36
      $region35: #{inception_forward.8} parent=31 // pred_region
        %s301 = smul.u32 2, %s19
      $region36: #{inception_forward.8} parent=31 // pred_fallthru
        _
    $region32: #{inception_forward.8} parent=5 // pred_fallthru
      _
    %p302 = scmp.le.s32.totalorder 2, %s9
    // Predicated region
    $region37: #{inception_forward.8} parent=5 // pred_check
      %p303 = pneg %p302
    $region38: #{inception_forward.8} parent=5 // pred_check_branch
      %305 = sbr.rel (%p303) target = $region40
    $region39: #{inception_forward.8} parent=5 // pred_region
      %s306 = ssub.s32 %s9, 2
      // Predicated region
      $region41: #{inception_forward.8} parent=39 // pred_check
        %p307 = pneg %p122
      $region42: #{inception_forward.8} parent=39 // pred_check_branch
        %309 = sbr.rel (%p307) target = $region44
      $region43: #{inception_forward.8} parent=39 // pred_region
        %s310 = smul.u32 2, %s21
        %p311 = scmp.lt.s32.totalorder %s20, 1
        %s312 = scalar_select %p311, %s20, 1
        %p313 = scmp.lt.s32.totalorder %s310, 1
        %s314 = scalar_select %p313, %s310, 1
        %s315 = smul.addr %s312, 2
        %s316 = sadd.s32 %s314, %s315
        %s317 = smul.addr %s316, 4
        %s318 = scalar_lea.vmem %s3, %s317
      $region44: #{inception_forward.8} parent=39 // pred_fallthru
        _
    $region40: #{inception_forward.8} parent=5 // pred_fallthru
      _
  $region6: #{inception_forward.8} parent=0 // loop_footer
    %s13 = sadd.s32 1, %s9
  $region7: #{inception_forward.8} parent=0 // loop_footer_branch
    %8 = sbr.rel target = $region3
  $region8: #{inception_forward.8} parent=0 // loop_exit
    _

// kernel: inception_forward.15
$region0: #{inception_forward.15}
  #allocation0 [shape = 'u32[]', space=smem, size = 0x4, offset = 0x4, fixed_abs, tag = 'smem constant byte address 0x4 - core index']
  #allocation1 [shape = 'u32[144,128]{1,0:T(1,128)}', space=vmem, size = 0x12000, scoped, tag = 'internal scratch']
  %s0 = inlined_call_operand.vmem [shape: bf16[2,4,256], index: 0, kind: input, shape index: {}]
  %s1 = inlined_call_operand.vmem [shape: bf16[2,4,256], index: 1, kind: input, shape index: {}]
  %s2 = inlined_call_operand.vmem [shape: bf16[2,4,256], index: 2, kind: input, shape index: {}]
  %s3 = inlined_call_operand.vmem [shape: bf16[8,4], index: 3, kind: input, shape index: {}]
  %s4 = inlined_call_operand.vmem [shape: bf16[8,4], index: 4, kind: input, shape index: {}]
  %s5 = inlined_call_operand.vmem [shape: bf16[8,4], index: 5, kind: input, shape index: {}]
  %s6 = inlined_call_operand.vmem [shape: f32[8,1], index: 6, kind: input, shape index: {}]
  %s7 = inlined_call_operand.vmem [shape: bf16[2,8,256], index: 7, kind: input, shape index: {}]
  %s8 = inlined_call_operand.vmem [shape: f32[2,8,256], index: 8, kind: output, shape index: {}]
  %s9 = sld [smem:[#allocation0]]
  $region65: #{inception_forward.15} parent=0
    _
  %s11 = ssub.s32 1, %s9
  %s12 = scalar_select 0, %s11, %s9
  loop: start=0, step=1, limit=4
  $region2: #{inception_forward.15} parent=0 // loop_pre_header
    _
  $region3: #{inception_forward.15} parent=0 // loop_header
    %s14 = sphi 0, %s18
    %p15 = scmp.ge.s32.totalorder %s14, 4
    %s21 = sphi 0, %s33
    %s22 = sphi 0, %s29
    %s23 = sphi 0, %s21
    %s24 = sphi 0, %s22
    %s25 = sphi 0, %s23
    %s26 = sphi 0, %s24
    %s38 = sphi 0, %s40
    %s41 = sphi 0, %s38
    %s42 = sphi 0, %s41
    %s58 = sphi 0, %s42
    %s66 = sphi 0, %s68
    %s69 = sphi 0, %s66
    %s70 = sphi 0, %s69
    %s86 = sphi 0, %s70
    %s94 = sphi 0, %s96
    %s97 = sphi 0, %s94
    %s98 = sphi 0, %s97
    %s114 = sphi 0, %s98
    %s118 = sphi 0, %s118
    %s120 = sphi 0, %s118
    %s121 = sphi 0, %s120
    %s135 = sphi 0, %s121
    %s139 = sphi 0, %s139
    %s141 = sphi 0, %s139
    %s142 = sphi 0, %s141
    %s156 = sphi 0, %s142
    %s160 = sphi 0, %s160
    %s162 = sphi 0, %s160
    %s163 = sphi 0, %s162
    %s177 = sphi 0, %s163
    %s181 = sphi 0, %s181
    %s183 = sphi 0, %s181
    %s184 = sphi 0, %s183
    %s198 = sphi 0, %s184
    %s206 = sphi 0, %s208
    %s209 = sphi 0, %s206
    %s210 = sphi 0, %s209
    %s226 = sphi 0, %s210
    %s234 = sphi 0, %s236
    %s237 = sphi 0, %s234
    %s238 = sphi 0, %s237
    %s254 = sphi 0, %s238
  $region4: #{inception_forward.15} parent=0 // loop_header_branch
    %17 = sbr.rel (%p15) target = $region8
  $region5: #{inception_forward.15} parent=0 // loop_body
    %s19 = ssub.s32 %s14, 1
    %s20 = ssub.s32 %s14, 2
    %s27 = sadd.s32 1, %s22
    %p28 = scmp.ge.s32.totalorder %s27, 1
    %s29 = scalar_select %p28, 0, %s27
    %s30 = sadd.s32 1, %s21
    %s31 = scalar_select %p28, %s30, %s21
    %p32 = scmp.ge.s32.totalorder %s31, 2
    %s33 = scalar_select %p32, 0, %s31
    %s34 = ssub.s32 %s21, %s33
    %s35 = ssub.s32 %s22, %s29
    %s36 = sor.u32 %s34, %s35
    %p37 = scmp.eq.s32.totalorder %s36, 0
    %s39 = sadd.s32 %s38, 1
    %s40 = scalar_select %p37, %s38, %s39
    %p43 = pneg %p37
    %p44 = scmp.eq.s32.totalorder %s14, 1
    %p45 = por %p43, %p44
    %p46 = scmp.ne.s32.totalorder %s38, %s41
    %p47 = scmp.eq.s32.totalorder %s14, 0
    %p48 = por %p46, %p47
    %p49 = scmp.ne.s32.totalorder %s38, %s41
    %p50 = scmp.eq.s32.totalorder %s19, 1
    %p51 = por %p49, %p50
    %p52 = scmp.ne.s32.totalorder %s41, %s42
    %p53 = scmp.eq.s32.totalorder %s19, 0
    %p54 = por %p52, %p53
    %p55 = scmp.ne.s32.totalorder %s41, %s42
    %p56 = scmp.eq.s32.totalorder %s20, 1
    %p57 = por %p55, %p56
    %p59 = scmp.ne.s32.totalorder %s42, %s58
    %p60 = scmp.eq.s32.totalorder %s20, 0
    %p61 = por %p59, %p60
    %s62 = ssub.s32 %s21, %s33
    %s63 = ssub.s32 %s22, %s29
    %s64 = sor.u32 %s62, %s63
    %p65 = scmp.eq.s32.totalorder %s64, 0
    %s67 = sadd.s32 %s66, 1
    %s68 = scalar_select %p65, %s66, %s67
    %p71 = pneg %p65
    %p72 = scmp.eq.s32.totalorder %s14, 1
    %p73 = por %p71, %p72
    %p74 = scmp.ne.s32.totalorder %s66, %s69
    %p75 = scmp.eq.s32.totalorder %s14, 0
    %p76 = por %p74, %p75
    %p77 = scmp.ne.s32.totalorder %s66, %s69
    %p78 = scmp.eq.s32.totalorder %s19, 1
    %p79 = por %p77, %p78
    %p80 = scmp.ne.s32.totalorder %s69, %s70
    %p81 = scmp.eq.s32.totalorder %s19, 0
    %p82 = por %p80, %p81
    %p83 = scmp.ne.s32.totalorder %s69, %s70
    %p84 = scmp.eq.s32.totalorder %s20, 1
    %p85 = por %p83, %p84
    %p87 = scmp.ne.s32.totalorder %s70, %s86
    %p88 = scmp.eq.s32.totalorder %s20, 0
    %p89 = por %p87, %p88
    %s90 = ssub.s32 %s21, %s33
    %s91 = ssub.s32 %s22, %s29
    %s92 = sor.u32 %s90, %s91
    %p93 = scmp.eq.s32.totalorder %s92, 0
    %s95 = sadd.s32 %s94, 1
    %s96 = scalar_select %p93, %s94, %s95
    %p99 = pneg %p93
    %p100 = scmp.eq.s32.totalorder %s14, 1
    %p101 = por %p99, %p100
    %p102 = scmp.ne.s32.totalorder %s94, %s97
    %p103 = scmp.eq.s32.totalorder %s14, 0
    %p104 = por %p102, %p103
    %p105 = scmp.ne.s32.totalorder %s94, %s97
    %p106 = scmp.eq.s32.totalorder %s19, 1
    %p107 = por %p105, %p106
    %p108 = scmp.ne.s32.totalorder %s97, %s98
    %p109 = scmp.eq.s32.totalorder %s19, 0
    %p110 = por %p108, %p109
    %p111 = scmp.ne.s32.totalorder %s97, %s98
    %p112 = scmp.eq.s32.totalorder %s20, 1
    %p113 = por %p111, %p112
    %p115 = scmp.ne.s32.totalorder %s98, %s114
    %p116 = scmp.eq.s32.totalorder %s20, 0
    %p117 = por %p115, %p116
    %s119 = sadd.s32 %s118, 1
    %p122 = scmp.eq.s32.totalorder %s14, 1
    %p123 = scmp.ne.s32.totalorder %s118, %s120
    %p124 = scmp.eq.s32.totalorder %s14, 0
    %p125 = por %p123, %p124
    %p126 = scmp.ne.s32.totalorder %s118, %s120
    %p127 = scmp.eq.s32.totalorder %s19, 1
    %p128 = por %p126, %p127
    %p129 = scmp.ne.s32.totalorder %s120, %s121
    %p130 = scmp.eq.s32.totalorder %s19, 0
    %p131 = por %p129, %p130
    %p132 = scmp.ne.s32.totalorder %s120, %s121
    %p133 = scmp.eq.s32.totalorder %s20, 1
    %p134 = por %p132, %p133
    %p136 = scmp.ne.s32.totalorder %s121, %s135
    %p137 = scmp.eq.s32.totalorder %s20, 0
    %p138 = por %p136, %p137
    %s140 = sadd.s32 %s139, 1
    %p143 = scmp.eq.s32.totalorder %s14, 1
    %p144 = scmp.ne.s32.totalorder %s139, %s141
    %p145 = scmp.eq.s32.totalorder %s14, 0
    %p146 = por %p144, %p145
    %p147 = scmp.ne.s32.totalorder %s139, %s141
    %p148 = scmp.eq.s32.totalorder %s19, 1
    %p149 = por %p147, %p148
    %p150 = scmp.ne.s32.totalorder %s141, %s142
    %p151 = scmp.eq.s32.totalorder %s19, 0
    %p152 = por %p150, %p151
    %p153 = scmp.ne.s32.totalorder %s141, %s142
    %p154 = scmp.eq.s32.totalorder %s20, 1
    %p155 = por %p153, %p154
    %p157 = scmp.ne.s32.totalorder %s142, %s156
    %p158 = scmp.eq.s32.totalorder %s20, 0
    %p159 = por %p157, %p158
    %s161 = sadd.s32 %s160, 1
    %p164 = scmp.eq.s32.totalorder %s14, 1
    %p165 = scmp.ne.s32.totalorder %s160, %s162
    %p166 = scmp.eq.s32.totalorder %s14, 0
    %p167 = por %p165, %p166
    %p168 = scmp.ne.s32.totalorder %s160, %s162
    %p169 = scmp.eq.s32.totalorder %s19, 1
    %p170 = por %p168, %p169
    %p171 = scmp.ne.s32.totalorder %s162, %s163
    %p172 = scmp.eq.s32.totalorder %s19, 0
    %p173 = por %p171, %p172
    %p174 = scmp.ne.s32.totalorder %s162, %s163
    %p175 = scmp.eq.s32.totalorder %s20, 1
    %p176 = por %p174, %p175
    %p178 = scmp.ne.s32.totalorder %s163, %s177
    %p179 = scmp.eq.s32.totalorder %s20, 0
    %p180 = por %p178, %p179
    %s182 = sadd.s32 %s181, 1
    %p185 = scmp.eq.s32.totalorder %s14, 1
    %p186 = scmp.ne.s32.totalorder %s181, %s183
    %p187 = scmp.eq.s32.totalorder %s14, 0
    %p188 = por %p186, %p187
    %p189 = scmp.ne.s32.totalorder %s181, %s183
    %p190 = scmp.eq.s32.totalorder %s19, 1
    %p191 = por %p189, %p190
    %p192 = scmp.ne.s32.totalorder %s183, %s184
    %p193 = scmp.eq.s32.totalorder %s19, 0
    %p194 = por %p192, %p193
    %p195 = scmp.ne.s32.totalorder %s183, %s184
    %p196 = scmp.eq.s32.totalorder %s20, 1
    %p197 = por %p195, %p196
    %p199 = scmp.ne.s32.totalorder %s184, %s198
    %p200 = scmp.eq.s32.totalorder %s20, 0
    %p201 = por %p199, %p200
    %s202 = ssub.s32 %s21, %s33
    %s203 = ssub.s32 %s22, %s29
    %s204 = sor.u32 %s202, %s203
    %p205 = scmp.eq.s32.totalorder %s204, 0
    %s207 = sadd.s32 %s206, 1
    %s208 = scalar_select %p205, %s206, %s207
    %p211 = pneg %p205
    %p212 = scmp.eq.s32.totalorder %s14, 1
    %p213 = por %p211, %p212
    %p214 = scmp.ne.s32.totalorder %s206, %s209
    %p215 = scmp.eq.s32.totalorder %s14, 0
    %p216 = por %p214, %p215
    %p217 = scmp.ne.s32.totalorder %s206, %s209
    %p218 = scmp.eq.s32.totalorder %s19, 1
    %p219 = por %p217, %p218
    %p220 = scmp.ne.s32.totalorder %s209, %s210
    %p221 = scmp.eq.s32.totalorder %s19, 0
    %p222 = por %p220, %p221
    %p223 = scmp.ne.s32.totalorder %s209, %s210
    %p224 = scmp.eq.s32.totalorder %s20, 1
    %p225 = por %p223, %p224
    %p227 = scmp.ne.s32.totalorder %s210, %s226
    %p228 = scmp.eq.s32.totalorder %s20, 0
    %p229 = por %p227, %p228
    %s230 = ssub.s32 %s21, %s33
    %s231 = ssub.s32 %s22, %s29
    %s232 = sor.u32 %s230, %s231
    %p233 = scmp.eq.s32.totalorder %s232, 0
    %s235 = sadd.s32 %s234, 1
    %s236 = scalar_select %p233, %s234, %s235
    %p239 = pneg %p233
    %p240 = scmp.eq.s32.totalorder %s14, 1
    %p241 = por %p239, %p240
    %p242 = scmp.ne.s32.totalorder %s234, %s237
    %p243 = scmp.eq.s32.totalorder %s14, 0
    %p244 = por %p242, %p243
    %p245 = scmp.ne.s32.totalorder %s234, %s237
    %p246 = scmp.eq.s32.totalorder %s19, 1
    %p247 = por %p245, %p246
    %p248 = scmp.ne.s32.totalorder %s237, %s238
    %p249 = scmp.eq.s32.totalorder %s19, 0
    %p250 = por %p248, %p249
    %p251 = scmp.ne.s32.totalorder %s237, %s238
    %p252 = scmp.eq.s32.totalorder %s20, 1
    %p253 = por %p251, %p252
    %p255 = scmp.ne.s32.totalorder %s238, %s254
    %p256 = scmp.eq.s32.totalorder %s20, 0
    %p257 = por %p255, %p256
    %p258 = scmp.le.s32.totalorder 1, %s14
    %p259 = scmp.lt.s32.totalorder %s14, 3
    %p260 = pnand %p258, %p259
    %p261 = pneg %p260
    // Predicated region
    $region9: #{inception_forward.15} parent=5 // pred_check
      _
    $region10: #{inception_forward.15} parent=5 // pred_check_branch
      %263 = sbr.rel (%p260) target = $region12
    $region11: #{inception_forward.15} parent=5 // pred_region
      %s264 = ssub.s32 %s14, 1
      // Predicated region
      $region13: #{inception_forward.15} parent=11 // pred_check
        %p265 = pneg %p131
      $region14: #{inception_forward.15} parent=11 // pred_check_branch
        %267 = sbr.rel (%p265) target = $region16
      $region15: #{inception_forward.15} parent=11 // pred_region
        _
      $region16: #{inception_forward.15} parent=11 // pred_fallthru
        _
      // Predicated region
      $region17: #{inception_forward.15} parent=11 // pred_check
        %p268 = pneg %p152
      $region18: #{inception_forward.15} parent=11 // pred_check_branch
        %270 = sbr.rel (%p268) target = $region20
      $region19: #{inception_forward.15} parent=11 // pred_region
        _
      $region20: #{inception_forward.15} parent=11 // pred_fallthru
        _
      // Predicated region
      $region21: #{inception_forward.15} parent=11 // pred_check
        %p271 = pneg %p173
      $region22: #{inception_forward.15} parent=11 // pred_check_branch
        %273 = sbr.rel (%p271) target = $region24
      $region23: #{inception_forward.15} parent=11 // pred_region
        _
      $region24: #{inception_forward.15} parent=11 // pred_fallthru
        _
      // Predicated region
      $region25: #{inception_forward.15} parent=11 // pred_check
        %p274 = pneg %p194
      $region26: #{inception_forward.15} parent=11 // pred_check_branch
        %276 = sbr.rel (%p274) target = $region28
      $region27: #{inception_forward.15} parent=11 // pred_region
        _
      $region28: #{inception_forward.15} parent=11 // pred_fallthru
        _
    $region12: #{inception_forward.15} parent=5 // pred_fallthru
      _
    %p277 = scmp.lt.s32.totalorder %s14, 2
    // Predicated region
    $region29: #{inception_forward.15} parent=5 // pred_check
      %p278 = pneg %p277
    $region30: #{inception_forward.15} parent=5 // pred_check_branch
      %280 = sbr.rel (%p278) target = $region32
    $region31: #{inception_forward.15} parent=5 // pred_region
      // Predicated region
      $region33: #{inception_forward.15} parent=31 // pred_check
        %p281 = pneg %p48
      $region34: #{inception_forward.15} parent=31 // pred_check_branch
        %283 = sbr.rel (%p281) target = $region36
      $region35: #{inception_forward.15} parent=31 // pred_region
        %s284 = smul.u32 2, %s22
        %p285 = scmp.lt.s32.totalorder %s21, 1
        %s286 = scalar_select %p285, %s21, 1
        %p287 = scmp.lt.s32.totalorder %s284, 1
        %s288 = scalar_select %p287, %s284, 1
        %s289 = smul.addr %s286, 2
        %s290 = sadd.s32 %s288, %s289
        %s291 = smul.addr %s290, 2
        %s292 = scalar_lea.vmem %s0, %s291
        %s293 = smul.u32 2, %s22
      $region36: #{inception_forward.15} parent=31 // pred_fallthru
        _
      // Predicated region
      $region37: #{inception_forward.15} parent=31 // pred_check
        %p294 = pneg %p76
      $region38: #{inception_forward.15} parent=31 // pred_check_branch
        %296 = sbr.rel (%p294) target = $region40
      $region39: #{inception_forward.15} parent=31 // pred_region
        %s297 = smul.u32 2, %s22
        %p298 = scmp.lt.s32.totalorder %s21, 1
        %s299 = scalar_select %p298, %s21, 1
        %p300 = scmp.lt.s32.totalorder %s297, 1
        %s301 = scalar_select %p300, %s297, 1
        %s302 = smul.addr %s299, 2
        %s303 = sadd.s32 %s301, %s302
        %s304 = smul.addr %s303, 2
        %s305 = scalar_lea.vmem %s1, %s304
        %s306 = smul.u32 2, %s22
      $region40: #{inception_forward.15} parent=31 // pred_fallthru
        _
      // Predicated region
      $region41: #{inception_forward.15} parent=31 // pred_check
        %p307 = pneg %p104
      $region42: #{inception_forward.15} parent=31 // pred_check_branch
        %309 = sbr.rel (%p307) target = $region44
      $region43: #{inception_forward.15} parent=31 // pred_region
        %s310 = smul.u32 2, %s22
        %p311 = scmp.lt.s32.totalorder %s21, 1
        %s312 = scalar_select %p311, %s21, 1
        %p313 = scmp.lt.s32.totalorder %s310, 1
        %s314 = scalar_select %p313, %s310, 1
        %s315 = smul.addr %s312, 2
        %s316 = sadd.s32 %s314, %s315
        %s317 = smul.addr %s316, 2
        %s318 = scalar_lea.vmem %s2, %s317
        %s319 = smul.u32 2, %s22
      $region44: #{inception_forward.15} parent=31 // pred_fallthru
        _
      // Predicated region
      $region45: #{inception_forward.15} parent=31 // pred_check
        %p320 = pneg %p216
      $region46: #{inception_forward.15} parent=31 // pred_check_branch
        %322 = sbr.rel (%p320) target = $region48
      $region47: #{inception_forward.15} parent=31 // pred_region
        %s323 = smul.u32 2, %s22
        %p324 = scmp.lt.s32.totalorder %s21, 1
        %s325 = scalar_select %p324, %s21, 1
        %p326 = scmp.lt.s32.totalorder %s323, 1
        %s327 = scalar_select %p326, %s323, 1
        %s328 = smul.addr %s325, 2
        %s329 = sadd.s32 %s327, %s328
        %s330 = smul.addr %s329, 4
        %s331 = scalar_lea.vmem %s7, %s330
        %s332 = smul.u32 2, %s22
      $region48: #{inception_forward.15} parent=31 // pred_fallthru
        _
    $region32: #{inception_forward.15} parent=5 // pred_fallthru
      _
    %p333 = scmp.le.s32.totalorder 1, %s14
    %p334 = scmp.lt.s32.totalorder %s14, 3
    %p335 = pnand %p333, %p334
    %p336 = pneg %p335
    // Predicated region
    $region49: #{inception_forward.15} parent=5 // pred_check
      _
    $region50: #{inception_forward.15} parent=5 // pred_check_branch
      %338 = sbr.rel (%p335) target = $region52
    $region51: #{inception_forward.15} parent=5 // pred_region
      %s339 = ssub.s32 %s14, 1
      %s340 = smul.u32 2, %s24
      %p341 = scmp.lt.s32.totalorder %s23, 1
      %s342 = scalar_select %p341, %s23, 1
      %p343 = scmp.lt.s32.totalorder %s340, 1
      %s344 = scalar_select %p343, %s340, 1
      %s345 = smul.addr %s342, 2
      %s346 = sadd.s32 %s344, %s345
      %s347 = smul.addr %s346, 2
      %s348 = scalar_lea.vmem %s0, %s347
      %p349 = pneg %p54
      %p350 = pneg %p51
      %s351 = smul.u32 2, %s24
      %p352 = scmp.lt.s32.totalorder %s23, 1
      %s353 = scalar_select %p352, %s23, 1
      %p354 = scmp.lt.s32.totalorder %s351, 1
      %s355 = scalar_select %p354, %s351, 1
      %s356 = smul.addr %s353, 2
      %s357 = sadd.s32 %s355, %s356
      %s358 = smul.addr %s357, 2
      %s359 = scalar_lea.vmem %s1, %s358
      %p360 = pneg %p82
      %p361 = pneg %p79
      %s362 = smul.u32 2, %s24
      %p363 = scmp.lt.s32.totalorder %s23, 1
      %s364 = scalar_select %p363, %s23, 1
      %p365 = scmp.lt.s32.totalorder %s362, 1
      %s366 = scalar_select %p365, %s362, 1
      %s367 = smul.addr %s364, 2
      %s368 = sadd.s32 %s366, %s367
      %s369 = smul.addr %s368, 2
      %s370 = scalar_lea.vmem %s2, %s369
      %p371 = pneg %p110
      %p372 = pneg %p107
      %p373 = pneg %p131
      %p374 = pneg %p128
      %p375 = pneg %p152
      %p376 = pneg %p149
      %p377 = pneg %p173
      %p378 = pneg %p170
      %p379 = pneg %p194
      %p380 = pneg %p191
      %s381 = smul.u32 2, %s24
      %p382 = scmp.lt.s32.totalorder %s23, 1
      %s383 = scalar_select %p382, %s23, 1
      %p384 = scmp.lt.s32.totalorder %s381, 1
      %s385 = scalar_select %p384, %s381, 1
      %s386 = smul.addr %s383, 2
      %s387 = sadd.s32 %s385, %s386
      %s388 = smul.addr %s387, 4
      %s389 = scalar_lea.vmem %s7, %s388
      %p390 = pneg %p222
      %p391 = pneg %p219
      %p392 = pneg %p250
      %p393 = pneg %p247
      %s394 = smul.u32 2, %s24
      %p395 = scmp.lt.s32.totalorder %s23, 1
      %s396 = scalar_select %p395, %s23, 1
      %p397 = scmp.lt.s32.totalorder %s394, 1
      %s398 = scalar_select %p397, %s394, 1
      %s399 = smul.addr %s396, 2
      %s400 = sadd.s32 %s398, %s399
      %s401 = smul.addr %s400, 8
      %s402 = scalar_lea.vmem %s8, %s401
      %s403 = smul.u32 2, %s24
      %p404 = scmp.lt.s32.totalorder %s23, 1
      %s405 = scalar_select %p404, %s23, 1
      %p406 = scmp.lt.s32.totalorder %s403, 1
      %s407 = scalar_select %p406, %s403, 1
      %s408 = smul.addr %s405, 2
      %s409 = sadd.s32 %s407, %s408
      %s410 = smul.addr %s409, 2
      %s411 = scalar_lea.vmem %s0, %s410
      %s412 = smul.u32 2, %s24
      %s413 = smul.u32 2, %s24
      %p414 = scmp.lt.s32.totalorder %s23, 1
      %s415 = scalar_select %p414, %s23, 1
      %p416 = scmp.lt.s32.totalorder %s413, 1
      %s417 = scalar_select %p416, %s413, 1
      %s418 = smul.addr %s415, 2
      %s419 = sadd.s32 %s417, %s418
      %s420 = smul.addr %s419, 2
      %s421 = scalar_lea.vmem %s1, %s420
      %s422 = smul.u32 2, %s24
      %s423 = smul.u32 2, %s24
      %p424 = scmp.lt.s32.totalorder %s23, 1
      %s425 = scalar_select %p424, %s23, 1
      %p426 = scmp.lt.s32.totalorder %s423, 1
      %s427 = scalar_select %p426, %s423, 1
      %s428 = smul.addr %s425, 2
      %s429 = sadd.s32 %s427, %s428
      %s430 = smul.addr %s429, 2
      %s431 = scalar_lea.vmem %s2, %s430
      %s432 = smul.u32 2, %s24
      %s433 = smul.u32 2, %s24
      %p434 = scmp.lt.s32.totalorder %s23, 1
      %s435 = scalar_select %p434, %s23, 1
      %p436 = scmp.lt.s32.totalorder %s433, 1
      %s437 = scalar_select %p436, %s433, 1
      %s438 = smul.addr %s435, 2
      %s439 = sadd.s32 %s437, %s438
      %s440 = smul.addr %s439, 4
      %s441 = scalar_lea.vmem %s7, %s440
      %s442 = smul.u32 2, %s24
      %s443 = smul.u32 2, %s24
      %p444 = scmp.lt.s32.totalorder %s23, 1
      %s445 = scalar_select %p444, %s23, 1
      %p446 = scmp.lt.s32.totalorder %s443, 1
      %s447 = scalar_select %p446, %s443, 1
      %s448 = smul.addr %s445, 2
      %s449 = sadd.s32 %s447, %s448
      %s450 = smul.addr %s449, 8
      %s451 = scalar_lea.vmem %s8, %s450
      %s452 = smul.u32 2, %s24
      %v454 = vld [vmem:[%s3] sm:$0xf]
      %v455 = vld [vmem:[%s411] sm:$0xf]
      %v456 = vld [vmem:[%s4] sm:$0xf]
      %v457 = vld [vmem:[%s421] sm:$0xf]
      %v460 = vunpack.c.l.s4 1983009808
      %v461 = vunpack.c.0.s8 %v460
      %v462 = vlaneseq
      %v463 = vshrl.u32 %v462, 7
      %v464 = vsub.s32 %v461, %v463
      %v465 = vrot.slane %v457, %v464
      %v466 = vcombine.high %v465, %v465
      %vm467 = vcmask 31744
      %v469 = vsel %vm467, %v456, 0
      %vm471 = vcmask 1041408
      %v473 = vsel %vm471, %v465, 0
      %v476 = vsel %vm471, %v466, 0
      %478 = vmatprep.subr.bf16.mxu0 %v476
      %479 = vmatpush1.bf16.msra.mxu0 %v473
      %480 = vmatprep.subr.bf16.mxu0 0
      %481 = vmatpush1.bf16.msra.mxu0 0
      %482 = vmatprep.subr.bf16.mxu0 0
      %483 = vmatpush1.bf16.msra.mxu0 0
      %484 = vmatprep.subr.bf16.mxu0 0
      %485 = vmatpush1.bf16.msra.mxu0 0
      %486 = vmatprep.subr.bf16.mxu0 0
      %487 = vmatpush1.bf16.msra.mxu0 0
      %488 = vmatprep.subr.bf16.mxu0 0
      %489 = vmatpush1.bf16.msra.mxu0 0
      %490 = vmatprep.subr.bf16.mxu0 0
      %491 = vmatpush1.bf16.msra.mxu0 0
      %492 = vmatprep.subr.bf16.mxu0 0
      %493 = vmatpush1.bf16.msra.mxu0 0
      %494 = vmatprep.subr.bf16.mxu0 0
      %495 = vmatpush1.bf16.msra.mxu0 0
      %496 = vmatprep.subr.bf16.mxu0 0
      %497 = vmatpush1.bf16.msra.mxu0 0
      %498 = vmatprep.subr.bf16.mxu0 0
      %499 = vmatpush1.bf16.msra.mxu0 0
      %500 = vmatprep.subr.bf16.mxu0 0
      %501 = vmatpush1.bf16.msra.mxu0 0
      %502 = vmatprep.subr.bf16.mxu0 0
      %503 = vmatpush1.bf16.msra.mxu0 0
      %504 = vmatprep.subr.bf16.mxu0 0
      %505 = vmatpush1.bf16.msra.mxu0 0
      %506 = vmatprep.subr.bf16.mxu0 0
      %507 = vmatpush1.bf16.msra.mxu0 0
      %508 = vmatprep.subr.bf16.mxu0 0
      %509 = vmatpush1.bf16.msra.mxu0 0
      %510 = vmatprep.mubr.bf16.mxu0 0
      %511 = vmatmul.mubr.bf16.gmra.mrb[0].mxu0 %v469
      %v512 = vpop.f32.mrb[0].mxu0
      %v513 = vadd.f32 0.0, %v512
      %v514 = vpop.f32.mrb[0].mxu0
      %v515 = vadd.f32 0.0, %v514
      %v516 = vpop.f32.mrb[0].mxu0
      %v517 = vpop.f32.mrb[0].mxu0
      %518 = vdwg.mxu0
      %v521 = vunpack.c.l.s4 1983009808
      %v522 = vunpack.c.0.s8 %v521
      %v523 = vlaneseq
      %v524 = vshrl.u32 %v523, 7
      %v525 = vsub.s32 %v522, %v524
      %v526 = vrot.slane %v455, %v525
      %v527 = vcombine.high %v526, %v526
      %v529 = vsel %vm467, %v454, 0
      %v532 = vsel %vm471, %v526, 0
      %v535 = vsel %vm471, %v527, 0
      %537 = vmatprep.subr.bf16.mxu0 %v535
      %538 = vmatpush1.bf16.msra.mxu0 %v532
      %539 = vmatprep.subr.bf16.mxu0 0
      %540 = vmatpush1.bf16.msra.mxu0 0
      %541 = vmatprep.subr.bf16.mxu0 0
      %542 = vmatpush1.bf16.msra.mxu0 0
      %543 = vmatprep.subr.bf16.mxu0 0
      %544 = vmatpush1.bf16.msra.mxu0 0
      %545 = vmatprep.subr.bf16.mxu0 0
      %546 = vmatpush1.bf16.msra.mxu0 0
      %547 = vmatprep.subr.bf16.mxu0 0
      %548 = vmatpush1.bf16.msra.mxu0 0
      %549 = vmatprep.subr.bf16.mxu0 0
      %550 = vmatpush1.bf16.msra.mxu0 0
      %551 = vmatprep.subr.bf16.mxu0 0
      %552 = vmatpush1.bf16.msra.mxu0 0
      %553 = vmatprep.subr.bf16.mxu0 0
      %554 = vmatpush1.bf16.msra.mxu0 0
      %555 = vmatprep.subr.bf16.mxu0 0
      %556 = vmatpush1.bf16.msra.mxu0 0
      %557 = vmatprep.subr.bf16.mxu0 0
      %558 = vmatpush1.bf16.msra.mxu0 0
      %559 = vmatprep.subr.bf16.mxu0 0
      %560 = vmatpush1.bf16.msra.mxu0 0
      %561 = vmatprep.subr.bf16.mxu0 0
      %562 = vmatpush1.bf16.msra.mxu0 0
      %563 = vmatprep.subr.bf16.mxu0 0
      %564 = vmatpush1.bf16.msra.mxu0 0
      %565 = vmatprep.subr.bf16.mxu0 0
      %566 = vmatpush1.bf16.msra.mxu0 0
      %567 = vmatprep.subr.bf16.mxu0 0
      %568 = vmatpush1.bf16.msra.mxu0 0
      %569 = vmatprep.mubr.bf16.mxu0 0
      %570 = vmatmul.mubr.bf16.gmra.mrb[0].mxu0 %v529
      %v571 = vpop.f32.mrb[0].mxu0
      %v572 = vadd.f32 %v513, %v571
      %v573 = vpop.f32.mrb[0].mxu0
      %v574 = vadd.f32 %v515, %v573
      %v575 = vpop.f32.mrb[0].mxu0
      %v576 = vpop.f32.mrb[0].mxu0
      %577 = vdwg.mxu0
      %v578 = vld [vmem:[%s5] sm:$0xf]
      %v579 = vld [vmem:[%s431] sm:$0xf]
      %v582 = vunpack.c.l.s4 1983009808
      %v583 = vunpack.c.0.s8 %v582
      %v584 = vlaneseq
      %v585 = vshrl.u32 %v584, 7
      %v586 = vsub.s32 %v583, %v585
      %v587 = vrot.slane %v579, %v586
      %v588 = vcombine.high %v587, %v587
      %v590 = vsel %vm467, %v578, 0
      %v593 = vsel %vm471, %v587, 0
      %v596 = vsel %vm471, %v588, 0
      %598 = vmatprep.subr.bf16.mxu0 %v596
      %599 = vmatpush1.bf16.msra.mxu0 %v593
      %600 = vmatprep.subr.bf16.mxu0 0
      %601 = vmatpush1.bf16.msra.mxu0 0
      %602 = vmatprep.subr.bf16.mxu0 0
      %603 = vmatpush1.bf16.msra.mxu0 0
      %604 = vmatprep.subr.bf16.mxu0 0
      %605 = vmatpush1.bf16.msra.mxu0 0
      %606 = vmatprep.subr.bf16.mxu0 0
      %607 = vmatpush1.bf16.msra.mxu0 0
      %608 = vmatprep.subr.bf16.mxu0 0
      %609 = vmatpush1.bf16.msra.mxu0 0
      %610 = vmatprep.subr.bf16.mxu0 0
      %611 = vmatpush1.bf16.msra.mxu0 0
      %612 = vmatprep.subr.bf16.mxu0 0
      %613 = vmatpush1.bf16.msra.mxu0 0
      %614 = vmatprep.subr.bf16.mxu0 0
      %615 = vmatpush1.bf16.msra.mxu0 0
      %616 = vmatprep.subr.bf16.mxu0 0
      %617 = vmatpush1.bf16.msra.mxu0 0
      %618 = vmatprep.subr.bf16.mxu0 0
      %619 = vmatpush1.bf16.msra.mxu0 0
      %620 = vmatprep.subr.bf16.mxu0 0
      %621 = vmatpush1.bf16.msra.mxu0 0
      %622 = vmatprep.subr.bf16.mxu0 0
      %623 = vmatpush1.bf16.msra.mxu0 0
      %624 = vmatprep.subr.bf16.mxu0 0
      %625 = vmatpush1.bf16.msra.mxu0 0
      %626 = vmatprep.subr.bf16.mxu0 0
      %627 = vmatpush1.bf16.msra.mxu0 0
      %628 = vmatprep.subr.bf16.mxu0 0
      %629 = vmatpush1.bf16.msra.mxu0 0
      %630 = vmatprep.mubr.bf16.mxu0 0
      %631 = vmatmul.mubr.bf16.gmra.mrb[0].mxu0 %v590
      %v632 = vpop.f32.mrb[0].mxu0
      %v633 = vadd.f32 0.0, %v632
      %v634 = vpop.f32.mrb[0].mxu0
      %v635 = vadd.f32 0.0, %v634
      %v636 = vpop.f32.mrb[0].mxu0
      %v637 = vpop.f32.mrb[0].mxu0
      %638 = vdwg.mxu0
      %v639 = vadd.f32 %v572, %v633
      %v640 = vadd.f32 %v574, %v635
      %v641 = vld [vmem:[%s6] sm:$0xff]
      %643 = vset.pattern.permute.xlu0 0
      %644 = vperm.xlu0 %643, %v641
      %v645 = vpop.permute.xlu0 %644
      %v647 = vadd.f32 %v639, %v645
      %v648 = vadd.f32 %v640, %v645
      %v649 = vld [vmem:[%s441] sm:$0xff]
      %v650 = vunpack.c.l.bf16 %v649
      %v651 = vunpack.c.h.bf16 %v649
      %v652 = vadd.f32 %v647, %v650
      %v653 = vadd.f32 %v648, %v651
      %v654 = vmax.f32 %v652, 0.0
      %v655 = vmax.f32 %v653, 0.0
      %656 = vst [vmem:[%s451] sm:$0xff] %v654
      %657 = vst [vmem:[%s451 + $0x8] sm:$0xff] %v655
      %s658 = smul.u32 2, %s24
      %p659 = scmp.lt.s32.totalorder %s23, 1
      %s660 = scalar_select %p659, %s23, 1
      %p661 = scmp.lt.s32.totalorder %s658, 1
      %s662 = scalar_select %p661, %s658, 1
      %s663 = smul.addr %s660, 2
      %s664 = sadd.s32 %s662, %s663
      %s665 = smul.addr %s664, 8
      %s666 = scalar_lea.vmem %s8, %s665
      // Predicated region
      $region53: #{inception_forward.15} parent=51 // pred_check
        %p667 = pneg %p247
      $region54: #{inception_forward.15} parent=51 // pred_check_branch
        %669 = sbr.rel (%p667) target = $region56
      $region55: #{inception_forward.15} parent=51 // pred_region
        %s670 = smul.u32 2, %s24
      $region56: #{inception_forward.15} parent=51 // pred_fallthru
        _
    $region52: #{inception_forward.15} parent=5 // pred_fallthru
      _
    %p671 = scmp.le.s32.totalorder 2, %s14
    // Predicated region
    $region57: #{inception_forward.15} parent=5 // pred_check
      %p672 = pneg %p671
    $region58: #{inception_forward.15} parent=5 // pred_check_branch
      %674 = sbr.rel (%p672) target = $region60
    $region59: #{inception_forward.15} parent=5 // pred_region
      %s675 = ssub.s32 %s14, 2
      // Predicated region
      $region61: #{inception_forward.15} parent=59 // pred_check
        %p676 = pneg %p253
      $region62: #{inception_forward.15} parent=59 // pred_check_branch
        %678 = sbr.rel (%p676) target = $region64
      $region63: #{inception_forward.15} parent=59 // pred_region
        %s679 = smul.u32 2, %s26
        %p680 = scmp.lt.s32.totalorder %s25, 1
        %s681 = scalar_select %p680, %s25, 1
        %p682 = scmp.lt.s32.totalorder %s679, 1
        %s683 = scalar_select %p682, %s679, 1
        %s684 = smul.addr %s681, 2
        %s685 = sadd.s32 %s683, %s684
        %s686 = smul.addr %s685, 8
        %s687 = scalar_lea.vmem %s8, %s686
      $region64: #{inception_forward.15} parent=59 // pred_fallthru
        _
    $region60: #{inception_forward.15} parent=5 // pred_fallthru
      _
  $region6: #{inception_forward.15} parent=0 // loop_footer
    %s18 = sadd.s32 1, %s14
  $region7: #{inception_forward.15} parent=0 // loop_footer_branch
    %13 = sbr.rel target = $region3
  $region8: #{inception_forward.15} parent=0 // loop_exit
    _

// kernel: inception_forward.11
$region0: #{inception_forward.11}
  #allocation0 [shape = 'u32[]', space=smem, size = 0x4, offset = 0x4, fixed_abs, tag = 'smem constant byte address 0x4 - core index']
  #allocation1 [shape = 'u32[144,128]{1,0:T(1,128)}', space=vmem, size = 0x12000, scoped, tag = 'internal scratch']
  #allocation2 [shape = 'bf16[36,256]{1,0:T(8,128)(2,1)}', space=vmem, size = 0x5000, scoped, tag = 'scratch operand']
  %s0 = inlined_call_operand.vmem [shape: bf16[2,4,18,18], index: 0, kind: input, shape index: {}]
  %s1 = inlined_call_operand.vmem [shape: bf16[4,36], index: 1, kind: input, shape index: {}]
  %s2 = inlined_call_operand.vmem [shape: f32[4,1], index: 2, kind: input, shape index: {}]
  %s3 = inlined_call_operand.vmem [shape: bf16[2,4,256], index: 3, kind: output, shape index: {}]
  %s4 = sld [smem:[#allocation0]]
  $region45: #{inception_forward.11} parent=0
    _
  %s6 = ssub.s32 1, %s4
  %s7 = scalar_select 0, %s6, %s4
  loop: start=0, step=1, limit=4
  $region2: #{inception_forward.11} parent=0 // loop_pre_header
    _
  $region3: #{inception_forward.11} parent=0 // loop_header
    %s9 = sphi 0, %s13
    %p10 = scmp.ge.s32.totalorder %s9, 4
    %s19 = sphi 0, %s21
    %s22 = sphi 0, %s19
    %s23 = sphi 0, %s22
    %s39 = sphi 0, %s23
    %s43 = sphi 0, %s43
    %s45 = sphi 0, %s43
    %s46 = sphi 0, %s45
    %s60 = sphi 0, %s46
    %s64 = sphi 0, %s64
    %s66 = sphi 0, %s64
    %s67 = sphi 0, %s66
    %s81 = sphi 0, %s67
    %s87 = sphi 0, %s89
    %s90 = sphi 0, %s87
    %s91 = sphi 0, %s90
    %s107 = sphi 0, %s91
  $region4: #{inception_forward.11} parent=0 // loop_header_branch
    %12 = sbr.rel (%p10) target = $region8
  $region5: #{inception_forward.11} parent=0 // loop_body
    %s14 = ssub.s32 %s9, 1
    %s15 = ssub.s32 %s9, 2
    %s16 = sadd.s32 %s9, 1
    %s17 = ssub.s32 %s9, %s16
    %p18 = scmp.eq.s32.totalorder %s17, 0
    %s20 = sadd.s32 %s19, 1
    %s21 = scalar_select %p18, %s19, %s20
    %p24 = pneg %p18
    %p25 = scmp.eq.s32.totalorder %s9, 1
    %p26 = por %p24, %p25
    %p27 = scmp.ne.s32.totalorder %s19, %s22
    %p28 = scmp.eq.s32.totalorder %s9, 0
    %p29 = por %p27, %p28
    %p30 = scmp.ne.s32.totalorder %s19, %s22
    %p31 = scmp.eq.s32.totalorder %s14, 1
    %p32 = por %p30, %p31
    %p33 = scmp.ne.s32.totalorder %s22, %s23
    %p34 = scmp.eq.s32.totalorder %s14, 0
    %p35 = por %p33, %p34
    %p36 = scmp.ne.s32.totalorder %s22, %s23
    %p37 = scmp.eq.s32.totalorder %s15, 1
    %p38 = por %p36, %p37
    %p40 = scmp.ne.s32.totalorder %s23, %s39
    %p41 = scmp.eq.s32.totalorder %s15, 0
    %p42 = por %p40, %p41
    %s44 = sadd.s32 %s43, 1
    %p47 = scmp.eq.s32.totalorder %s9, 1
    %p48 = scmp.ne.s32.totalorder %s43, %s45
    %p49 = scmp.eq.s32.totalorder %s9, 0
    %p50 = por %p48, %p49
    %p51 = scmp.ne.s32.totalorder %s43, %s45
    %p52 = scmp.eq.s32.totalorder %s14, 1
    %p53 = por %p51, %p52
    %p54 = scmp.ne.s32.totalorder %s45, %s46
    %p55 = scmp.eq.s32.totalorder %s14, 0
    %p56 = por %p54, %p55
    %p57 = scmp.ne.s32.totalorder %s45, %s46
    %p58 = scmp.eq.s32.totalorder %s15, 1
    %p59 = por %p57, %p58
    %p61 = scmp.ne.s32.totalorder %s46, %s60
    %p62 = scmp.eq.s32.totalorder %s15, 0
    %p63 = por %p61, %p62
    %s65 = sadd.s32 %s64, 1
    %p68 = scmp.eq.s32.totalorder %s9, 1
    %p69 = scmp.ne.s32.totalorder %s64, %s66
    %p70 = scmp.eq.s32.totalorder %s9, 0
    %p71 = por %p69, %p70
    %p72 = scmp.ne.s32.totalorder %s64, %s66
    %p73 = scmp.eq.s32.totalorder %s14, 1
    %p74 = por %p72, %p73
    %p75 = scmp.ne.s32.totalorder %s66, %s67
    %p76 = scmp.eq.s32.totalorder %s14, 0
    %p77 = por %p75, %p76
    %p78 = scmp.ne.s32.totalorder %s66, %s67
    %p79 = scmp.eq.s32.totalorder %s15, 1
    %p80 = por %p78, %p79
    %p82 = scmp.ne.s32.totalorder %s67, %s81
    %p83 = scmp.eq.s32.totalorder %s15, 0
    %p84 = por %p82, %p83
    %s85 = ssub.s32 %s9, %s16
    %p86 = scmp.eq.s32.totalorder %s85, 0
    %s88 = sadd.s32 %s87, 1
    %s89 = scalar_select %p86, %s87, %s88
    %p92 = pneg %p86
    %p93 = scmp.eq.s32.totalorder %s9, 1
    %p94 = por %p92, %p93
    %p95 = scmp.ne.s32.totalorder %s87, %s90
    %p96 = scmp.eq.s32.totalorder %s9, 0
    %p97 = por %p95, %p96
    %p98 = scmp.ne.s32.totalorder %s87, %s90
    %p99 = scmp.eq.s32.totalorder %s14, 1
    %p100 = por %p98, %p99
    %p101 = scmp.ne.s32.totalorder %s90, %s91
    %p102 = scmp.eq.s32.totalorder %s14, 0
    %p103 = por %p101, %p102
    %p104 = scmp.ne.s32.totalorder %s90, %s91
    %p105 = scmp.eq.s32.totalorder %s15, 1
    %p106 = por %p104, %p105
    %p108 = scmp.ne.s32.totalorder %s91, %s107
    %p109 = scmp.eq.s32.totalorder %s15, 0
    %p110 = por %p108, %p109
    %p111 = scmp.le.s32.totalorder 1, %s9
    %p112 = scmp.lt.s32.totalorder %s9, 3
    %p113 = pnand %p111, %p112
    %p114 = pneg %p113
    // Predicated region
    $region9: #{inception_forward.11} parent=5 // pred_check
      _
    $region10: #{inception_forward.11} parent=5 // pred_check_branch
      %116 = sbr.rel (%p113) target = $region12
    $region11: #{inception_forward.11} parent=5 // pred_region
      %s117 = ssub.s32 %s9, 1
      // Predicated region
      $region13: #{inception_forward.11} parent=11 // pred_check
        %p118 = pneg %p56
      $region14: #{inception_forward.11} parent=11 // pred_check_branch
        %120 = sbr.rel (%p118) target = $region16
      $region15: #{inception_forward.11} parent=11 // pred_region
        _
      $region16: #{inception_forward.11} parent=11 // pred_fallthru
        _
      // Predicated region
      $region17: #{inception_forward.11} parent=11 // pred_check
        %p121 = pneg %p77
      $region18: #{inception_forward.11} parent=11 // pred_check_branch
        %123 = sbr.rel (%p121) target = $region20
      $region19: #{inception_forward.11} parent=11 // pred_region
        _
      $region20: #{inception_forward.11} parent=11 // pred_fallthru
        _
    $region12: #{inception_forward.11} parent=5 // pred_fallthru
      _
    %p124 = scmp.lt.s32.totalorder %s9, 2
    // Predicated region
    $region21: #{inception_forward.11} parent=5 // pred_check
      %p125 = pneg %p124
    $region22: #{inception_forward.11} parent=5 // pred_check_branch
      %127 = sbr.rel (%p125) target = $region24
    $region23: #{inception_forward.11} parent=5 // pred_region
      // Predicated region
      $region25: #{inception_forward.11} parent=23 // pred_check
        %p128 = pneg %p29
      $region26: #{inception_forward.11} parent=23 // pred_check_branch
        %130 = sbr.rel (%p128) target = $region28
      $region27: #{inception_forward.11} parent=23 // pred_region
        %p131 = scmp.lt.s32.totalorder %s9, 1
        %s132 = scalar_select %p131, %s9, 1
        %s133 = smul.addr %s132, 12
        %s134 = smul.addr %s133, 4
        %s135 = scalar_lea.vmem %s0, %s134
      $region28: #{inception_forward.11} parent=23 // pred_fallthru
        _
    $region24: #{inception_forward.11} parent=5 // pred_fallthru
      _
    %p136 = scmp.le.s32.totalorder 1, %s9
    %p137 = scmp.lt.s32.totalorder %s9, 3
    %p138 = pnand %p136, %p137
    %p139 = pneg %p138
    // Predicated region
    $region29: #{inception_forward.11} parent=5 // pred_check
      _
    $region30: #{inception_forward.11} parent=5 // pred_check_branch
      %141 = sbr.rel (%p138) target = $region32
    $region31: #{inception_forward.11} parent=5 // pred_region
      %s142 = ssub.s32 %s9, 1
      %p143 = scmp.lt.s32.totalorder %s14, 1
      %s144 = scalar_select %p143, %s14, 1
      %s145 = smul.addr %s144, 12
      %s146 = smul.addr %s145, 4
      %s147 = scalar_lea.vmem %s0, %s146
      %p148 = pneg %p35
      %p149 = pneg %p32
      %p150 = pneg %p56
      %p151 = pneg %p53
      %p152 = pneg %p77
      %p153 = pneg %p74
      %p154 = pneg %p103
      %p155 = pneg %p100
      %p156 = scmp.lt.s32.totalorder %s14, 1
      %s157 = scalar_select %p156, %s14, 1
      %s158 = smul.addr %s157, 2
      %s159 = smul.addr %s158, 2
      %s160 = scalar_lea.vmem %s3, %s159
      %p161 = scmp.lt.s32.totalorder %s14, 1
      %s162 = scalar_select %p161, %s14, 1
      %s163 = smul.addr %s162, 12
      %s164 = smul.addr %s163, 4
      %s165 = scalar_lea.vmem %s0, %s164
      %p166 = scmp.lt.s32.totalorder %s14, 1
      %s167 = scalar_select %p166, %s14, 1
      %s168 = smul.addr %s167, 2
      %s169 = smul.addr %s168, 2
      %s170 = scalar_lea.vmem %s3, %s169
      %v172 = vld [vmem:[%s165] sm:$0x1]
      %v173 = vld [vmem:[%s165 + $0xc] sm:$0x1]
      %v174 = vld [vmem:[%s165 + $0x18] sm:$0x1]
      %v175 = vld [vmem:[%s165 + $0x24] sm:$0x1]
      %v180 = vunpack.c.l.b16 %v172
      %v181 = vunpack.c.l.b16 %v173
      %v182 = vunpack.c.l.b16 %v174
      %v183 = vunpack.c.l.b16 %v175
      %v184 = vrot.slane %v181, 7
      %vm185 = vcmask 1041409
      %v186 = vsel %vm185, %v184, %v180
      %v187 = vrot.slane %v182, 6
      %vm188 = vcmask 1042434
      %v189 = vsel %vm188, %v187, %v186
      %v190 = vrot.slane %v183, 5
      %vm191 = vcmask 1043459
      %v192 = vsel %vm191, %v190, %v189
      %v193 = vpack.c.b16 %v192, %v192
      %vm195 = vcmask 123904
      %196 = vst.msk [vmem:[#allocation2] sm:$0x3] %vm195, %v193
      %v197 = vrot.slane %v180, 4
      %v198 = vrot.slane %v181, 3
      %vm199 = vcmask 1045509
      %v200 = vsel %vm199, %v198, %v197
      %v201 = vrot.slane %v182, 2
      %vm202 = vcmask 1046534
      %v203 = vsel %vm202, %v201, %v200
      %v204 = vrot.slane %v183, 1
      %vm205 = vcmask 1047559
      %v206 = vsel %vm205, %v204, %v203
      %v207 = vpack.c.b16 %v206, %v206
      %208 = vrot.lane.b32.xlu0 %v207, 127
      %v209 = vpop.permute.xlu0 %208
      %vm211 = vcmask 125954
      %212 = vst.msk [vmem:[#allocation2] sm:$0xc] %vm211, %v209
      %213 = vrot.lane.b32.xlu0 %v193, 126
      %v214 = vpop.permute.xlu0 %213
      %216 = vst.msk [vmem:[#allocation2 + $0x8] sm:$0x3] %vm195, %v214
      %v217 = vld [vmem:[%s165] sm:$0x1]
      %v218 = vld [vmem:[%s165 + $0xc] sm:$0x1]
      %v219 = vld [vmem:[%s165 + $0x18] sm:$0x1]
      %v220 = vld [vmem:[%s165 + $0x24] sm:$0x1]
      %v225 = vunpack.c.l.b16 %v217
      %v226 = vunpack.c.l.b16 %v218
      %v227 = vunpack.c.l.b16 %v219
      %v228 = vunpack.c.l.b16 %v220
      %v229 = vrot.slane %v225, 5
      %v230 = vrot.slane %v226, 4
      %v231 = vsel %vm199, %v230, %v229
      %v232 = vrot.slane %v227, 3
      %v233 = vsel %vm202, %v232, %v231
      %v234 = vrot.slane %v228, 2
      %v235 = vsel %vm205, %v234, %v233
      %v236 = vpack.c.b16 %v235, %v235
      %238 = vst.msk [vmem:[#allocation2 + $0x8] sm:$0xc] %vm211, %v236
      %v239 = vrot.slane %v225, 1
      %v240 = vsel %vm185, %v226, %v239
      %v241 = vrot.slane %v227, 7
      %v242 = vsel %vm188, %v241, %v240
      %v243 = vrot.slane %v228, 6
      %v244 = vsel %vm191, %v243, %v242
      %v245 = vpack.c.b16 %v244, %v244
      %246 = vrot.lane.b32.xlu0 %v245, 127
      %v247 = vpop.permute.xlu0 %246
      %249 = vst.msk [vmem:[#allocation2 + $0x10] sm:$0x3] %vm195, %v247
      %250 = vrot.lane.b32.xlu0 %v236, 126
      %v251 = vpop.permute.xlu0 %250
      %253 = vst.msk [vmem:[#allocation2 + $0x10] sm:$0xc] %vm211, %v251
      %v254 = vld [vmem:[%s165] sm:$0x2]
      %v255 = vld [vmem:[%s165 + $0xc] sm:$0x2]
      %v256 = vld [vmem:[%s165 + $0x18] sm:$0x2]
      %v257 = vld [vmem:[%s165 + $0x24] sm:$0x2]
      %v262 = vunpack.c.l.b16 %v254
      %v263 = vunpack.c.l.b16 %v255
      %v264 = vunpack.c.l.b16 %v256
      %v265 = vunpack.c.l.b16 %v257
      %v266 = vrot.slane %v262, 2
      %v267 = vrot.slane %v263, 1
      %v268 = vsel %vm185, %v267, %v266
      %v269 = vsel %vm188, %v264, %v268
      %v270 = vrot.slane %v265, 7
      %v271 = vsel %vm191, %v270, %v269
      %v272 = vpack.c.b16 %v271, %v271
      %274 = vst.msk [vmem:[#allocation2 + $0x18] sm:$0x3] %vm195, %v272
      %v275 = vrot.slane %v262, 6
      %v276 = vrot.slane %v263, 5
      %v277 = vsel %vm199, %v276, %v275
      %v278 = vrot.slane %v264, 4
      %v279 = vsel %vm202, %v278, %v277
      %v280 = vrot.slane %v265, 3
      %v281 = vsel %vm205, %v280, %v279
      %v282 = vpack.c.b16 %v281, %v281
      %283 = vrot.lane.b32.xlu0 %v282, 127
      %v284 = vpop.permute.xlu0 %283
      %286 = vst.msk [vmem:[#allocation2 + $0x18] sm:$0xc] %vm211, %v284
      %287 = vrot.lane.b32.xlu0 %v272, 126
      %v288 = vpop.permute.xlu0 %287
      %290 = vst.msk [vmem:[#allocation2 + $0x20] sm:$0x3] %vm195, %v288
      %v291 = vld [vmem:[%s165] sm:$0x1]
      %v292 = vld [vmem:[%s165 + $0xc] sm:$0x1]
      %v293 = vld [vmem:[%s165 + $0x18] sm:$0x1]
      %v294 = vld [vmem:[%s165 + $0x24] sm:$0x1]
      %v299 = vunpack.c.l.b16 %v291
      %v300 = vunpack.c.l.b16 %v292
      %v301 = vunpack.c.l.b16 %v293
      %v302 = vunpack.c.l.b16 %v294
      %v303 = vrot.slane %v299, 1
      %v304 = vsel %vm185, %v300, %v303
      %v305 = vrot.slane %v301, 7
      %v306 = vsel %vm188, %v305, %v304
      %v307 = vrot.slane %v302, 6
      %v308 = vsel %vm191, %v307, %v306
      %v309 = vpack.c.b16 %v308, %v308
      %310 = vrot.lane.b32.xlu0 %v309, 16
      %v311 = vpop.permute.xlu0 %310
      %vm313 = vcmask 255104
      %314 = vst.msk [vmem:[#allocation2] sm:$0x3] %vm313, %v311
      %v315 = vrot.slane %v299, 5
      %v316 = vrot.slane %v300, 4
      %v317 = vsel %vm199, %v316, %v315
      %v318 = vrot.slane %v301, 3
      %v319 = vsel %vm202, %v318, %v317
      %v320 = vrot.slane %v302, 2
      %v321 = vsel %vm205, %v320, %v319
      %v322 = vpack.c.b16 %v321, %v321
      %323 = vrot.lane.b32.xlu0 %v322, 15
      %v324 = vpop.permute.xlu0 %323
      %vm326 = vcmask 257154
      %327 = vst.msk [vmem:[#allocation2] sm:$0xc] %vm326, %v324
      %328 = vrot.lane.b32.xlu0 %v309, 14
      %v329 = vpop.permute.xlu0 %328
      %331 = vst.msk [vmem:[#allocation2 + $0x8] sm:$0x3] %vm313, %v329
      %v332 = vld [vmem:[%s165] sm:$0x2]
      %v333 = vld [vmem:[%s165 + $0xc] sm:$0x2]
      %v334 = vld [vmem:[%s165 + $0x18] sm:$0x2]
      %v335 = vld [vmem:[%s165 + $0x24] sm:$0x2]
      %v340 = vunpack.c.l.b16 %v332
      %v341 = vunpack.c.l.b16 %v333
      %v342 = vunpack.c.l.b16 %v334
      %v343 = vunpack.c.l.b16 %v335
      %v344 = vrot.slane %v340, 6
      %v345 = vrot.slane %v341, 5
      %v346 = vsel %vm199, %v345, %v344
      %v347 = vrot.slane %v342, 4
      %v348 = vsel %vm202, %v347, %v346
      %v349 = vrot.slane %v343, 3
      %v350 = vsel %vm205, %v349, %v348
      %v351 = vpack.c.b16 %v350, %v350
      %352 = vrot.lane.b32.xlu0 %v351, 16
      %v353 = vpop.permute.xlu0 %352
      %355 = vst.msk [vmem:[#allocation2 + $0x8] sm:$0xc] %vm326, %v353
      %v356 = vrot.slane %v340, 2
      %v357 = vrot.slane %v341, 1
      %v358 = vsel %vm185, %v357, %v356
      %v359 = vsel %vm188, %v342, %v358
      %v360 = vrot.slane %v343, 7
      %v361 = vsel %vm191, %v360, %v359
      %v362 = vpack.c.b16 %v361, %v361
      %363 = vrot.lane.b32.xlu0 %v362, 15
      %v364 = vpop.permute.xlu0 %363
      %366 = vst.msk [vmem:[#allocation2 + $0x10] sm:$0x3] %vm313, %v364
      %367 = vrot.lane.b32.xlu0 %v351, 14
      %v368 = vpop.permute.xlu0 %367
      %370 = vst.msk [vmem:[#allocation2 + $0x10] sm:$0xc] %vm326, %v368
      %v371 = vld [vmem:[%s165] sm:$0x2]
      %v372 = vld [vmem:[%s165 + $0xc] sm:$0x2]
      %v373 = vld [vmem:[%s165 + $0x18] sm:$0x2]
      %v374 = vld [vmem:[%s165 + $0x24] sm:$0x2]
      %v379 = vunpack.c.l.b16 %v371
      %v380 = vunpack.c.l.b16 %v372
      %v381 = vunpack.c.l.b16 %v373
      %v382 = vunpack.c.l.b16 %v374
      %v383 = vrot.slane %v379, 3
      %v384 = vrot.slane %v380, 2
      %v385 = vsel %vm185, %v384, %v383
      %v386 = vrot.slane %v381, 1
      %v387 = vsel %vm188, %v386, %v385
      %v388 = vsel %vm191, %v382, %v387
      %v389 = vpack.c.b16 %v388, %v388
      %390 = vrot.lane.b32.xlu0 %v389, 16
      %v391 = vpop.permute.xlu0 %390
      %393 = vst.msk [vmem:[#allocation2 + $0x18] sm:$0x3] %vm313, %v391
      %v394 = vrot.slane %v379, 7
      %v395 = vrot.slane %v380, 6
      %v396 = vsel %vm199, %v395, %v394
      %v397 = vrot.slane %v381, 5
      %v398 = vsel %vm202, %v397, %v396
      %v399 = vrot.slane %v382, 4
      %v400 = vsel %vm205, %v399, %v398
      %v401 = vpack.c.b16 %v400, %v400
      %402 = vrot.lane.b32.xlu0 %v401, 15
      %v403 = vpop.permute.xlu0 %402
      %405 = vst.msk [vmem:[#allocation2 + $0x18] sm:$0xc] %vm326, %v403
      %406 = vrot.lane.b32.xlu0 %v389, 14
      %v407 = vpop.permute.xlu0 %406
      %409 = vst.msk [vmem:[#allocation2 + $0x20] sm:$0x3] %vm313, %v407
      %v410 = vld [vmem:[%s165] sm:$0x2]
      %v411 = vld [vmem:[%s165 + $0xc] sm:$0x2]
      %v412 = vld [vmem:[%s165 + $0x18] sm:$0x2]
      %v413 = vld [vmem:[%s165 + $0x24] sm:$0x2]
      %v418 = vunpack.c.l.b16 %v410
      %v419 = vunpack.c.l.b16 %v411
      %v420 = vunpack.c.l.b16 %v412
      %v421 = vunpack.c.l.b16 %v413
      %v422 = vrot.slane %v418, 2
      %v423 = vrot.slane %v419, 1
      %v424 = vsel %vm185, %v423, %v422
      %v425 = vsel %vm188, %v420, %v424
      %v426 = vrot.slane %v421, 7
      %v427 = vsel %vm191, %v426, %v425
      %v428 = vpack.c.b16 %v427, %v427
      %429 = vrot.lane.b32.xlu0 %v428, 32
      %v430 = vpop.permute.xlu0 %429
      %vm432 = vcmask 386304
      %433 = vst.msk [vmem:[#allocation2] sm:$0x3] %vm432, %v430
      %v434 = vrot.slane %v418, 6
      %v435 = vrot.slane %v419, 5
      %v436 = vsel %vm199, %v435, %v434
      %v437 = vrot.slane %v420, 4
      %v438 = vsel %vm202, %v437, %v436
      %v439 = vrot.slane %v421, 3
      %v440 = vsel %vm205, %v439, %v438
      %v441 = vpack.c.b16 %v440, %v440
      %442 = vrot.lane.b32.xlu0 %v441, 31
      %v443 = vpop.permute.xlu0 %442
      %vm445 = vcmask 388354
      %446 = vst.msk [vmem:[#allocation2] sm:$0xc] %vm445, %v443
      %447 = vrot.lane.b32.xlu0 %v428, 30
      %v448 = vpop.permute.xlu0 %447
      %450 = vst.msk [vmem:[#allocation2 + $0x8] sm:$0x3] %vm432, %v448
      %v451 = vld [vmem:[%s165] sm:$0x2]
      %v452 = vld [vmem:[%s165 + $0xc] sm:$0x2]
      %v453 = vld [vmem:[%s165 + $0x18] sm:$0x2]
      %v454 = vld [vmem:[%s165 + $0x24] sm:$0x2]
      %v459 = vunpack.c.l.b16 %v451
      %v460 = vunpack.c.l.b16 %v452
      %v461 = vunpack.c.l.b16 %v453
      %v462 = vunpack.c.l.b16 %v454
      %v463 = vrot.slane %v459, 7
      %v464 = vrot.slane %v460, 6
      %v465 = vsel %vm199, %v464, %v463
      %v466 = vrot.slane %v461, 5
      %v467 = vsel %vm202, %v466, %v465
      %v468 = vrot.slane %v462, 4
      %v469 = vsel %vm205, %v468, %v467
      %v470 = vpack.c.b16 %v469, %v469
      %471 = vrot.lane.b32.xlu0 %v470, 32
      %v472 = vpop.permute.xlu0 %471
      %474 = vst.msk [vmem:[#allocation2 + $0x8] sm:$0xc] %vm445, %v472
      %v475 = vrot.slane %v459, 3
      %v476 = vrot.slane %v460, 2
      %v477 = vsel %vm185, %v476, %v475
      %v478 = vrot.slane %v461, 1
      %v479 = vsel %vm188, %v478, %v477
      %v480 = vsel %vm191, %v462, %v479
      %v481 = vpack.c.b16 %v480, %v480
      %482 = vrot.lane.b32.xlu0 %v481, 31
      %v483 = vpop.permute.xlu0 %482
      %485 = vst.msk [vmem:[#allocation2 + $0x10] sm:$0x3] %vm432, %v483
      %486 = vrot.lane.b32.xlu0 %v470, 30
      %v487 = vpop.permute.xlu0 %486
      %489 = vst.msk [vmem:[#allocation2 + $0x10] sm:$0xc] %vm445, %v487
      %v490 = vld [vmem:[%s165] sm:$0x4]
      %v491 = vld [vmem:[%s165 + $0xc] sm:$0x4]
      %v492 = vld [vmem:[%s165 + $0x18] sm:$0x4]
      %v493 = vld [vmem:[%s165 + $0x24] sm:$0x4]
      %v498 = vunpack.c.l.b16 %v490
      %v499 = vunpack.c.l.b16 %v491
      %v500 = vunpack.c.l.b16 %v492
      %v501 = vunpack.c.l.b16 %v493
      %v502 = vrot.slane %v498, 4
      %v503 = vrot.slane %v499, 3
      %v504 = vsel %vm185, %v503, %v502
      %v505 = vrot.slane %v500, 2
      %v506 = vsel %vm188, %v505, %v504
      %v507 = vrot.slane %v501, 1
      %v508 = vsel %vm191, %v507, %v506
      %v509 = vpack.c.b16 %v508, %v508
      %510 = vrot.lane.b32.xlu0 %v509, 32
      %v511 = vpop.permute.xlu0 %510
      %513 = vst.msk [vmem:[#allocation2 + $0x18] sm:$0x3] %vm432, %v511
      %v514 = vrot.slane %v499, 7
      %v515 = vsel %vm199, %v514, %v498
      %v516 = vrot.slane %v500, 6
      %v517 = vsel %vm202, %v516, %v515
      %v518 = vrot.slane %v501, 5
      %v519 = vsel %vm205, %v518, %v517
      %v520 = vpack.c.b16 %v519, %v519
      %521 = vrot.lane.b32.xlu0 %v520, 31
      %v522 = vpop.permute.xlu0 %521
      %524 = vst.msk [vmem:[#allocation2 + $0x18] sm:$0xc] %vm445, %v522
      %525 = vrot.lane.b32.xlu0 %v509, 30
      %v526 = vpop.permute.xlu0 %525
      %528 = vst.msk [vmem:[#allocation2 + $0x20] sm:$0x3] %vm432, %v526
      %v529 = vld [vmem:[%s165] sm:$0x2]
      %v530 = vld [vmem:[%s165 + $0xc] sm:$0x2]
      %v531 = vld [vmem:[%s165 + $0x18] sm:$0x2]
      %v532 = vld [vmem:[%s165 + $0x24] sm:$0x2]
      %v537 = vunpack.c.l.b16 %v529
      %v538 = vunpack.c.l.b16 %v530
      %v539 = vunpack.c.l.b16 %v531
      %v540 = vunpack.c.l.b16 %v532
      %v541 = vrot.slane %v537, 3
      %v542 = vrot.slane %v538, 2
      %v543 = vsel %vm185, %v542, %v541
      %v544 = vrot.slane %v539, 1
      %v545 = vsel %vm188, %v544, %v543
      %v546 = vsel %vm191, %v540, %v545
      %v547 = vpack.c.b16 %v546, %v546
      %548 = vrot.lane.b32.xlu0 %v547, 48
      %v549 = vpop.permute.xlu0 %548
      %vm551 = vcmask 517504
      %552 = vst.msk [vmem:[#allocation2] sm:$0x3] %vm551, %v549
      %v553 = vrot.slane %v537, 7
      %v554 = vrot.slane %v538, 6
      %v555 = vsel %vm199, %v554, %v553
      %v556 = vrot.slane %v539, 5
      %v557 = vsel %vm202, %v556, %v555
      %v558 = vrot.slane %v540, 4
      %v559 = vsel %vm205, %v558, %v557
      %v560 = vpack.c.b16 %v559, %v559
      %561 = vrot.lane.b32.xlu0 %v560, 47
      %v562 = vpop.permute.xlu0 %561
      %vm564 = vcmask 519554
      %565 = vst.msk [vmem:[#allocation2] sm:$0xc] %vm564, %v562
      %566 = vrot.lane.b32.xlu0 %v547, 46
      %v567 = vpop.permute.xlu0 %566
      %569 = vst.msk [vmem:[#allocation2 + $0x8] sm:$0x3] %vm551, %v567
      %v570 = vld [vmem:[%s165] sm:$0x4]
      %v571 = vld [vmem:[%s165 + $0xc] sm:$0x4]
      %v572 = vld [vmem:[%s165 + $0x18] sm:$0x4]
      %v573 = vld [vmem:[%s165 + $0x24] sm:$0x4]
      %v578 = vunpack.c.l.b16 %v570
      %v579 = vunpack.c.l.b16 %v571
      %v580 = vunpack.c.l.b16 %v572
      %v581 = vunpack.c.l.b16 %v573
      %v582 = vrot.slane %v579, 7
      %v583 = vsel %vm199, %v582, %v578
      %v584 = vrot.slane %v580, 6
      %v585 = vsel %vm202, %v584, %v583
      %v586 = vrot.slane %v581, 5
      %v587 = vsel %vm205, %v586, %v585
      %v588 = vpack.c.b16 %v587, %v587
      %589 = vrot.lane.b32.xlu0 %v588, 48
      %v590 = vpop.permute.xlu0 %589
      %592 = vst.msk [vmem:[#allocation2 + $0x8] sm:$0xc] %vm564, %v590
      %v593 = vrot.slane %v578, 4
      %v594 = vrot.slane %v579, 3
      %v595 = vsel %vm185, %v594, %v593
      %v596 = vrot.slane %v580, 2
      %v597 = vsel %vm188, %v596, %v595
      %v598 = vrot.slane %v581, 1
      %v599 = vsel %vm191, %v598, %v597
      %v600 = vpack.c.b16 %v599, %v599
      %601 = vrot.lane.b32.xlu0 %v600, 47
      %v602 = vpop.permute.xlu0 %601
      %604 = vst.msk [vmem:[#allocation2 + $0x10] sm:$0x3] %vm551, %v602
      %605 = vrot.lane.b32.xlu0 %v588, 46
      %v606 = vpop.permute.xlu0 %605
      %608 = vst.msk [vmem:[#allocation2 + $0x10] sm:$0xc] %vm564, %v606
      %v609 = vld [vmem:[%s165] sm:$0x4]
      %v610 = vld [vmem:[%s165 + $0xc] sm:$0x4]
      %v611 = vld [vmem:[%s165 + $0x18] sm:$0x4]
      %v612 = vld [vmem:[%s165 + $0x24] sm:$0x4]
      %v617 = vunpack.c.l.b16 %v609
      %v618 = vunpack.c.l.b16 %v610
      %v619 = vunpack.c.l.b16 %v611
      %v620 = vunpack.c.l.b16 %v612
      %v621 = vrot.slane %v617, 5
      %v622 = vrot.slane %v618, 4
      %v623 = vsel %vm185, %v622, %v621
      %v624 = vrot.slane %v619, 3
      %v625 = vsel %vm188, %v624, %v623
      %v626 = vrot.slane %v620, 2
      %v627 = vsel %vm191, %v626, %v625
      %v628 = vpack.c.b16 %v627, %v627
      %629 = vrot.lane.b32.xlu0 %v628, 48
      %v630 = vpop.permute.xlu0 %629
      %632 = vst.msk [vmem:[#allocation2 + $0x18] sm:$0x3] %vm551, %v630
      %v633 = vrot.slane %v617, 1
      %v634 = vsel %vm199, %v618, %v633
      %v635 = vrot.slane %v619, 7
      %v636 = vsel %vm202, %v635, %v634
      %v637 = vrot.slane %v620, 6
      %v638 = vsel %vm205, %v637, %v636
      %v639 = vpack.c.b16 %v638, %v638
      %640 = vrot.lane.b32.xlu0 %v639, 47
      %v641 = vpop.permute.xlu0 %640
      %643 = vst.msk [vmem:[#allocation2 + $0x18] sm:$0xc] %vm564, %v641
      %644 = vrot.lane.b32.xlu0 %v628, 46
      %v645 = vpop.permute.xlu0 %644
      %647 = vst.msk [vmem:[#allocation2 + $0x20] sm:$0x3] %vm551, %v645
      %v648 = vld [vmem:[%s165] sm:$0x4]
      %v649 = vld [vmem:[%s165 + $0xc] sm:$0x4]
      %v650 = vld [vmem:[%s165 + $0x18] sm:$0x4]
      %v651 = vld [vmem:[%s165 + $0x24] sm:$0x4]
      %v656 = vunpack.c.l.b16 %v648
      %v657 = vunpack.c.l.b16 %v649
      %v658 = vunpack.c.l.b16 %v650
      %v659 = vunpack.c.l.b16 %v651
      %v660 = vrot.slane %v656, 4
      %v661 = vrot.slane %v657, 3
      %v662 = vsel %vm185, %v661, %v660
      %v663 = vrot.slane %v658, 2
      %v664 = vsel %vm188, %v663, %v662
      %v665 = vrot.slane %v659, 1
      %v666 = vsel %vm191, %v665, %v664
      %v667 = vpack.c.b16 %v666, %v666
      %668 = vrot.lane.b32.xlu0 %v667, 64
      %v669 = vpop.permute.xlu0 %668
      %vm671 = vcmask 648704
      %672 = vst.msk [vmem:[#allocation2] sm:$0x3] %vm671, %v669
      %v673 = vrot.slane %v657, 7
      %v674 = vsel %vm199, %v673, %v656
      %v675 = vrot.slane %v658, 6
      %v676 = vsel %vm202, %v675, %v674
      %v677 = vrot.slane %v659, 5
      %v678 = vsel %vm205, %v677, %v676
      %v679 = vpack.c.b16 %v678, %v678
      %680 = vrot.lane.b32.xlu0 %v679, 63
      %v681 = vpop.permute.xlu0 %680
      %vm683 = vcmask 650754
      %684 = vst.msk [vmem:[#allocation2] sm:$0xc] %vm683, %v681
      %685 = vrot.lane.b32.xlu0 %v667, 62
      %v686 = vpop.permute.xlu0 %685
      %688 = vst.msk [vmem:[#allocation2 + $0x8] sm:$0x3] %vm671, %v686
      %v689 = vld [vmem:[%s165] sm:$0x4]
      %v690 = vld [vmem:[%s165 + $0xc] sm:$0x4]
      %v691 = vld [vmem:[%s165 + $0x18] sm:$0x4]
      %v692 = vld [vmem:[%s165 + $0x24] sm:$0x4]
      %v697 = vunpack.c.l.b16 %v689
      %v698 = vunpack.c.l.b16 %v690
      %v699 = vunpack.c.l.b16 %v691
      %v700 = vunpack.c.l.b16 %v692
      %v701 = vrot.slane %v697, 1
      %v702 = vsel %vm199, %v698, %v701
      %v703 = vrot.slane %v699, 7
      %v704 = vsel %vm202, %v703, %v702
      %v705 = vrot.slane %v700, 6
      %v706 = vsel %vm205, %v705, %v704
      %v707 = vpack.c.b16 %v706, %v706
      %708 = vrot.lane.b32.xlu0 %v707, 64
      %v709 = vpop.permute.xlu0 %708
      %711 = vst.msk [vmem:[#allocation2 + $0x8] sm:$0xc] %vm683, %v709
      %v712 = vrot.slane %v697, 5
      %v713 = vrot.slane %v698, 4
      %v714 = vsel %vm185, %v713, %v712
      %v715 = vrot.slane %v699, 3
      %v716 = vsel %vm188, %v715, %v714
      %v717 = vrot.slane %v700, 2
      %v718 = vsel %vm191, %v717, %v716
      %v719 = vpack.c.b16 %v718, %v718
      %720 = vrot.lane.b32.xlu0 %v719, 63
      %v721 = vpop.permute.xlu0 %720
      %723 = vst.msk [vmem:[#allocation2 + $0x10] sm:$0x3] %vm671, %v721
      %724 = vrot.lane.b32.xlu0 %v707, 62
      %v725 = vpop.permute.xlu0 %724
      %727 = vst.msk [vmem:[#allocation2 + $0x10] sm:$0xc] %vm683, %v725
      %v728 = vld [vmem:[%s165] sm:$0x8]
      %v729 = vld [vmem:[%s165 + $0xc] sm:$0x8]
      %v730 = vld [vmem:[%s165 + $0x18] sm:$0x8]
      %v731 = vld [vmem:[%s165 + $0x24] sm:$0x8]
      %v736 = vunpack.c.l.b16 %v728
      %v737 = vunpack.c.l.b16 %v729
      %v738 = vunpack.c.l.b16 %v730
      %v739 = vunpack.c.l.b16 %v731
      %v740 = vrot.slane %v736, 6
      %v741 = vrot.slane %v737, 5
      %v742 = vsel %vm185, %v741, %v740
      %v743 = vrot.slane %v738, 4
      %v744 = vsel %vm188, %v743, %v742
      %v745 = vrot.slane %v739, 3
      %v746 = vsel %vm191, %v745, %v744
      %v747 = vpack.c.b16 %v746, %v746
      %748 = vrot.lane.b32.xlu0 %v747, 64
      %v749 = vpop.permute.xlu0 %748
      %751 = vst.msk [vmem:[#allocation2 + $0x18] sm:$0x3] %vm671, %v749
      %v752 = vrot.slane %v736, 2
      %v753 = vrot.slane %v737, 1
      %v754 = vsel %vm199, %v753, %v752
      %v755 = vsel %vm202, %v738, %v754
      %v756 = vrot.slane %v739, 7
      %v757 = vsel %vm205, %v756, %v755
      %v758 = vpack.c.b16 %v757, %v757
      %759 = vrot.lane.b32.xlu0 %v758, 63
      %v760 = vpop.permute.xlu0 %759
      %762 = vst.msk [vmem:[#allocation2 + $0x18] sm:$0xc] %vm683, %v760
      %763 = vrot.lane.b32.xlu0 %v747, 62
      %v764 = vpop.permute.xlu0 %763
      %766 = vst.msk [vmem:[#allocation2 + $0x20] sm:$0x3] %vm671, %v764
      %v767 = vld [vmem:[%s165] sm:$0x4]
      %v768 = vld [vmem:[%s165 + $0xc] sm:$0x4]
      %v769 = vld [vmem:[%s165 + $0x18] sm:$0x4]
      %v770 = vld [vmem:[%s165 + $0x24] sm:$0x4]
      %v775 = vunpack.c.l.b16 %v767
      %v776 = vunpack.c.l.b16 %v768
      %v777 = vunpack.c.l.b16 %v769
      %v778 = vunpack.c.l.b16 %v770
      %v779 = vrot.slane %v775, 5
      %v780 = vrot.slane %v776, 4
      %v781 = vsel %vm185, %v780, %v779
      %v782 = vrot.slane %v777, 3
      %v783 = vsel %vm188, %v782, %v781
      %v784 = vrot.slane %v778, 2
      %v785 = vsel %vm191, %v784, %v783
      %v786 = vpack.c.b16 %v785, %v785
      %787 = vrot.lane.b32.xlu0 %v786, 80
      %v788 = vpop.permute.xlu0 %787
      %vm790 = vcmask 779904
      %791 = vst.msk [vmem:[#allocation2] sm:$0x3] %vm790, %v788
      %v792 = vrot.slane %v775, 1
      %v793 = vsel %vm199, %v776, %v792
      %v794 = vrot.slane %v777, 7
      %v795 = vsel %vm202, %v794, %v793
      %v796 = vrot.slane %v778, 6
      %v797 = vsel %vm205, %v796, %v795
      %v798 = vpack.c.b16 %v797, %v797
      %799 = vrot.lane.b32.xlu0 %v798, 79
      %v800 = vpop.permute.xlu0 %799
      %vm802 = vcmask 781954
      %803 = vst.msk [vmem:[#allocation2] sm:$0xc] %vm802, %v800
      %804 = vrot.lane.b32.xlu0 %v786, 78
      %v805 = vpop.permute.xlu0 %804
      %807 = vst.msk [vmem:[#allocation2 + $0x8] sm:$0x3] %vm790, %v805
      %v808 = vld [vmem:[%s165] sm:$0x8]
      %v809 = vld [vmem:[%s165 + $0xc] sm:$0x8]
      %v810 = vld [vmem:[%s165 + $0x18] sm:$0x8]
      %v811 = vld [vmem:[%s165 + $0x24] sm:$0x8]
      %v816 = vunpack.c.l.b16 %v808
      %v817 = vunpack.c.l.b16 %v809
      %v818 = vunpack.c.l.b16 %v810
      %v819 = vunpack.c.l.b16 %v811
      %v820 = vrot.slane %v816, 2
      %v821 = vrot.slane %v817, 1
      %v822 = vsel %vm199, %v821, %v820
      %v823 = vsel %vm202, %v818, %v822
      %v824 = vrot.slane %v819, 7
      %v825 = vsel %vm205, %v824, %v823
      %v826 = vpack.c.b16 %v825, %v825
      %827 = vrot.lane.b32.xlu0 %v826, 80
      %v828 = vpop.permute.xlu0 %827
      %830 = vst.msk [vmem:[#allocation2 + $0x8] sm:$0xc] %vm802, %v828
      %v831 = vrot.slane %v816, 6
      %v832 = vrot.slane %v817, 5
      %v833 = vsel %vm185, %v832, %v831
      %v834 = vrot.slane %v818, 4
      %v835 = vsel %vm188, %v834, %v833
      %v836 = vrot.slane %v819, 3
      %v837 = vsel %vm191, %v836, %v835
      %v838 = vpack.c.b16 %v837, %v837
      %839 = vrot.lane.b32.xlu0 %v838, 79
      %v840 = vpop.permute.xlu0 %839
      %842 = vst.msk [vmem:[#allocation2 + $0x10] sm:$0x3] %vm790, %v840
      %843 = vrot.lane.b32.xlu0 %v826, 78
      %v844 = vpop.permute.xlu0 %843
      %846 = vst.msk [vmem:[#allocation2 + $0x10] sm:$0xc] %vm802, %v844
      %v847 = vld [vmem:[%s165] sm:$0x8]
      %v848 = vld [vmem:[%s165 + $0xc] sm:$0x8]
      %v849 = vld [vmem:[%s165 + $0x18] sm:$0x8]
      %v850 = vld [vmem:[%s165 + $0x24] sm:$0x8]
      %v855 = vunpack.c.l.b16 %v847
      %v856 = vunpack.c.l.b16 %v848
      %v857 = vunpack.c.l.b16 %v849
      %v858 = vunpack.c.l.b16 %v850
      %v859 = vrot.slane %v855, 7
      %v860 = vrot.slane %v856, 6
      %v861 = vsel %vm185, %v860, %v859
      %v862 = vrot.slane %v857, 5
      %v863 = vsel %vm188, %v862, %v861
      %v864 = vrot.slane %v858, 4
      %v865 = vsel %vm191, %v864, %v863
      %v866 = vpack.c.b16 %v865, %v865
      %867 = vrot.lane.b32.xlu0 %v866, 80
      %v868 = vpop.permute.xlu0 %867
      %870 = vst.msk [vmem:[#allocation2 + $0x18] sm:$0x3] %vm790, %v868
      %v871 = vrot.slane %v855, 3
      %v872 = vrot.slane %v856, 2
      %v873 = vsel %vm199, %v872, %v871
      %v874 = vrot.slane %v857, 1
      %v875 = vsel %vm202, %v874, %v873
      %v876 = vsel %vm205, %v858, %v875
      %v877 = vpack.c.b16 %v876, %v876
      %878 = vrot.lane.b32.xlu0 %v877, 79
      %v879 = vpop.permute.xlu0 %878
      %881 = vst.msk [vmem:[#allocation2 + $0x18] sm:$0xc] %vm802, %v879
      %882 = vrot.lane.b32.xlu0 %v866, 78
      %v883 = vpop.permute.xlu0 %882
      %885 = vst.msk [vmem:[#allocation2 + $0x20] sm:$0x3] %vm790, %v883
      %v886 = vld [vmem:[%s165] sm:$0x8]
      %v887 = vld [vmem:[%s165 + $0xc] sm:$0x8]
      %v888 = vld [vmem:[%s165 + $0x18] sm:$0x8]
      %v889 = vld [vmem:[%s165 + $0x24] sm:$0x8]
      %v894 = vunpack.c.l.b16 %v886
      %v895 = vunpack.c.l.b16 %v887
      %v896 = vunpack.c.l.b16 %v888
      %v897 = vunpack.c.l.b16 %v889
      %v898 = vrot.slane %v894, 6
      %v899 = vrot.slane %v895, 5
      %v900 = vsel %vm185, %v899, %v898
      %v901 = vrot.slane %v896, 4
      %v902 = vsel %vm188, %v901, %v900
      %v903 = vrot.slane %v897, 3
      %v904 = vsel %vm191, %v903, %v902
      %v905 = vpack.c.b16 %v904, %v904
      %906 = vrot.lane.b32.xlu0 %v905, 96
      %v907 = vpop.permute.xlu0 %906
      %vm909 = vcmask 911104
      %910 = vst.msk [vmem:[#allocation2] sm:$0x3] %vm909, %v907
      %v911 = vrot.slane %v894, 2
      %v912 = vrot.slane %v895, 1
      %v913 = vsel %vm199, %v912, %v911
      %v914 = vsel %vm202, %v896, %v913
      %v915 = vrot.slane %v897, 7
      %v916 = vsel %vm205, %v915, %v914
      %v917 = vpack.c.b16 %v916, %v916
      %918 = vrot.lane.b32.xlu0 %v917, 95
      %v919 = vpop.permute.xlu0 %918
      %vm921 = vcmask 913154
      %922 = vst.msk [vmem:[#allocation2] sm:$0xc] %vm921, %v919
      %923 = vrot.lane.b32.xlu0 %v905, 94
      %v924 = vpop.permute.xlu0 %923
      %926 = vst.msk [vmem:[#allocation2 + $0x8] sm:$0x3] %vm909, %v924
      %v927 = vld [vmem:[%s165] sm:$0x8]
      %v928 = vld [vmem:[%s165 + $0xc] sm:$0x8]
      %v929 = vld [vmem:[%s165 + $0x18] sm:$0x8]
      %v930 = vld [vmem:[%s165 + $0x24] sm:$0x8]
      %v935 = vunpack.c.l.b16 %v927
      %v936 = vunpack.c.l.b16 %v928
      %v937 = vunpack.c.l.b16 %v929
      %v938 = vunpack.c.l.b16 %v930
      %v939 = vrot.slane %v935, 3
      %v940 = vrot.slane %v936, 2
      %v941 = vsel %vm199, %v940, %v939
      %v942 = vrot.slane %v937, 1
      %v943 = vsel %vm202, %v942, %v941
      %v944 = vsel %vm205, %v938, %v943
      %v945 = vpack.c.b16 %v944, %v944
      %946 = vrot.lane.b32.xlu0 %v945, 96
      %v947 = vpop.permute.xlu0 %946
      %949 = vst.msk [vmem:[#allocation2 + $0x8] sm:$0xc] %vm921, %v947
      %v950 = vrot.slane %v935, 7
      %v951 = vrot.slane %v936, 6
      %v952 = vsel %vm185, %v951, %v950
      %v953 = vrot.slane %v937, 5
      %v954 = vsel %vm188, %v953, %v952
      %v955 = vrot.slane %v938, 4
      %v956 = vsel %vm191, %v955, %v954
      %v957 = vpack.c.b16 %v956, %v956
      %958 = vrot.lane.b32.xlu0 %v957, 95
      %v959 = vpop.permute.xlu0 %958
      %961 = vst.msk [vmem:[#allocation2 + $0x10] sm:$0x3] %vm909, %v959
      %962 = vrot.lane.b32.xlu0 %v945, 94
      %v963 = vpop.permute.xlu0 %962
      %965 = vst.msk [vmem:[#allocation2 + $0x10] sm:$0xc] %vm921, %v963
      %v966 = vld [vmem:[%s165 + $0x4] sm:$0x1]
      %v967 = vld [vmem:[%s165 + $0x10] sm:$0x1]
      %v968 = vld [vmem:[%s165 + $0x1c] sm:$0x1]
      %v969 = vld [vmem:[%s165 + $0x28] sm:$0x1]
      %v974 = vunpack.c.l.b16 %v966
      %v975 = vunpack.c.l.b16 %v967
      %v976 = vunpack.c.l.b16 %v968
      %v977 = vunpack.c.l.b16 %v969
      %v978 = vrot.slane %v975, 7
      %v979 = vsel %vm185, %v978, %v974
      %v980 = vrot.slane %v976, 6
      %v981 = vsel %vm188, %v980, %v979
      %v982 = vrot.slane %v977, 5
      %v983 = vsel %vm191, %v982, %v981
      %v984 = vpack.c.b16 %v983, %v983
      %985 = vrot.lane.b32.xlu0 %v984, 96
      %v986 = vpop.permute.xlu0 %985
      %988 = vst.msk [vmem:[#allocation2 + $0x18] sm:$0x3] %vm909, %v986
      %v989 = vrot.slane %v974, 4
      %v990 = vrot.slane %v975, 3
      %v991 = vsel %vm199, %v990, %v989
      %v992 = vrot.slane %v976, 2
      %v993 = vsel %vm202, %v992, %v991
      %v994 = vrot.slane %v977, 1
      %v995 = vsel %vm205, %v994, %v993
      %v996 = vpack.c.b16 %v995, %v995
      %997 = vrot.lane.b32.xlu0 %v996, 95
      %v998 = vpop.permute.xlu0 %997
      %1000 = vst.msk [vmem:[#allocation2 + $0x18] sm:$0xc] %vm921, %v998
      %1001 = vrot.lane.b32.xlu0 %v984, 94
      %v1002 = vpop.permute.xlu0 %1001
      %1004 = vst.msk [vmem:[#allocation2 + $0x20] sm:$0x3] %vm909, %v1002
      %v1005 = vld [vmem:[%s165] sm:$0x8]
      %v1006 = vld [vmem:[%s165 + $0xc] sm:$0x8]
      %v1007 = vld [vmem:[%s165 + $0x18] sm:$0x8]
      %v1008 = vld [vmem:[%s165 + $0x24] sm:$0x8]
      %v1013 = vunpack.c.l.b16 %v1005
      %v1014 = vunpack.c.l.b16 %v1006
      %v1015 = vunpack.c.l.b16 %v1007
      %v1016 = vunpack.c.l.b16 %v1008
      %v1017 = vrot.slane %v1013, 7
      %v1018 = vrot.slane %v1014, 6
      %v1019 = vsel %vm185, %v1018, %v1017
      %v1020 = vrot.slane %v1015, 5
      %v1021 = vsel %vm188, %v1020, %v1019
      %v1022 = vrot.slane %v1016, 4
      %v1023 = vsel %vm191, %v1022, %v1021
      %v1024 = vpack.c.b16 %v1023, %v1023
      %1025 = vrot.lane.b32.xlu0 %v1024, 112
      %v1026 = vpop.permute.xlu0 %1025
      %vm1028 = vcmask 1042304
      %1029 = vst.msk [vmem:[#allocation2] sm:$0x3] %vm1028, %v1026
      %v1030 = vrot.slane %v1013, 3
      %v1031 = vrot.slane %v1014, 2
      %v1032 = vsel %vm199, %v1031, %v1030
      %v1033 = vrot.slane %v1015, 1
      %v1034 = vsel %vm202, %v1033, %v1032
      %v1035 = vsel %vm205, %v1016, %v1034
      %v1036 = vpack.c.b16 %v1035, %v1035
      %1037 = vrot.lane.b32.xlu0 %v1036, 111
      %v1038 = vpop.permute.xlu0 %1037
      %vm1040 = vcmask 1044354
      %1041 = vst.msk [vmem:[#allocation2] sm:$0xc] %vm1040, %v1038
      %1042 = vrot.lane.b32.xlu0 %v1024, 110
      %v1043 = vpop.permute.xlu0 %1042
      %1045 = vst.msk [vmem:[#allocation2 + $0x8] sm:$0x3] %vm1028, %v1043
      %v1046 = vld [vmem:[%s165 + $0x4] sm:$0x1]
      %v1047 = vld [vmem:[%s165 + $0x10] sm:$0x1]
      %v1048 = vld [vmem:[%s165 + $0x1c] sm:$0x1]
      %v1049 = vld [vmem:[%s165 + $0x28] sm:$0x1]
      %v1054 = vunpack.c.l.b16 %v1046
      %v1055 = vunpack.c.l.b16 %v1047
      %v1056 = vunpack.c.l.b16 %v1048
      %v1057 = vunpack.c.l.b16 %v1049
      %v1058 = vrot.slane %v1054, 4
      %v1059 = vrot.slane %v1055, 3
      %v1060 = vsel %vm199, %v1059, %v1058
      %v1061 = vrot.slane %v1056, 2
      %v1062 = vsel %vm202, %v1061, %v1060
      %v1063 = vrot.slane %v1057, 1
      %v1064 = vsel %vm205, %v1063, %v1062
      %v1065 = vpack.c.b16 %v1064, %v1064
      %1066 = vrot.lane.b32.xlu0 %v1065, 112
      %v1067 = vpop.permute.xlu0 %1066
      %1069 = vst.msk [vmem:[#allocation2 + $0x8] sm:$0xc] %vm1040, %v1067
      %v1070 = vrot.slane %v1055, 7
      %v1071 = vsel %vm185, %v1070, %v1054
      %v1072 = vrot.slane %v1056, 6
      %v1073 = vsel %vm188, %v1072, %v1071
      %v1074 = vrot.slane %v1057, 5
      %v1075 = vsel %vm191, %v1074, %v1073
      %v1076 = vpack.c.b16 %v1075, %v1075
      %1077 = vrot.lane.b32.xlu0 %v1076, 111
      %v1078 = vpop.permute.xlu0 %1077
      %1080 = vst.msk [vmem:[#allocation2 + $0x10] sm:$0x3] %vm1028, %v1078
      %1081 = vrot.lane.b32.xlu0 %v1065, 110
      %v1082 = vpop.permute.xlu0 %1081
      %1084 = vst.msk [vmem:[#allocation2 + $0x10] sm:$0xc] %vm1040, %v1082
      %v1085 = vld [vmem:[%s165 + $0x4] sm:$0x1]
      %v1086 = vld [vmem:[%s165 + $0x10] sm:$0x1]
      %v1087 = vld [vmem:[%s165 + $0x1c] sm:$0x1]
      %v1088 = vld [vmem:[%s165 + $0x28] sm:$0x1]
      %v1093 = vunpack.c.l.b16 %v1085
      %v1094 = vunpack.c.l.b16 %v1086
      %v1095 = vunpack.c.l.b16 %v1087
      %v1096 = vunpack.c.l.b16 %v1088
      %v1097 = vrot.slane %v1093, 1
      %v1098 = vsel %vm185, %v1094, %v1097
      %v1099 = vrot.slane %v1095, 7
      %v1100 = vsel %vm188, %v1099, %v1098
      %v1101 = vrot.slane %v1096, 6
      %v1102 = vsel %vm191, %v1101, %v1100
      %v1103 = vpack.c.b16 %v1102, %v1102
      %1104 = vrot.lane.b32.xlu0 %v1103, 112
      %v1105 = vpop.permute.xlu0 %1104
      %1107 = vst.msk [vmem:[#allocation2 + $0x18] sm:$0x3] %vm1028, %v1105
      %v1108 = vrot.slane %v1093, 5
      %v1109 = vrot.slane %v1094, 4
      %v1110 = vsel %vm199, %v1109, %v1108
      %v1111 = vrot.slane %v1095, 3
      %v1112 = vsel %vm202, %v1111, %v1110
      %v1113 = vrot.slane %v1096, 2
      %v1114 = vsel %vm205, %v1113, %v1112
      %v1115 = vpack.c.b16 %v1114, %v1114
      %1116 = vrot.lane.b32.xlu0 %v1115, 111
      %v1117 = vpop.permute.xlu0 %1116
      %1119 = vst.msk [vmem:[#allocation2 + $0x18] sm:$0xc] %vm1040, %v1117
      %1120 = vrot.lane.b32.xlu0 %v1103, 110
      %v1121 = vpop.permute.xlu0 %1120
      %1123 = vst.msk [vmem:[#allocation2 + $0x20] sm:$0x3] %vm1028, %v1121
      %v1124 = vld [vmem:[%s165 + $0x4] sm:$0x1]
      %v1125 = vld [vmem:[%s165 + $0x10] sm:$0x1]
      %v1126 = vld [vmem:[%s165 + $0x1c] sm:$0x1]
      %v1127 = vld [vmem:[%s165 + $0x28] sm:$0x1]
      %v1132 = vunpack.c.l.b16 %v1124
      %v1133 = vunpack.c.l.b16 %v1125
      %v1134 = vunpack.c.l.b16 %v1126
      %v1135 = vunpack.c.l.b16 %v1127
      %v1136 = vrot.slane %v1133, 7
      %v1137 = vsel %vm185, %v1136, %v1132
      %v1138 = vrot.slane %v1134, 6
      %v1139 = vsel %vm188, %v1138, %v1137
      %v1140 = vrot.slane %v1135, 5
      %v1141 = vsel %vm191, %v1140, %v1139
      %v1142 = vpack.c.b16 %v1141, %v1141
      %1144 = vst.msk [vmem:[#allocation2 + $0x4] sm:$0x3] %vm195, %v1142
      %v1145 = vrot.slane %v1132, 4
      %v1146 = vrot.slane %v1133, 3
      %v1147 = vsel %vm199, %v1146, %v1145
      %v1148 = vrot.slane %v1134, 2
      %v1149 = vsel %vm202, %v1148, %v1147
      %v1150 = vrot.slane %v1135, 1
      %v1151 = vsel %vm205, %v1150, %v1149
      %v1152 = vpack.c.b16 %v1151, %v1151
      %1153 = vrot.lane.b32.xlu0 %v1152, 127
      %v1154 = vpop.permute.xlu0 %1153
      %1156 = vst.msk [vmem:[#allocation2 + $0x4] sm:$0xc] %vm211, %v1154
      %1157 = vrot.lane.b32.xlu0 %v1142, 126
      %v1158 = vpop.permute.xlu0 %1157
      %1160 = vst.msk [vmem:[#allocation2 + $0xc] sm:$0x3] %vm195, %v1158
      %v1161 = vld [vmem:[%s165 + $0x4] sm:$0x1]
      %v1162 = vld [vmem:[%s165 + $0x10] sm:$0x1]
      %v1163 = vld [vmem:[%s165 + $0x1c] sm:$0x1]
      %v1164 = vld [vmem:[%s165 + $0x28] sm:$0x1]
      %v1169 = vunpack.c.l.b16 %v1161
      %v1170 = vunpack.c.l.b16 %v1162
      %v1171 = vunpack.c.l.b16 %v1163
      %v1172 = vunpack.c.l.b16 %v1164
      %v1173 = vrot.slane %v1169, 5
      %v1174 = vrot.slane %v1170, 4
      %v1175 = vsel %vm199, %v1174, %v1173
      %v1176 = vrot.slane %v1171, 3
      %v1177 = vsel %vm202, %v1176, %v1175
      %v1178 = vrot.slane %v1172, 2
      %v1179 = vsel %vm205, %v1178, %v1177
      %v1180 = vpack.c.b16 %v1179, %v1179
      %1182 = vst.msk [vmem:[#allocation2 + $0xc] sm:$0xc] %vm211, %v1180
      %v1183 = vrot.slane %v1169, 1
      %v1184 = vsel %vm185, %v1170, %v1183
      %v1185 = vrot.slane %v1171, 7
      %v1186 = vsel %vm188, %v1185, %v1184
      %v1187 = vrot.slane %v1172, 6
      %v1188 = vsel %vm191, %v1187, %v1186
      %v1189 = vpack.c.b16 %v1188, %v1188
      %1190 = vrot.lane.b32.xlu0 %v1189, 127
      %v1191 = vpop.permute.xlu0 %1190
      %1193 = vst.msk [vmem:[#allocation2 + $0x14] sm:$0x3] %vm195, %v1191
      %1194 = vrot.lane.b32.xlu0 %v1180, 126
      %v1195 = vpop.permute.xlu0 %1194
      %1197 = vst.msk [vmem:[#allocation2 + $0x14] sm:$0xc] %vm211, %v1195
      %v1198 = vld [vmem:[%s165 + $0x4] sm:$0x2]
      %v1199 = vld [vmem:[%s165 + $0x10] sm:$0x2]
      %v1200 = vld [vmem:[%s165 + $0x1c] sm:$0x2]
      %v1201 = vld [vmem:[%s165 + $0x28] sm:$0x2]
      %v1206 = vunpack.c.l.b16 %v1198
      %v1207 = vunpack.c.l.b16 %v1199
      %v1208 = vunpack.c.l.b16 %v1200
      %v1209 = vunpack.c.l.b16 %v1201
      %v1210 = vrot.slane %v1206, 2
      %v1211 = vrot.slane %v1207, 1
      %v1212 = vsel %vm185, %v1211, %v1210
      %v1213 = vsel %vm188, %v1208, %v1212
      %v1214 = vrot.slane %v1209, 7
      %v1215 = vsel %vm191, %v1214, %v1213
      %v1216 = vpack.c.b16 %v1215, %v1215
      %1218 = vst.msk [vmem:[#allocation2 + $0x1c] sm:$0x3] %vm195, %v1216
      %v1219 = vrot.slane %v1206, 6
      %v1220 = vrot.slane %v1207, 5
      %v1221 = vsel %vm199, %v1220, %v1219
      %v1222 = vrot.slane %v1208, 4
      %v1223 = vsel %vm202, %v1222, %v1221
      %v1224 = vrot.slane %v1209, 3
      %v1225 = vsel %vm205, %v1224, %v1223
      %v1226 = vpack.c.b16 %v1225, %v1225
      %1227 = vrot.lane.b32.xlu0 %v1226, 127
      %v1228 = vpop.permute.xlu0 %1227
      %1230 = vst.msk [vmem:[#allocation2 + $0x1c] sm:$0xc] %vm211, %v1228
      %1231 = vrot.lane.b32.xlu0 %v1216, 126
      %v1232 = vpop.permute.xlu0 %1231
      %1234 = vst.msk [vmem:[#allocation2 + $0x24] sm:$0x3] %vm195, %v1232
      %v1235 = vld [vmem:[%s165 + $0x4] sm:$0x1]
      %v1236 = vld [vmem:[%s165 + $0x10] sm:$0x1]
      %v1237 = vld [vmem:[%s165 + $0x1c] sm:$0x1]
      %v1238 = vld [vmem:[%s165 + $0x28] sm:$0x1]
      %v1243 = vunpack.c.l.b16 %v1235
      %v1244 = vunpack.c.l.b16 %v1236
      %v1245 = vunpack.c.l.b16 %v1237
      %v1246 = vunpack.c.l.b16 %v1238
      %v1247 = vrot.slane %v1243, 1
      %v1248 = vsel %vm185, %v1244, %v1247
      %v1249 = vrot.slane %v1245, 7
      %v1250 = vsel %vm188, %v1249, %v1248
      %v1251 = vrot.slane %v1246, 6
      %v1252 = vsel %vm191, %v1251, %v1250
      %v1253 = vpack.c.b16 %v1252, %v1252
      %1254 = vrot.lane.b32.xlu0 %v1253, 16
      %v1255 = vpop.permute.xlu0 %1254
      %1257 = vst.msk [vmem:[#allocation2 + $0x4] sm:$0x3] %vm313, %v1255
      %v1258 = vrot.slane %v1243, 5
      %v1259 = vrot.slane %v1244, 4
      %v1260 = vsel %vm199, %v1259, %v1258
      %v1261 = vrot.slane %v1245, 3
      %v1262 = vsel %vm202, %v1261, %v1260
      %v1263 = vrot.slane %v1246, 2
      %v1264 = vsel %vm205, %v1263, %v1262
      %v1265 = vpack.c.b16 %v1264, %v1264
      %1266 = vrot.lane.b32.xlu0 %v1265, 15
      %v1267 = vpop.permute.xlu0 %1266
      %1269 = vst.msk [vmem:[#allocation2 + $0x4] sm:$0xc] %vm326, %v1267
      %1270 = vrot.lane.b32.xlu0 %v1253, 14
      %v1271 = vpop.permute.xlu0 %1270
      %1273 = vst.msk [vmem:[#allocation2 + $0xc] sm:$0x3] %vm313, %v1271
      %v1274 = vld [vmem:[%s165 + $0x4] sm:$0x2]
      %v1275 = vld [vmem:[%s165 + $0x10] sm:$0x2]
      %v1276 = vld [vmem:[%s165 + $0x1c] sm:$0x2]
      %v1277 = vld [vmem:[%s165 + $0x28] sm:$0x2]
      %v1282 = vunpack.c.l.b16 %v1274
      %v1283 = vunpack.c.l.b16 %v1275
      %v1284 = vunpack.c.l.b16 %v1276
      %v1285 = vunpack.c.l.b16 %v1277
      %v1286 = vrot.slane %v1282, 6
      %v1287 = vrot.slane %v1283, 5
      %v1288 = vsel %vm199, %v1287, %v1286
      %v1289 = vrot.slane %v1284, 4
      %v1290 = vsel %vm202, %v1289, %v1288
      %v1291 = vrot.slane %v1285, 3
      %v1292 = vsel %vm205, %v1291, %v1290
      %v1293 = vpack.c.b16 %v1292, %v1292
      %1294 = vrot.lane.b32.xlu0 %v1293, 16
      %v1295 = vpop.permute.xlu0 %1294
      %1297 = vst.msk [vmem:[#allocation2 + $0xc] sm:$0xc] %vm326, %v1295
      %v1298 = vrot.slane %v1282, 2
      %v1299 = vrot.slane %v1283, 1
      %v1300 = vsel %vm185, %v1299, %v1298
      %v1301 = vsel %vm188, %v1284, %v1300
      %v1302 = vrot.slane %v1285, 7
      %v1303 = vsel %vm191, %v1302, %v1301
      %v1304 = vpack.c.b16 %v1303, %v1303
      %1305 = vrot.lane.b32.xlu0 %v1304, 15
      %v1306 = vpop.permute.xlu0 %1305
      %1308 = vst.msk [vmem:[#allocation2 + $0x14] sm:$0x3] %vm313, %v1306
      %1309 = vrot.lane.b32.xlu0 %v1293, 14
      %v1310 = vpop.permute.xlu0 %1309
      %1312 = vst.msk [vmem:[#allocation2 + $0x14] sm:$0xc] %vm326, %v1310
      %v1313 = vld [vmem:[%s165 + $0x4] sm:$0x2]
      %v1314 = vld [vmem:[%s165 + $0x10] sm:$0x2]
      %v1315 = vld [vmem:[%s165 + $0x1c] sm:$0x2]
      %v1316 = vld [vmem:[%s165 + $0x28] sm:$0x2]
      %v1321 = vunpack.c.l.b16 %v1313
      %v1322 = vunpack.c.l.b16 %v1314
      %v1323 = vunpack.c.l.b16 %v1315
      %v1324 = vunpack.c.l.b16 %v1316
      %v1325 = vrot.slane %v1321, 3
      %v1326 = vrot.slane %v1322, 2
      %v1327 = vsel %vm185, %v1326, %v1325
      %v1328 = vrot.slane %v1323, 1
      %v1329 = vsel %vm188, %v1328, %v1327
      %v1330 = vsel %vm191, %v1324, %v1329
      %v1331 = vpack.c.b16 %v1330, %v1330
      %1332 = vrot.lane.b32.xlu0 %v1331, 16
      %v1333 = vpop.permute.xlu0 %1332
      %1335 = vst.msk [vmem:[#allocation2 + $0x1c] sm:$0x3] %vm313, %v1333
      %v1336 = vrot.slane %v1321, 7
      %v1337 = vrot.slane %v1322, 6
      %v1338 = vsel %vm199, %v1337, %v1336
      %v1339 = vrot.slane %v1323, 5
      %v1340 = vsel %vm202, %v1339, %v1338
      %v1341 = vrot.slane %v1324, 4
      %v1342 = vsel %vm205, %v1341, %v1340
      %v1343 = vpack.c.b16 %v1342, %v1342
      %1344 = vrot.lane.b32.xlu0 %v1343, 15
      %v1345 = vpop.permute.xlu0 %1344
      %1347 = vst.msk [vmem:[#allocation2 + $0x1c] sm:$0xc] %vm326, %v1345
      %1348 = vrot.lane.b32.xlu0 %v1331, 14
      %v1349 = vpop.permute.xlu0 %1348
      %1351 = vst.msk [vmem:[#allocation2 + $0x24] sm:$0x3] %vm313, %v1349
      %v1352 = vld [vmem:[%s165 + $0x4] sm:$0x2]
      %v1353 = vld [vmem:[%s165 + $0x10] sm:$0x2]
      %v1354 = vld [vmem:[%s165 + $0x1c] sm:$0x2]
      %v1355 = vld [vmem:[%s165 + $0x28] sm:$0x2]
      %v1360 = vunpack.c.l.b16 %v1352
      %v1361 = vunpack.c.l.b16 %v1353
      %v1362 = vunpack.c.l.b16 %v1354
      %v1363 = vunpack.c.l.b16 %v1355
      %v1364 = vrot.slane %v1360, 2
      %v1365 = vrot.slane %v1361, 1
      %v1366 = vsel %vm185, %v1365, %v1364
      %v1367 = vsel %vm188, %v1362, %v1366
      %v1368 = vrot.slane %v1363, 7
      %v1369 = vsel %vm191, %v1368, %v1367
      %v1370 = vpack.c.b16 %v1369, %v1369
      %1371 = vrot.lane.b32.xlu0 %v1370, 32
      %v1372 = vpop.permute.xlu0 %1371
      %1374 = vst.msk [vmem:[#allocation2 + $0x4] sm:$0x3] %vm432, %v1372
      %v1375 = vrot.slane %v1360, 6
      %v1376 = vrot.slane %v1361, 5
      %v1377 = vsel %vm199, %v1376, %v1375
      %v1378 = vrot.slane %v1362, 4
      %v1379 = vsel %vm202, %v1378, %v1377
      %v1380 = vrot.slane %v1363, 3
      %v1381 = vsel %vm205, %v1380, %v1379
      %v1382 = vpack.c.b16 %v1381, %v1381
      %1383 = vrot.lane.b32.xlu0 %v1382, 31
      %v1384 = vpop.permute.xlu0 %1383
      %1386 = vst.msk [vmem:[#allocation2 + $0x4] sm:$0xc] %vm445, %v1384
      %1387 = vrot.lane.b32.xlu0 %v1370, 30
      %v1388 = vpop.permute.xlu0 %1387
      %1390 = vst.msk [vmem:[#allocation2 + $0xc] sm:$0x3] %vm432, %v1388
      %v1391 = vld [vmem:[%s165 + $0x4] sm:$0x2]
      %v1392 = vld [vmem:[%s165 + $0x10] sm:$0x2]
      %v1393 = vld [vmem:[%s165 + $0x1c] sm:$0x2]
      %v1394 = vld [vmem:[%s165 + $0x28] sm:$0x2]
      %v1399 = vunpack.c.l.b16 %v1391
      %v1400 = vunpack.c.l.b16 %v1392
      %v1401 = vunpack.c.l.b16 %v1393
      %v1402 = vunpack.c.l.b16 %v1394
      %v1403 = vrot.slane %v1399, 7
      %v1404 = vrot.slane %v1400, 6
      %v1405 = vsel %vm199, %v1404, %v1403
      %v1406 = vrot.slane %v1401, 5
      %v1407 = vsel %vm202, %v1406, %v1405
      %v1408 = vrot.slane %v1402, 4
      %v1409 = vsel %vm205, %v1408, %v1407
      %v1410 = vpack.c.b16 %v1409, %v1409
      %1411 = vrot.lane.b32.xlu0 %v1410, 32
      %v1412 = vpop.permute.xlu0 %1411
      %1414 = vst.msk [vmem:[#allocation2 + $0xc] sm:$0xc] %vm445, %v1412
      %v1415 = vrot.slane %v1399, 3
      %v1416 = vrot.slane %v1400, 2
      %v1417 = vsel %vm185, %v1416, %v1415
      %v1418 = vrot.slane %v1401, 1
      %v1419 = vsel %vm188, %v1418, %v1417
      %v1420 = vsel %vm191, %v1402, %v1419
      %v1421 = vpack.c.b16 %v1420, %v1420
      %1422 = vrot.lane.b32.xlu0 %v1421, 31
      %v1423 = vpop.permute.xlu0 %1422
      %1425 = vst.msk [vmem:[#allocation2 + $0x14] sm:$0x3] %vm432, %v1423
      %1426 = vrot.lane.b32.xlu0 %v1410, 30
      %v1427 = vpop.permute.xlu0 %1426
      %1429 = vst.msk [vmem:[#allocation2 + $0x14] sm:$0xc] %vm445, %v1427
      %v1430 = vld [vmem:[%s165 + $0x4] sm:$0x4]
      %v1431 = vld [vmem:[%s165 + $0x10] sm:$0x4]
      %v1432 = vld [vmem:[%s165 + $0x1c] sm:$0x4]
      %v1433 = vld [vmem:[%s165 + $0x28] sm:$0x4]
      %v1438 = vunpack.c.l.b16 %v1430
      %v1439 = vunpack.c.l.b16 %v1431
      %v1440 = vunpack.c.l.b16 %v1432
      %v1441 = vunpack.c.l.b16 %v1433
      %v1442 = vrot.slane %v1438, 4
      %v1443 = vrot.slane %v1439, 3
      %v1444 = vsel %vm185, %v1443, %v1442
      %v1445 = vrot.slane %v1440, 2
      %v1446 = vsel %vm188, %v1445, %v1444
      %v1447 = vrot.slane %v1441, 1
      %v1448 = vsel %vm191, %v1447, %v1446
      %v1449 = vpack.c.b16 %v1448, %v1448
      %1450 = vrot.lane.b32.xlu0 %v1449, 32
      %v1451 = vpop.permute.xlu0 %1450
      %1453 = vst.msk [vmem:[#allocation2 + $0x1c] sm:$0x3] %vm432, %v1451
      %v1454 = vrot.slane %v1439, 7
      %v1455 = vsel %vm199, %v1454, %v1438
      %v1456 = vrot.slane %v1440, 6
      %v1457 = vsel %vm202, %v1456, %v1455
      %v1458 = vrot.slane %v1441, 5
      %v1459 = vsel %vm205, %v1458, %v1457
      %v1460 = vpack.c.b16 %v1459, %v1459
      %1461 = vrot.lane.b32.xlu0 %v1460, 31
      %v1462 = vpop.permute.xlu0 %1461
      %1464 = vst.msk [vmem:[#allocation2 + $0x1c] sm:$0xc] %vm445, %v1462
      %1465 = vrot.lane.b32.xlu0 %v1449, 30
      %v1466 = vpop.permute.xlu0 %1465
      %1468 = vst.msk [vmem:[#allocation2 + $0x24] sm:$0x3] %vm432, %v1466
      %v1469 = vld [vmem:[%s165 + $0x4] sm:$0x2]
      %v1470 = vld [vmem:[%s165 + $0x10] sm:$0x2]
      %v1471 = vld [vmem:[%s165 + $0x1c] sm:$0x2]
      %v1472 = vld [vmem:[%s165 + $0x28] sm:$0x2]
      %v1477 = vunpack.c.l.b16 %v1469
      %v1478 = vunpack.c.l.b16 %v1470
      %v1479 = vunpack.c.l.b16 %v1471
      %v1480 = vunpack.c.l.b16 %v1472
      %v1481 = vrot.slane %v1477, 3
      %v1482 = vrot.slane %v1478, 2
      %v1483 = vsel %vm185, %v1482, %v1481
      %v1484 = vrot.slane %v1479, 1
      %v1485 = vsel %vm188, %v1484, %v1483
      %v1486 = vsel %vm191, %v1480, %v1485
      %v1487 = vpack.c.b16 %v1486, %v1486
      %1488 = vrot.lane.b32.xlu0 %v1487, 48
      %v1489 = vpop.permute.xlu0 %1488
      %1491 = vst.msk [vmem:[#allocation2 + $0x4] sm:$0x3] %vm551, %v1489
      %v1492 = vrot.slane %v1477, 7
      %v1493 = vrot.slane %v1478, 6
      %v1494 = vsel %vm199, %v1493, %v1492
      %v1495 = vrot.slane %v1479, 5
      %v1496 = vsel %vm202, %v1495, %v1494
      %v1497 = vrot.slane %v1480, 4
      %v1498 = vsel %vm205, %v1497, %v1496
      %v1499 = vpack.c.b16 %v1498, %v1498
      %1500 = vrot.lane.b32.xlu0 %v1499, 47
      %v1501 = vpop.permute.xlu0 %1500
      %1503 = vst.msk [vmem:[#allocation2 + $0x4] sm:$0xc] %vm564, %v1501
      %1504 = vrot.lane.b32.xlu0 %v1487, 46
      %v1505 = vpop.permute.xlu0 %1504
      %1507 = vst.msk [vmem:[#allocation2 + $0xc] sm:$0x3] %vm551, %v1505
      %v1508 = vld [vmem:[%s165 + $0x4] sm:$0x4]
      %v1509 = vld [vmem:[%s165 + $0x10] sm:$0x4]
      %v1510 = vld [vmem:[%s165 + $0x1c] sm:$0x4]
      %v1511 = vld [vmem:[%s165 + $0x28] sm:$0x4]
      %v1516 = vunpack.c.l.b16 %v1508
      %v1517 = vunpack.c.l.b16 %v1509
      %v1518 = vunpack.c.l.b16 %v1510
      %v1519 = vunpack.c.l.b16 %v1511
      %v1520 = vrot.slane %v1517, 7
      %v1521 = vsel %vm199, %v1520, %v1516
      %v1522 = vrot.slane %v1518, 6
      %v1523 = vsel %vm202, %v1522, %v1521
      %v1524 = vrot.slane %v1519, 5
      %v1525 = vsel %vm205, %v1524, %v1523
      %v1526 = vpack.c.b16 %v1525, %v1525
      %1527 = vrot.lane.b32.xlu0 %v1526, 48
      %v1528 = vpop.permute.xlu0 %1527
      %1530 = vst.msk [vmem:[#allocation2 + $0xc] sm:$0xc] %vm564, %v1528
      %v1531 = vrot.slane %v1516, 4
      %v1532 = vrot.slane %v1517, 3
      %v1533 = vsel %vm185, %v1532, %v1531
      %v1534 = vrot.slane %v1518, 2
      %v1535 = vsel %vm188, %v1534, %v1533
      %v1536 = vrot.slane %v1519, 1
      %v1537 = vsel %vm191, %v1536, %v1535
      %v1538 = vpack.c.b16 %v1537, %v1537
      %1539 = vrot.lane.b32.xlu0 %v1538, 47
      %v1540 = vpop.permute.xlu0 %1539
      %1542 = vst.msk [vmem:[#allocation2 + $0x14] sm:$0x3] %vm551, %v1540
      %1543 = vrot.lane.b32.xlu0 %v1526, 46
      %v1544 = vpop.permute.xlu0 %1543
      %1546 = vst.msk [vmem:[#allocation2 + $0x14] sm:$0xc] %vm564, %v1544
      %v1547 = vld [vmem:[%s165 + $0x4] sm:$0x4]
      %v1548 = vld [vmem:[%s165 + $0x10] sm:$0x4]
      %v1549 = vld [vmem:[%s165 + $0x1c] sm:$0x4]
      %v1550 = vld [vmem:[%s165 + $0x28] sm:$0x4]
      %v1555 = vunpack.c.l.b16 %v1547
      %v1556 = vunpack.c.l.b16 %v1548
      %v1557 = vunpack.c.l.b16 %v1549
      %v1558 = vunpack.c.l.b16 %v1550
      %v1559 = vrot.slane %v1555, 5
      %v1560 = vrot.slane %v1556, 4
      %v1561 = vsel %vm185, %v1560, %v1559
      %v1562 = vrot.slane %v1557, 3
      %v1563 = vsel %vm188, %v1562, %v1561
      %v1564 = vrot.slane %v1558, 2
      %v1565 = vsel %vm191, %v1564, %v1563
      %v1566 = vpack.c.b16 %v1565, %v1565
      %1567 = vrot.lane.b32.xlu0 %v1566, 48
      %v1568 = vpop.permute.xlu0 %1567
      %1570 = vst.msk [vmem:[#allocation2 + $0x1c] sm:$0x3] %vm551, %v1568
      %v1571 = vrot.slane %v1555, 1
      %v1572 = vsel %vm199, %v1556, %v1571
      %v1573 = vrot.slane %v1557, 7
      %v1574 = vsel %vm202, %v1573, %v1572
      %v1575 = vrot.slane %v1558, 6
      %v1576 = vsel %vm205, %v1575, %v1574
      %v1577 = vpack.c.b16 %v1576, %v1576
      %1578 = vrot.lane.b32.xlu0 %v1577, 47
      %v1579 = vpop.permute.xlu0 %1578
      %1581 = vst.msk [vmem:[#allocation2 + $0x1c] sm:$0xc] %vm564, %v1579
      %1582 = vrot.lane.b32.xlu0 %v1566, 46
      %v1583 = vpop.permute.xlu0 %1582
      %1585 = vst.msk [vmem:[#allocation2 + $0x24] sm:$0x3] %vm551, %v1583
      %v1586 = vld [vmem:[%s165 + $0x4] sm:$0x4]
      %v1587 = vld [vmem:[%s165 + $0x10] sm:$0x4]
      %v1588 = vld [vmem:[%s165 + $0x1c] sm:$0x4]
      %v1589 = vld [vmem:[%s165 + $0x28] sm:$0x4]
      %v1594 = vunpack.c.l.b16 %v1586
      %v1595 = vunpack.c.l.b16 %v1587
      %v1596 = vunpack.c.l.b16 %v1588
      %v1597 = vunpack.c.l.b16 %v1589
      %v1598 = vrot.slane %v1594, 4
      %v1599 = vrot.slane %v1595, 3
      %v1600 = vsel %vm185, %v1599, %v1598
      %v1601 = vrot.slane %v1596, 2
      %v1602 = vsel %vm188, %v1601, %v1600
      %v1603 = vrot.slane %v1597, 1
      %v1604 = vsel %vm191, %v1603, %v1602
      %v1605 = vpack.c.b16 %v1604, %v1604
      %1606 = vrot.lane.b32.xlu0 %v1605, 64
      %v1607 = vpop.permute.xlu0 %1606
      %1609 = vst.msk [vmem:[#allocation2 + $0x4] sm:$0x3] %vm671, %v1607
      %v1610 = vrot.slane %v1595, 7
      %v1611 = vsel %vm199, %v1610, %v1594
      %v1612 = vrot.slane %v1596, 6
      %v1613 = vsel %vm202, %v1612, %v1611
      %v1614 = vrot.slane %v1597, 5
      %v1615 = vsel %vm205, %v1614, %v1613
      %v1616 = vpack.c.b16 %v1615, %v1615
      %1617 = vrot.lane.b32.xlu0 %v1616, 63
      %v1618 = vpop.permute.xlu0 %1617
      %1620 = vst.msk [vmem:[#allocation2 + $0x4] sm:$0xc] %vm683, %v1618
      %1621 = vrot.lane.b32.xlu0 %v1605, 62
      %v1622 = vpop.permute.xlu0 %1621
      %1624 = vst.msk [vmem:[#allocation2 + $0xc] sm:$0x3] %vm671, %v1622
      %v1625 = vld [vmem:[%s165 + $0x4] sm:$0x4]
      %v1626 = vld [vmem:[%s165 + $0x10] sm:$0x4]
      %v1627 = vld [vmem:[%s165 + $0x1c] sm:$0x4]
      %v1628 = vld [vmem:[%s165 + $0x28] sm:$0x4]
      %v1633 = vunpack.c.l.b16 %v1625
      %v1634 = vunpack.c.l.b16 %v1626
      %v1635 = vunpack.c.l.b16 %v1627
      %v1636 = vunpack.c.l.b16 %v1628
      %v1637 = vrot.slane %v1633, 1
      %v1638 = vsel %vm199, %v1634, %v1637
      %v1639 = vrot.slane %v1635, 7
      %v1640 = vsel %vm202, %v1639, %v1638
      %v1641 = vrot.slane %v1636, 6
      %v1642 = vsel %vm205, %v1641, %v1640
      %v1643 = vpack.c.b16 %v1642, %v1642
      %1644 = vrot.lane.b32.xlu0 %v1643, 64
      %v1645 = vpop.permute.xlu0 %1644
      %1647 = vst.msk [vmem:[#allocation2 + $0xc] sm:$0xc] %vm683, %v1645
      %v1648 = vrot.slane %v1633, 5
      %v1649 = vrot.slane %v1634, 4
      %v1650 = vsel %vm185, %v1649, %v1648
      %v1651 = vrot.slane %v1635, 3
      %v1652 = vsel %vm188, %v1651, %v1650
      %v1653 = vrot.slane %v1636, 2
      %v1654 = vsel %vm191, %v1653, %v1652
      %v1655 = vpack.c.b16 %v1654, %v1654
      %1656 = vrot.lane.b32.xlu0 %v1655, 63
      %v1657 = vpop.permute.xlu0 %1656
      %1659 = vst.msk [vmem:[#allocation2 + $0x14] sm:$0x3] %vm671, %v1657
      %1660 = vrot.lane.b32.xlu0 %v1643, 62
      %v1661 = vpop.permute.xlu0 %1660
      %1663 = vst.msk [vmem:[#allocation2 + $0x14] sm:$0xc] %vm683, %v1661
      %v1664 = vld [vmem:[%s165 + $0x4] sm:$0x8]
      %v1665 = vld [vmem:[%s165 + $0x10] sm:$0x8]
      %v1666 = vld [vmem:[%s165 + $0x1c] sm:$0x8]
      %v1667 = vld [vmem:[%s165 + $0x28] sm:$0x8]
      %v1672 = vunpack.c.l.b16 %v1664
      %v1673 = vunpack.c.l.b16 %v1665
      %v1674 = vunpack.c.l.b16 %v1666
      %v1675 = vunpack.c.l.b16 %v1667
      %v1676 = vrot.slane %v1672, 6
      %v1677 = vrot.slane %v1673, 5
      %v1678 = vsel %vm185, %v1677, %v1676
      %v1679 = vrot.slane %v1674, 4
      %v1680 = vsel %vm188, %v1679, %v1678
      %v1681 = vrot.slane %v1675, 3
      %v1682 = vsel %vm191, %v1681, %v1680
      %v1683 = vpack.c.b16 %v1682, %v1682
      %1684 = vrot.lane.b32.xlu0 %v1683, 64
      %v1685 = vpop.permute.xlu0 %1684
      %1687 = vst.msk [vmem:[#allocation2 + $0x1c] sm:$0x3] %vm671, %v1685
      %v1688 = vrot.slane %v1672, 2
      %v1689 = vrot.slane %v1673, 1
      %v1690 = vsel %vm199, %v1689, %v1688
      %v1691 = vsel %vm202, %v1674, %v1690
      %v1692 = vrot.slane %v1675, 7
      %v1693 = vsel %vm205, %v1692, %v1691
      %v1694 = vpack.c.b16 %v1693, %v1693
      %1695 = vrot.lane.b32.xlu0 %v1694, 63
      %v1696 = vpop.permute.xlu0 %1695
      %1698 = vst.msk [vmem:[#allocation2 + $0x1c] sm:$0xc] %vm683, %v1696
      %1699 = vrot.lane.b32.xlu0 %v1683, 62
      %v1700 = vpop.permute.xlu0 %1699
      %1702 = vst.msk [vmem:[#allocation2 + $0x24] sm:$0x3] %vm671, %v1700
      %v1703 = vld [vmem:[%s165 + $0x4] sm:$0x4]
      %v1704 = vld [vmem:[%s165 + $0x10] sm:$0x4]
      %v1705 = vld [vmem:[%s165 + $0x1c] sm:$0x4]
      %v1706 = vld [vmem:[%s165 + $0x28] sm:$0x4]
      %v1711 = vunpack.c.l.b16 %v1703
      %v1712 = vunpack.c.l.b16 %v1704
      %v1713 = vunpack.c.l.b16 %v1705
      %v1714 = vunpack.c.l.b16 %v1706
      %v1715 = vrot.slane %v1711, 5
      %v1716 = vrot.slane %v1712, 4
      %v1717 = vsel %vm185, %v1716, %v1715
      %v1718 = vrot.slane %v1713, 3
      %v1719 = vsel %vm188, %v1718, %v1717
      %v1720 = vrot.slane %v1714, 2
      %v1721 = vsel %vm191, %v1720, %v1719
      %v1722 = vpack.c.b16 %v1721, %v1721
      %1723 = vrot.lane.b32.xlu0 %v1722, 80
      %v1724 = vpop.permute.xlu0 %1723
      %1726 = vst.msk [vmem:[#allocation2 + $0x4] sm:$0x3] %vm790, %v1724
      %v1727 = vrot.slane %v1711, 1
      %v1728 = vsel %vm199, %v1712, %v1727
      %v1729 = vrot.slane %v1713, 7
      %v1730 = vsel %vm202, %v1729, %v1728
      %v1731 = vrot.slane %v1714, 6
      %v1732 = vsel %vm205, %v1731, %v1730
      %v1733 = vpack.c.b16 %v1732, %v1732
      %1734 = vrot.lane.b32.xlu0 %v1733, 79
      %v1735 = vpop.permute.xlu0 %1734
      %1737 = vst.msk [vmem:[#allocation2 + $0x4] sm:$0xc] %vm802, %v1735
      %1738 = vrot.lane.b32.xlu0 %v1722, 78
      %v1739 = vpop.permute.xlu0 %1738
      %1741 = vst.msk [vmem:[#allocation2 + $0xc] sm:$0x3] %vm790, %v1739
      %v1742 = vld [vmem:[%s165 + $0x4] sm:$0x8]
      %v1743 = vld [vmem:[%s165 + $0x10] sm:$0x8]
      %v1744 = vld [vmem:[%s165 + $0x1c] sm:$0x8]
      %v1745 = vld [vmem:[%s165 + $0x28] sm:$0x8]
      %v1750 = vunpack.c.l.b16 %v1742
      %v1751 = vunpack.c.l.b16 %v1743
      %v1752 = vunpack.c.l.b16 %v1744
      %v1753 = vunpack.c.l.b16 %v1745
      %v1754 = vrot.slane %v1750, 2
      %v1755 = vrot.slane %v1751, 1
      %v1756 = vsel %vm199, %v1755, %v1754
      %v1757 = vsel %vm202, %v1752, %v1756
      %v1758 = vrot.slane %v1753, 7
      %v1759 = vsel %vm205, %v1758, %v1757
      %v1760 = vpack.c.b16 %v1759, %v1759
      %1761 = vrot.lane.b32.xlu0 %v1760, 80
      %v1762 = vpop.permute.xlu0 %1761
      %1764 = vst.msk [vmem:[#allocation2 + $0xc] sm:$0xc] %vm802, %v1762
      %v1765 = vrot.slane %v1750, 6
      %v1766 = vrot.slane %v1751, 5
      %v1767 = vsel %vm185, %v1766, %v1765
      %v1768 = vrot.slane %v1752, 4
      %v1769 = vsel %vm188, %v1768, %v1767
      %v1770 = vrot.slane %v1753, 3
      %v1771 = vsel %vm191, %v1770, %v1769
      %v1772 = vpack.c.b16 %v1771, %v1771
      %1773 = vrot.lane.b32.xlu0 %v1772, 79
      %v1774 = vpop.permute.xlu0 %1773
      %1776 = vst.msk [vmem:[#allocation2 + $0x14] sm:$0x3] %vm790, %v1774
      %1777 = vrot.lane.b32.xlu0 %v1760, 78
      %v1778 = vpop.permute.xlu0 %1777
      %1780 = vst.msk [vmem:[#allocation2 + $0x14] sm:$0xc] %vm802, %v1778
      %v1781 = vld [vmem:[%s165 + $0x4] sm:$0x8]
      %v1782 = vld [vmem:[%s165 + $0x10] sm:$0x8]
      %v1783 = vld [vmem:[%s165 + $0x1c] sm:$0x8]
      %v1784 = vld [vmem:[%s165 + $0x28] sm:$0x8]
      %v1789 = vunpack.c.l.b16 %v1781
      %v1790 = vunpack.c.l.b16 %v1782
      %v1791 = vunpack.c.l.b16 %v1783
      %v1792 = vunpack.c.l.b16 %v1784
      %v1793 = vrot.slane %v1789, 7
      %v1794 = vrot.slane %v1790, 6
      %v1795 = vsel %vm185, %v1794, %v1793
      %v1796 = vrot.slane %v1791, 5
      %v1797 = vsel %vm188, %v1796, %v1795
      %v1798 = vrot.slane %v1792, 4
      %v1799 = vsel %vm191, %v1798, %v1797
      %v1800 = vpack.c.b16 %v1799, %v1799
      %1801 = vrot.lane.b32.xlu0 %v1800, 80
      %v1802 = vpop.permute.xlu0 %1801
      %1804 = vst.msk [vmem:[#allocation2 + $0x1c] sm:$0x3] %vm790, %v1802
      %v1805 = vrot.slane %v1789, 3
      %v1806 = vrot.slane %v1790, 2
      %v1807 = vsel %vm199, %v1806, %v1805
      %v1808 = vrot.slane %v1791, 1
      %v1809 = vsel %vm202, %v1808, %v1807
      %v1810 = vsel %vm205, %v1792, %v1809
      %v1811 = vpack.c.b16 %v1810, %v1810
      %1812 = vrot.lane.b32.xlu0 %v1811, 79
      %v1813 = vpop.permute.xlu0 %1812
      %1815 = vst.msk [vmem:[#allocation2 + $0x1c] sm:$0xc] %vm802, %v1813
      %1816 = vrot.lane.b32.xlu0 %v1800, 78
      %v1817 = vpop.permute.xlu0 %1816
      %1819 = vst.msk [vmem:[#allocation2 + $0x24] sm:$0x3] %vm790, %v1817
      %v1820 = vld [vmem:[%s165 + $0x4] sm:$0x8]
      %v1821 = vld [vmem:[%s165 + $0x10] sm:$0x8]
      %v1822 = vld [vmem:[%s165 + $0x1c] sm:$0x8]
      %v1823 = vld [vmem:[%s165 + $0x28] sm:$0x8]
      %v1828 = vunpack.c.l.b16 %v1820
      %v1829 = vunpack.c.l.b16 %v1821
      %v1830 = vunpack.c.l.b16 %v1822
      %v1831 = vunpack.c.l.b16 %v1823
      %v1832 = vrot.slane %v1828, 6
      %v1833 = vrot.slane %v1829, 5
      %v1834 = vsel %vm185, %v1833, %v1832
      %v1835 = vrot.slane %v1830, 4
      %v1836 = vsel %vm188, %v1835, %v1834
      %v1837 = vrot.slane %v1831, 3
      %v1838 = vsel %vm191, %v1837, %v1836
      %v1839 = vpack.c.b16 %v1838, %v1838
      %1840 = vrot.lane.b32.xlu0 %v1839, 96
      %v1841 = vpop.permute.xlu0 %1840
      %1843 = vst.msk [vmem:[#allocation2 + $0x4] sm:$0x3] %vm909, %v1841
      %v1844 = vrot.slane %v1828, 2
      %v1845 = vrot.slane %v1829, 1
      %v1846 = vsel %vm199, %v1845, %v1844
      %v1847 = vsel %vm202, %v1830, %v1846
      %v1848 = vrot.slane %v1831, 7
      %v1849 = vsel %vm205, %v1848, %v1847
      %v1850 = vpack.c.b16 %v1849, %v1849
      %1851 = vrot.lane.b32.xlu0 %v1850, 95
      %v1852 = vpop.permute.xlu0 %1851
      %1854 = vst.msk [vmem:[#allocation2 + $0x4] sm:$0xc] %vm921, %v1852
      %1855 = vrot.lane.b32.xlu0 %v1839, 94
      %v1856 = vpop.permute.xlu0 %1855
      %1858 = vst.msk [vmem:[#allocation2 + $0xc] sm:$0x3] %vm909, %v1856
      %v1859 = vld [vmem:[%s165 + $0x4] sm:$0x8]
      %v1860 = vld [vmem:[%s165 + $0x10] sm:$0x8]
      %v1861 = vld [vmem:[%s165 + $0x1c] sm:$0x8]
      %v1862 = vld [vmem:[%s165 + $0x28] sm:$0x8]
      %v1867 = vunpack.c.l.b16 %v1859
      %v1868 = vunpack.c.l.b16 %v1860
      %v1869 = vunpack.c.l.b16 %v1861
      %v1870 = vunpack.c.l.b16 %v1862
      %v1871 = vrot.slane %v1867, 3
      %v1872 = vrot.slane %v1868, 2
      %v1873 = vsel %vm199, %v1872, %v1871
      %v1874 = vrot.slane %v1869, 1
      %v1875 = vsel %vm202, %v1874, %v1873
      %v1876 = vsel %vm205, %v1870, %v1875
      %v1877 = vpack.c.b16 %v1876, %v1876
      %1878 = vrot.lane.b32.xlu0 %v1877, 96
      %v1879 = vpop.permute.xlu0 %1878
      %1881 = vst.msk [vmem:[#allocation2 + $0xc] sm:$0xc] %vm921, %v1879
      %v1882 = vrot.slane %v1867, 7
      %v1883 = vrot.slane %v1868, 6
      %v1884 = vsel %vm185, %v1883, %v1882
      %v1885 = vrot.slane %v1869, 5
      %v1886 = vsel %vm188, %v1885, %v1884
      %v1887 = vrot.slane %v1870, 4
      %v1888 = vsel %vm191, %v1887, %v1886
      %v1889 = vpack.c.b16 %v1888, %v1888
      %1890 = vrot.lane.b32.xlu0 %v1889, 95
      %v1891 = vpop.permute.xlu0 %1890
      %1893 = vst.msk [vmem:[#allocation2 + $0x14] sm:$0x3] %vm909, %v1891
      %1894 = vrot.lane.b32.xlu0 %v1877, 94
      %v1895 = vpop.permute.xlu0 %1894
      %1897 = vst.msk [vmem:[#allocation2 + $0x14] sm:$0xc] %vm921, %v1895
      %v1898 = vld [vmem:[%s165 + $0x8] sm:$0x1]
      %v1899 = vld [vmem:[%s165 + $0x14] sm:$0x1]
      %v1900 = vld [vmem:[%s165 + $0x20] sm:$0x1]
      %v1901 = vld [vmem:[%s165 + $0x2c] sm:$0x1]
      %v1906 = vunpack.c.l.b16 %v1898
      %v1907 = vunpack.c.l.b16 %v1899
      %v1908 = vunpack.c.l.b16 %v1900
      %v1909 = vunpack.c.l.b16 %v1901
      %v1910 = vrot.slane %v1907, 7
      %v1911 = vsel %vm185, %v1910, %v1906
      %v1912 = vrot.slane %v1908, 6
      %v1913 = vsel %vm188, %v1912, %v1911
      %v1914 = vrot.slane %v1909, 5
      %v1915 = vsel %vm191, %v1914, %v1913
      %v1916 = vpack.c.b16 %v1915, %v1915
      %1917 = vrot.lane.b32.xlu0 %v1916, 96
      %v1918 = vpop.permute.xlu0 %1917
      %1920 = vst.msk [vmem:[#allocation2 + $0x1c] sm:$0x3] %vm909, %v1918
      %v1921 = vrot.slane %v1906, 4
      %v1922 = vrot.slane %v1907, 3
      %v1923 = vsel %vm199, %v1922, %v1921
      %v1924 = vrot.slane %v1908, 2
      %v1925 = vsel %vm202, %v1924, %v1923
      %v1926 = vrot.slane %v1909, 1
      %v1927 = vsel %vm205, %v1926, %v1925
      %v1928 = vpack.c.b16 %v1927, %v1927
      %1929 = vrot.lane.b32.xlu0 %v1928, 95
      %v1930 = vpop.permute.xlu0 %1929
      %1932 = vst.msk [vmem:[#allocation2 + $0x1c] sm:$0xc] %vm921, %v1930
      %1933 = vrot.lane.b32.xlu0 %v1916, 94
      %v1934 = vpop.permute.xlu0 %1933
      %1936 = vst.msk [vmem:[#allocation2 + $0x24] sm:$0x3] %vm909, %v1934
      %v1937 = vld [vmem:[%s165 + $0x4] sm:$0x8]
      %v1938 = vld [vmem:[%s165 + $0x10] sm:$0x8]
      %v1939 = vld [vmem:[%s165 + $0x1c] sm:$0x8]
      %v1940 = vld [vmem:[%s165 + $0x28] sm:$0x8]
      %v1945 = vunpack.c.l.b16 %v1937
      %v1946 = vunpack.c.l.b16 %v1938
      %v1947 = vunpack.c.l.b16 %v1939
      %v1948 = vunpack.c.l.b16 %v1940
      %v1949 = vrot.slane %v1945, 7
      %v1950 = vrot.slane %v1946, 6
      %v1951 = vsel %vm185, %v1950, %v1949
      %v1952 = vrot.slane %v1947, 5
      %v1953 = vsel %vm188, %v1952, %v1951
      %v1954 = vrot.slane %v1948, 4
      %v1955 = vsel %vm191, %v1954, %v1953
      %v1956 = vpack.c.b16 %v1955, %v1955
      %1957 = vrot.lane.b32.xlu0 %v1956, 112
      %v1958 = vpop.permute.xlu0 %1957
      %1960 = vst.msk [vmem:[#allocation2 + $0x4] sm:$0x3] %vm1028, %v1958
      %v1961 = vrot.slane %v1945, 3
      %v1962 = vrot.slane %v1946, 2
      %v1963 = vsel %vm199, %v1962, %v1961
      %v1964 = vrot.slane %v1947, 1
      %v1965 = vsel %vm202, %v1964, %v1963
      %v1966 = vsel %vm205, %v1948, %v1965
      %v1967 = vpack.c.b16 %v1966, %v1966
      %1968 = vrot.lane.b32.xlu0 %v1967, 111
      %v1969 = vpop.permute.xlu0 %1968
      %1971 = vst.msk [vmem:[#allocation2 + $0x4] sm:$0xc] %vm1040, %v1969
      %1972 = vrot.lane.b32.xlu0 %v1956, 110
      %v1973 = vpop.permute.xlu0 %1972
      %1975 = vst.msk [vmem:[#allocation2 + $0xc] sm:$0x3] %vm1028, %v1973
      %v1976 = vld [vmem:[%s165 + $0x8] sm:$0x1]
      %v1977 = vld [vmem:[%s165 + $0x14] sm:$0x1]
      %v1978 = vld [vmem:[%s165 + $0x20] sm:$0x1]
      %v1979 = vld [vmem:[%s165 + $0x2c] sm:$0x1]
      %v1984 = vunpack.c.l.b16 %v1976
      %v1985 = vunpack.c.l.b16 %v1977
      %v1986 = vunpack.c.l.b16 %v1978
      %v1987 = vunpack.c.l.b16 %v1979
      %v1988 = vrot.slane %v1984, 4
      %v1989 = vrot.slane %v1985, 3
      %v1990 = vsel %vm199, %v1989, %v1988
      %v1991 = vrot.slane %v1986, 2
      %v1992 = vsel %vm202, %v1991, %v1990
      %v1993 = vrot.slane %v1987, 1
      %v1994 = vsel %vm205, %v1993, %v1992
      %v1995 = vpack.c.b16 %v1994, %v1994
      %1996 = vrot.lane.b32.xlu0 %v1995, 112
      %v1997 = vpop.permute.xlu0 %1996
      %1999 = vst.msk [vmem:[#allocation2 + $0xc] sm:$0xc] %vm1040, %v1997
      %v2000 = vrot.slane %v1985, 7
      %v2001 = vsel %vm185, %v2000, %v1984
      %v2002 = vrot.slane %v1986, 6
      %v2003 = vsel %vm188, %v2002, %v2001
      %v2004 = vrot.slane %v1987, 5
      %v2005 = vsel %vm191, %v2004, %v2003
      %v2006 = vpack.c.b16 %v2005, %v2005
      %2007 = vrot.lane.b32.xlu0 %v2006, 111
      %v2008 = vpop.permute.xlu0 %2007
      %2010 = vst.msk [vmem:[#allocation2 + $0x14] sm:$0x3] %vm1028, %v2008
      %2011 = vrot.lane.b32.xlu0 %v1995, 110
      %v2012 = vpop.permute.xlu0 %2011
      %2014 = vst.msk [vmem:[#allocation2 + $0x14] sm:$0xc] %vm1040, %v2012
      %v2015 = vld [vmem:[%s165 + $0x8] sm:$0x1]
      %v2016 = vld [vmem:[%s165 + $0x14] sm:$0x1]
      %v2017 = vld [vmem:[%s165 + $0x20] sm:$0x1]
      %v2018 = vld [vmem:[%s165 + $0x2c] sm:$0x1]
      %v2023 = vunpack.c.l.b16 %v2015
      %v2024 = vunpack.c.l.b16 %v2016
      %v2025 = vunpack.c.l.b16 %v2017
      %v2026 = vunpack.c.l.b16 %v2018
      %v2027 = vrot.slane %v2023, 1
      %v2028 = vsel %vm185, %v2024, %v2027
      %v2029 = vrot.slane %v2025, 7
      %v2030 = vsel %vm188, %v2029, %v2028
      %v2031 = vrot.slane %v2026, 6
      %v2032 = vsel %vm191, %v2031, %v2030
      %v2033 = vpack.c.b16 %v2032, %v2032
      %2034 = vrot.lane.b32.xlu0 %v2033, 112
      %v2035 = vpop.permute.xlu0 %2034
      %2037 = vst.msk [vmem:[#allocation2 + $0x1c] sm:$0x3] %vm1028, %v2035
      %v2038 = vrot.slane %v2023, 5
      %v2039 = vrot.slane %v2024, 4
      %v2040 = vsel %vm199, %v2039, %v2038
      %v2041 = vrot.slane %v2025, 3
      %v2042 = vsel %vm202, %v2041, %v2040
      %v2043 = vrot.slane %v2026, 2
      %v2044 = vsel %vm205, %v2043, %v2042
      %v2045 = vpack.c.b16 %v2044, %v2044
      %2046 = vrot.lane.b32.xlu0 %v2045, 111
      %v2047 = vpop.permute.xlu0 %2046
      %2049 = vst.msk [vmem:[#allocation2 + $0x1c] sm:$0xc] %vm1040, %v2047
      %2050 = vrot.lane.b32.xlu0 %v2033, 110
      %v2051 = vpop.permute.xlu0 %2050
      %2053 = vst.msk [vmem:[#allocation2 + $0x24] sm:$0x3] %vm1028, %v2051
      %v2054 = vld [vmem:[%s1] sm:$0x3]
      %v2055 = vld [vmem:[#allocation2] sm:$0xff]
      %v2056 = vld [vmem:[#allocation2 + $0x8] sm:$0xff]
      %v2057 = vld [vmem:[#allocation2 + $0x10] sm:$0xff]
      %v2058 = vld [vmem:[#allocation2 + $0x18] sm:$0xff]
      %v2059 = vld [vmem:[#allocation2 + $0x20] sm:$0x33]
      %v2060 = vld [vmem:[%s2] sm:$0xf]
      %2062 = vset.pattern.permute.xlu0 0
      %2063 = vperm.xlu0 %2062, %v2060
      %v2064 = vpop.permute.xlu0 %2063
      %v2071 = vunpack.c.l.b16 %v2055
      %v2072 = vunpack.c.h.b16 %v2055
      %v2073 = vunpack.c.l.b16 %v2056
      %v2074 = vunpack.c.h.b16 %v2056
      %v2075 = vunpack.c.l.b16 %v2057
      %v2076 = vunpack.c.h.b16 %v2057
      %v2077 = vunpack.c.l.b16 %v2058
      %v2078 = vunpack.c.h.b16 %v2058
      %v2079 = vunpack.c.l.b16 %v2059
      %v2080 = vunpack.c.h.b16 %v2059
      %v2081 = vpack.c.b16 %v2073, %v2071
      %v2082 = vpack.c.b16 %v2074, %v2072
      %v2083 = vpack.c.b16 %v2077, %v2075
      %v2084 = vpack.c.b16 %v2078, %v2076
      %v2085 = vpack.c.b16 %v2079, %v2079
      %v2086 = vpack.c.b16 %v2080, %v2080
      %vm2091 = vcmask 293888
      %v2093 = vsel %vm2091, %v2054, 0
      %vm2095 = vcmask 1041408
      %v2097 = vsel %vm2095, %v2085, 0
      %v2100 = vsel %vm2095, %v2086, 0
      %2102 = vmatprep.subr.bf16.mxu0 %v2082
      %2103 = vmatpush1.bf16.msra.mxu0 %v2081
      %2104 = vmatprep.subr.bf16.mxu0 %v2084
      %2105 = vmatpush1.bf16.msra.mxu0 %v2083
      %2106 = vmatprep.subr.bf16.mxu0 %v2100
      %2107 = vmatpush1.bf16.msra.mxu0 %v2097
      %2108 = vmatprep.subr.bf16.mxu0 0
      %2109 = vmatpush1.bf16.msra.mxu0 0
      %2110 = vmatprep.subr.bf16.mxu0 0
      %2111 = vmatpush1.bf16.msra.mxu0 0
      %2112 = vmatprep.subr.bf16.mxu0 0
      %2113 = vmatpush1.bf16.msra.mxu0 0
      %2114 = vmatprep.subr.bf16.mxu0 0
      %2115 = vmatpush1.bf16.msra.mxu0 0
      %2116 = vmatprep.subr.bf16.mxu0 0
      %2117 = vmatpush1.bf16.msra.mxu0 0
      %2118 = vmatprep.subr.bf16.mxu0 0
      %2119 = vmatpush1.bf16.msra.mxu0 0
      %2120 = vmatprep.subr.bf16.mxu0 0
      %2121 = vmatpush1.bf16.msra.mxu0 0
      %2122 = vmatprep.subr.bf16.mxu0 0
      %2123 = vmatpush1.bf16.msra.mxu0 0
      %2124 = vmatprep.subr.bf16.mxu0 0
      %2125 = vmatpush1.bf16.msra.mxu0 0
      %2126 = vmatprep.subr.bf16.mxu0 0
      %2127 = vmatpush1.bf16.msra.mxu0 0
      %2128 = vmatprep.subr.bf16.mxu0 0
      %2129 = vmatpush1.bf16.msra.mxu0 0
      %2130 = vmatprep.subr.bf16.mxu0 0
      %2131 = vmatpush1.bf16.msra.mxu0 0
      %2132 = vmatprep.subr.bf16.mxu0 0
      %2133 = vmatpush1.bf16.msra.mxu0 0
      %2134 = vmatprep.mubr.bf16.mxu0 0
      %2135 = vmatmul.mubr.bf16.gmra.mrb[0].mxu0 %v2093
      %v2136 = vpop.f32.mrb[0].mxu0
      %v2137 = vadd.f32 %v2064, %v2136
      %v2138 = vpop.f32.mrb[0].mxu0
      %v2139 = vadd.f32 %v2064, %v2138
      %v2140 = vpop.f32.mrb[0].mxu0
      %v2141 = vpop.f32.mrb[0].mxu0
      %2142 = vdwg.mxu0
      %v2143 = vmax.f32 %v2137, 0.0
      %v2144 = vmax.f32 %v2139, 0.0
      %v2145 = vpack.c.bf16 %v2143, %v2143
      %v2146 = vpack.c.bf16 %v2144, %v2144
      %v2149 = vcombine.low %v2145, %v2146
      %v2151 = vunpack.c.l.s4 1983009808
      %v2152 = vunpack.c.0.s8 %v2151
      %v2153 = vlaneseq
      %v2154 = vshrl.u32 %v2153, 7
      %v2155 = vsub.s32 %v2152, %v2154
      %v2156 = vrot.slane %v2149, %v2155
      %2158 = vst [vmem:[%s170] sm:$0xf] %v2156
      %p2159 = scmp.lt.s32.totalorder %s14, 1
      %s2160 = scalar_select %p2159, %s14, 1
      %s2161 = smul.addr %s2160, 2
      %s2162 = smul.addr %s2161, 2
      %s2163 = scalar_lea.vmem %s3, %s2162
      // Predicated region
      $region33: #{inception_forward.11} parent=31 // pred_check
        %p2164 = pneg %p100
      $region34: #{inception_forward.11} parent=31 // pred_check_branch
        %2166 = sbr.rel (%p2164) target = $region36
      $region35: #{inception_forward.11} parent=31 // pred_region
        _
      $region36: #{inception_forward.11} parent=31 // pred_fallthru
        _
    $region32: #{inception_forward.11} parent=5 // pred_fallthru
      _
    %p2167 = scmp.le.s32.totalorder 2, %s9
    // Predicated region
    $region37: #{inception_forward.11} parent=5 // pred_check
      %p2168 = pneg %p2167
    $region38: #{inception_forward.11} parent=5 // pred_check_branch
      %2170 = sbr.rel (%p2168) target = $region40
    $region39: #{inception_forward.11} parent=5 // pred_region
      %s2171 = ssub.s32 %s9, 2
      // Predicated region
      $region41: #{inception_forward.11} parent=39 // pred_check
        %p2172 = pneg %p106
      $region42: #{inception_forward.11} parent=39 // pred_check_branch
        %2174 = sbr.rel (%p2172) target = $region44
      $region43: #{inception_forward.11} parent=39 // pred_region
        %p2175 = scmp.lt.s32.totalorder %s15, 1
        %s2176 = scalar_select %p2175, %s15, 1
        %s2177 = smul.addr %s2176, 2
        %s2178 = smul.addr %s2177, 2
        %s2179 = scalar_lea.vmem %s3, %s2178
      $region44: #{inception_forward.11} parent=39 // pred_fallthru
        _
    $region40: #{inception_forward.11} parent=5 // pred_fallthru
      _
  $region6: #{inception_forward.11} parent=0 // loop_footer
    %s13 = sadd.s32 1, %s9
  $region7: #{inception_forward.11} parent=0 // loop_footer_branch
    %8 = sbr.rel target = $region3
  $region8: #{inception_forward.11} parent=0 // loop_exit
    _

</llo_original>
